<compile_context>
chip_gen: v7x
topology: tpu7x:2x2x1
jax: 0.10.0
libtpu: 0.0.40
codegen_flags: <defaults>
</compile_context>

<pallas_src>
import functools

import numpy as np
import jax
import jax.numpy as jnp
from jax import lax
from jax.experimental import pallas as pl
from jax.experimental.pallas import tpu as pltpu

K_DEFAULT = 20
MU_DEFAULT = 0.5
# Python floats (NOT jnp scalars): jnp array constants captured by a kernel
# closure trip "kernel captures constants" at trace time.
_NEG = -1e30
_TINY = 1e-30


def _round_up(x, m):
    return ((x + m - 1) // m) * m


def _vmem_cap_bytes():
    """Per-generation scoped-VMEM budget: physical capacity minus ~15% headroom
    (v5e/v6e ~109 MiB, v7x ~54 MiB) instead of a hard 64 MiB cap."""
    try:
        phys = int(pltpu.get_tpu_info().vmem_capacity_bytes)
    except Exception:
        phys = 64 * 1024 * 1024          # conservative (v7x-sized) fallback
    return max(int(phys * 0.85), 16 * 1024 * 1024)


def _device_kind():
    try:
        return jax.devices()[0].device_kind.lower()
    except Exception:
        return ""


def _pick_tm(n1, n2p, dp, cap):
    """Loss-phase row tile: 256 on the 2x256-MXU generations (v6e/v7x) when the
    S row tile plus a single-buffered x2 fits VMEM with headroom, else 128
    (v5e's 4x128 MXU gains nothing from a larger M)."""
    kind = _device_kind()
    tm = 128
    if ("v6" in kind) or ("v7" in kind) or ("7x" in kind):
        need = (2 * 256 * n2p * 4          # S + masked row tile (f32)
                + n2p * dp * 2             # x2 (bf16, single buffered)
                + 2 * 256 * dp * 2         # x1 tile (bf16, double buffered)
                + (8 << 20))
        if need <= int(0.8 * cap):
            tm = 256
    return max(8, min(tm, _round_up(n1, 8)))


# --------------------------- Kernel A: Sinkhorn ---------------------------
def _sinkhorn_kernel(x1_ref, x2_ref, v0_ref, pmax_ref, p_ref, *, n1, n2, n_iter):
    # TODO(synk): on v7x, split this phase by rows across the two TensorCores
    # (core_map + shared partial column sums); it currently runs on one TC.
    x1 = x1_ref[...]                                   # [N1p, Dp] bf16
    x2 = x2_ref[...]                                   # [N2p, Dp] bf16
    S = lax.dot_general(x1, x2, (((1,), (1,)), ((), ())),
                        preferred_element_type=jnp.float32)   # [N1p, N2p] f32
    n1p, n2p = S.shape

    # exp(50*(S - max S)) is exactly equivalent after the first column
    # normalisation (the uniform factor cancels) and cannot overflow for
    # non-unit-norm inputs.
    smax = jnp.max(jnp.max(S, axis=1, keepdims=True), axis=0, keepdims=True)
    P = jnp.exp((S - smax) * 50.0)

    # Zero padded rows/columns once with small broadcast masks; zeros then
    # self-propagate through every normalisation, so no full [N1p, N2p] mask
    # has to stay live across the loop.
    if (n1p != n1) or (n2p != n2):
        row_ok = lax.broadcasted_iota(jnp.int32, (n1p, 1), 0) < n1
        col_ok = lax.broadcasted_iota(jnp.int32, (1, n2p), 1) < n2
        P = jnp.where(row_ok & col_ok, P, 0.0)

    p_ref[...] = P

    # Row/column sums on the (otherwise idle) MXU; 8-wide `ones` operands keep
    # the matmuls on native sublane granularity.  This roughly halves the
    # per-iteration VALU work (the saturating slot) vs. jnp.sum reductions.
    ones_r = jnp.ones((8, n1p), jnp.float32)
    ones_c = jnp.ones((n2p, 8), jnp.float32)

    def col_sum(p):
        return lax.dot_general(ones_r, p, (((1,), (0,)), ((), ())),
                               preferred_element_type=jnp.float32)[:1, :]

    def row_sum(p):
        return lax.dot_general(p, ones_c, (((1,), (0,)), ((), ())),
                               preferred_element_type=jnp.float32)[:, :1]

    # Iterations are serially dependent, so a rolled loop costs nothing and
    # keeps the program (and live ranges) small.
    @pl.loop(0, n_iter - 1)
    def _(it):
        p = p_ref[...]
        p = p * pl.reciprocal(jnp.maximum(col_sum(p), _TINY), approx=True)
        p = p * pl.reciprocal(jnp.maximum(row_sum(p), _TINY), approx=True)
        p_ref[...] = p

    # Final iteration with exact division: p_max is compared against mu, so it
    # must not carry the compounded approximate-reciprocal error.
    P = p_ref[...]
    P = P / jnp.maximum(col_sum(P), _TINY)
    P = P / jnp.maximum(row_sum(P), _TINY)

    p_max = jnp.max(P, axis=1, keepdims=True)          # [N1p, 1]
    # v0 = S at the Sinkhorn argmax (value-equality select; differs from the
    # reference only on exact fp ties in P).  Padded entries of P are exactly
    # 0 < p_max of any valid row, and padded entries of S are exactly 0, so no
    # extra masking of S is needed here.
    v0 = jnp.max(jnp.where(P == p_max, S, _NEG), axis=1, keepdims=True)

    v0_ref[...] = v0
    pmax_ref[...] = p_max


# ------------------ Kernel B: top-k / log-softmax phase -------------------
def _loss_phase_kernel(x1_ref, x2_ref, v0_ref, pmax_ref, contrib_ref, *, k, mu, n2):
    tm = x1_ref.shape[0]
    x1 = x1_ref[...]                                   # [tm, Dp]  bf16
    x2 = x2_ref[...]                                   # [N2p, Dp] bf16
    S = lax.dot_general(x1, x2, (((1,), (1,)), ((), ())),
                        preferred_element_type=jnp.float32)   # [tm, N2p] f32
    n2p = S.shape[1]

    # Hide padded columns (their S is exactly 0, which could otherwise outrank
    # genuinely negative similarities).  S is dead after this, so only one
    # [tm, N2p] buffer stays live through the top-k passes.
    if n2p != n2:
        col_ok = lax.broadcasted_iota(jnp.int32, (1, n2p), 1) < n2
        masked = jnp.where(col_ok, S, _NEG)
    else:
        masked = S

    # v0 / p_max arrive as whole (grid-invariant) arrays -> DMA'd once; slice
    # this tile's rows in-kernel instead of paying a tiny per-step block DMA.
    r0 = pl.multiple_of(pl.program_id(0) * tm, 8)
    v0 = v0_ref[pl.ds(r0, tm), :]                      # [tm, 1]
    pmax = pmax_ref[pl.ds(r0, tm), :]                  # [tm, 1]

    # Reference: topk(k+1), drop the top-1, prepend v0, log_softmax, column 0.
    # Implemented as k+1 max-and-mask passes, one XLU row reduction each
    # (value-equality masking: differs from the reference only on exact ties).
    # TODO(synk): for very wide rows (N2 >= ~2K) switch to a blocked per-chunk
    # candidate reduction before the k+1 passes.
    t1 = jnp.max(masked, axis=1, keepdims=True)        # top-1 (dropped by ref)
    masked = jnp.where(masked == t1, _NEG, masked)
    t2 = jnp.max(masked, axis=1, keepdims=True)        # top-2
    masked = jnp.where(masked == t2, _NEG, masked)
    m = jnp.maximum(v0, t2)                            # safe logsumexp shift
    acc = jnp.exp(v0 - m) + jnp.exp(t2 - m)
    for j in range(k - 1):                             # top-3 .. top-(k+1)
        tv = jnp.max(masked, axis=1, keepdims=True)
        if j != k - 2:                                 # final mask is dead code
            masked = jnp.where(masked == tv, _NEG, masked)
        acc = acc + jnp.exp(tv - m)

    lse = m + jnp.log(acc)
    # log_softmax column 0, zeroed for invalid rows (p_max <= mu) and padding.
    # TODO(synk): emit contrib lane-dense ([1, tm] blocks) to avoid the
    # per-step masked 4-byte-wide stores; kept [tm, 1] for lowering simplicity.
    contrib_ref[...] = jnp.where(pmax > mu, v0 - lse, 0.0)


def pallas_loss(x1, x2, k=K_DEFAULT, mu=MU_DEFAULT):
    """Forward of the PyTorch Loss module (pair=None path) on TPU via Pallas."""
    n1, d = x1.shape
    n2, d2 = x2.shape
    assert d == d2
    assert n2 >= k + 1, "need at least k+1 candidates for topk"
    # TODO(synk): explicit `pair` argument path (precomputed index pairs) not
    # implemented; only the pair=None branch is reproduced.

    cap = _vmem_cap_bytes()

    # Lane/sublane aligned, zero-padded shapes (padding is masked in-kernel).
    dp = _round_up(d, 128)
    n2p = _round_up(n2, 128)
    tm = _pick_tm(n1, n2p, dp, cap)      # per-generation row tile (128 / 256)
    n1p = _round_up(n1, tm)

    # bf16 MXU inputs (all post-matmul arithmetic stays f32 inside the kernels).
    x1p = jnp.zeros((n1p, dp), jnp.bfloat16).at[:n1, :d].set(x1.astype(jnp.bfloat16))
    x2p = jnp.zeros((n2p, dp), jnp.bfloat16).at[:n2, :d].set(x2.astype(jnp.bfloat16))

    # --- phase 1: Sinkhorn pair selection (whole matrix resident) ---
    # TODO(synk): for N1*N2 beyond the VMEM budget, stream P / recompute S in
    # the epilogue instead of keeping both resident.
    vmem_a = int(min(max(3 * n1p * n2p * 4
                         + 2 * (n1p + n2p) * dp * 2
                         + 8 * (n1p + n2p) * 4
                         + (4 << 20),
                         32 * 1024 * 1024), cap))
    v0, pmax = pl.pallas_call(
        functools.partial(_sinkhorn_kernel, n1=n1, n2=n2, n_iter=10),
        out_shape=(jax.ShapeDtypeStruct((n1p, 1), jnp.float32),
                   jax.ShapeDtypeStruct((n1p, 1), jnp.float32)),
        grid=(1,),
        in_specs=[pl.BlockSpec((n1p, dp), lambda i: (0, 0)),
                  pl.BlockSpec((n2p, dp), lambda i: (0, 0))],
        out_specs=[pl.BlockSpec((n1p, 1), lambda i: (0, 0)),
                   pl.BlockSpec((n1p, 1), lambda i: (0, 0))],
        scratch_shapes=[pltpu.VMEM((n1p, n2p), jnp.float32)],
        compiler_params=pltpu.CompilerParams(
            dimension_semantics=("arbitrary",),
            vmem_limit_bytes=vmem_a),
    )(x1p, x2p)

    # --- phase 2: top-k / log-softmax, row-tiled and megacore-parallel ---
    vmem_b = int(min(max(2 * tm * n2p * 4
                         + 2 * tm * dp * 2
                         + 2 * n2p * dp * 2          # worst case: double-buffered x2
                         + 8 * n1p * 4
                         + (4 << 20),
                         32 * 1024 * 1024), cap))

    def _phase2(single_buffer_x2):
        if single_buffer_x2:
            # x2 is grid-invariant: a single buffer halves its VMEM footprint.
            x2_spec = pl.BlockSpec((n2p, dp), lambda i: (0, 0),
                                   pipeline_mode=pl.Buffered(1))
        else:
            x2_spec = pl.BlockSpec((n2p, dp), lambda i: (0, 0))
        out = pl.pallas_call(
            functools.partial(_loss_phase_kernel, k=k, mu=mu, n2=n2),
            out_shape=jax.ShapeDtypeStruct((n1p, 1), jnp.float32),
            grid=(n1p // tm,),
            in_specs=[pl.BlockSpec((tm, dp), lambda i: (i, 0)),
                      x2_spec,
                      pl.BlockSpec((n1p, 1), lambda i: (0, 0)),
                      pl.BlockSpec((n1p, 1), lambda i: (0, 0))],
            out_specs=pl.BlockSpec((tm, 1), lambda i: (i, 0)),
            compiler_params=pltpu.CompilerParams(
                dimension_semantics=("parallel",),
                vmem_limit_bytes=vmem_b),
        )(x1p, x2p, v0, pmax)
        jax.block_until_ready(out)
        return out

    try:
        contrib = _phase2(True)
    except Exception:
        # pipeline_mode / Buffered(1) unsupported on this jax version: fall
        # back to the default double-buffered x2 block.
        contrib = _phase2(False)

    num = jnp.sum(contrib)                                 # padded rows add 0
    den = jnp.sum((pmax[:, 0] > mu).astype(jnp.float32))   # padded rows: pmax == 0
    return -(num / den)                                    # NaN if no valid rows (matches ref)


def reference_loss(x1, x2, k=K_DEFAULT, mu=MU_DEFAULT):
    """Pure-JAX f32 reference mirroring the PyTorch forward (pair=None path)."""
    S = jnp.exp((x1 @ x2.T) * 50.0)
    for _ in range(10):
        S = S / jnp.sum(S, axis=0, keepdims=True)
        S = S / jnp.sum(S, axis=1, keepdims=True)
    p_max = S.max(axis=1)
    p_arg = S.argmax(axis=1)
    valid = p_max > mu
    S2 = x1 @ x2.T
    v0 = S2[jnp.arange(x1.shape[0]), p_arg]
    topv, _ = lax.top_k(S2, k + 1)
    vals = jnp.concatenate([v0[:, None], topv[:, 1:]], axis=1)
    logsm = vals - jax.scipy.special.logsumexp(vals, axis=1, keepdims=True)
    contrib = logsm[:, 0]
    return -(jnp.sum(jnp.where(valid, contrib, 0.0)) / jnp.sum(valid))


if __name__ == "__main__":
    key = jax.random.PRNGKey(0)
    n1, n2, d = 200, 200, 96     # small; exercises padding (8/128) + row tiling

    k1, k2 = jax.random.split(key)
    x1 = jax.random.normal(k1, (n1, d), jnp.float32)
    x2 = 0.05 * jax.random.normal(k2, (n2, d), jnp.float32)
    # Each x2 row is a noisy copy of the matching x1 row, so Sinkhorn produces
    # sharp matches (p_max >> mu) as in a real embedding-matching setting.
    x2 = x2.at[:n1].add(x1)
    x1 = x1 / jnp.linalg.norm(x1, axis=1, keepdims=True)
    x2 = x2 / jnp.linalg.norm(x2, axis=1, keepdims=True)

    loss = pallas_loss(x1, x2)
    jax.block_until_ready(loss)

    ref = reference_loss(x1, x2)
    # Tolerance accounts for bf16 MXU inputs + approximate EUP reciprocals.
    np.testing.assert_allclose(np.asarray(loss), np.asarray(ref),
                               rtol=2e-2, atol=2e-2)
    print("KERNEL_OK")
</pallas_src>

<mosaic_0001>
module attributes {stable_mosaic.version = 11 : i64} {
  func.func @_sinkhorn_kernel(%arg0: i32, %arg1: memref<256x128xbf16, #tpu.memory_space<vmem>>, %arg2: memref<256x128xbf16, #tpu.memory_space<vmem>>, %arg3: memref<256x1xf32, #tpu.memory_space<vmem>>, %arg4: memref<256x1xf32, #tpu.memory_space<vmem>>, %arg5: memref<256x256xf32, #tpu.memory_space<vmem>>) attributes {dimension_semantics = [#tpu.dimension_semantics<arbitrary>], iteration_bounds = array<i64: 1>, scalar_prefetch = 0 : i64, scratch_operands = 1 : i64, tpu.core_type = #tpu.core_type<tc>, window_params = [{pipeline_mode = #tpu.pipeline_mode<synchronous>, transform_indices = @transform_0, window_bounds = array<i64: 256, 128>}, {pipeline_mode = #tpu.pipeline_mode<synchronous>, transform_indices = @transform_1, window_bounds = array<i64: 256, 128>}, {pipeline_mode = #tpu.pipeline_mode<synchronous>, transform_indices = @transform_2, window_bounds = array<i64: 256, 1>}, {pipeline_mode = #tpu.pipeline_mode<synchronous>, transform_indices = @transform_3, window_bounds = array<i64: 256, 1>}]} {
    %c0 = arith.constant 0 : index
    %c0_0 = arith.constant 0 : index
    %0 = vector.load %arg1[%c0, %c0_0] : memref<256x128xbf16, #tpu.memory_space<vmem>>, vector<256x128xbf16>
    %c0_1 = arith.constant 0 : index
    %c0_2 = arith.constant 0 : index
    %1 = vector.load %arg2[%c0_1, %c0_2] : memref<256x128xbf16, #tpu.memory_space<vmem>>, vector<256x128xbf16>
    %cst = arith.constant dense<0.000000e+00> : vector<256x256xf32>
    %2 = tpu.matmul %0, %1, %cst {dimension_numbers = #tpu.dot_dimension_numbers<[1], [1], [0], [0], [0, 0, 1, 0], [], []>} : vector<256x128xbf16>, vector<256x128xbf16>, vector<256x256xf32> -> vector<256x256xf32>
    %cst_3 = arith.constant dense<0xFF800000> : vector<256xf32>
    %3 = vector.multi_reduction <maximumf>, %2, %cst_3 [1] : vector<256x256xf32> to vector<256xf32>
    %4 = vector.shape_cast %3 : vector<256xf32> to vector<256x1xf32>
    %cst_4 = arith.constant dense<0xFF800000> : vector<1xf32>
    %5 = vector.multi_reduction <maximumf>, %4, %cst_4 [0] : vector<256x1xf32> to vector<1xf32>
    %6 = vector.shape_cast %5 : vector<1xf32> to vector<1x1xf32>
    %7 = vector.broadcast %6 : vector<1x1xf32> to vector<256x256xf32>
    %8 = arith.subf %2, %7 : vector<256x256xf32>
    %cst_5 = arith.constant 5.000000e+01 : f32
    %9 = vector.broadcast %cst_5 : f32 to vector<256x256xf32>
    %10 = arith.mulf %8, %9 : vector<256x256xf32>
    %11 = math.exp %10 : vector<256x256xf32>
    %12 = tpu.iota {dimensions = array<i32: 0>} : vector<256x1xi32>
    %c200_i32 = arith.constant 200 : i32
    %13 = vector.broadcast %c200_i32 : i32 to vector<256x1xi32>
    %14 = arith.cmpi slt, %12, %13 : vector<256x1xi32>
    %15 = tpu.iota {dimensions = array<i32: 1>} : vector<1x256xi32>
    %c200_i32_6 = arith.constant 200 : i32
    %16 = vector.broadcast %c200_i32_6 : i32 to vector<1x256xi32>
    %17 = arith.cmpi slt, %15, %16 : vector<1x256xi32>
    %18 = vector.broadcast %14 : vector<256x1xi1> to vector<256x256xi1>
    %19 = vector.broadcast %17 : vector<1x256xi1> to vector<256x256xi1>
    %20 = arith.andi %18, %19 : vector<256x256xi1>
    %cst_7 = arith.constant 0.000000e+00 : f32
    %21 = vector.broadcast %cst_7 : f32 to vector<256x256xf32>
    %22 = arith.select %20, %11, %21 : vector<256x256xi1>, vector<256x256xf32>
    %c0_8 = arith.constant 0 : index
    %c0_9 = arith.constant 0 : index
    %23 = vector.load %arg5[%c0_8, %c0_9] : memref<256x256xf32, #tpu.memory_space<vmem>>, vector<256x256xf32>
    tpu.vector_store %arg5[%c0_8, %c0_9], %22 {strides = array<i32>} : memref<256x256xf32, #tpu.memory_space<vmem>>, vector<256x256xf32>,
    %cst_10 = arith.constant 1.000000e+00 : f32
    %24 = vector.broadcast %cst_10 : f32 to vector<8x256xf32>
    %cst_11 = arith.constant 1.000000e+00 : f32
    %25 = vector.broadcast %cst_11 : f32 to vector<256x8xf32>
    %c0_i32 = arith.constant 0 : i32
    %c9_i32 = arith.constant 9 : i32
    %26 = arith.addi %c0_i32, %c9_i32 : i32
    %c1_i32 = arith.constant 1 : i32
    scf.for %arg6 = %c0_i32 to %26 step %c1_i32  : i32 {
      %c0_25 = arith.constant 0 : index
      %c0_26 = arith.constant 0 : index
      %50 = vector.load %arg5[%c0_25, %c0_26] : memref<256x256xf32, #tpu.memory_space<vmem>>, vector<256x256xf32>
      %cst_27 = arith.constant dense<0.000000e+00> : vector<8x256xf32>
      %51 = tpu.matmul %24, %50, %cst_27 {dimension_numbers = #tpu.dot_dimension_numbers<[1], [0], [0], [1], [0, 0, 1, 1], [], []>} : vector<8x256xf32>, vector<256x256xf32>, vector<8x256xf32> -> vector<8x256xf32>
      %52 = vector.extract_strided_slice %51 {offsets = [0, 0], sizes = [1, 256], strides = [1, 1]} : vector<8x256xf32> to vector<1x256xf32>
      %cst_28 = arith.constant 1.000000e-30 : f32
      %53 = vector.broadcast %cst_28 : f32 to vector<1x256xf32>
      %54 = arith.maximumf %52, %53 : vector<1x256xf32>
      %55 = tpu.reciprocal %54 {approx = true} : vector<1x256xf32> -> vector<1x256xf32>
      %56 = vector.broadcast %55 : vector<1x256xf32> to vector<256x256xf32>
      %57 = arith.mulf %50, %56 : vector<256x256xf32>
      %cst_29 = arith.constant dense<0.000000e+00> : vector<256x8xf32>
      %58 = tpu.matmul %57, %25, %cst_29 {dimension_numbers = #tpu.dot_dimension_numbers<[1], [0], [0], [1], [0, 0, 1, 1], [], []>} : vector<256x256xf32>, vector<256x8xf32>, vector<256x8xf32> -> vector<256x8xf32>
      %59 = vector.extract_strided_slice %58 {offsets = [0, 0], sizes = [256, 1], strides = [1, 1]} : vector<256x8xf32> to vector<256x1xf32>
      %cst_30 = arith.constant 1.000000e-30 : f32
      %60 = vector.broadcast %cst_30 : f32 to vector<256x1xf32>
      %61 = arith.maximumf %59, %60 : vector<256x1xf32>
      %62 = tpu.reciprocal %61 {approx = true} : vector<256x1xf32> -> vector<256x1xf32>
      %63 = vector.broadcast %62 : vector<256x1xf32> to vector<256x256xf32>
      %64 = arith.mulf %57, %63 : vector<256x256xf32>
      %c0_31 = arith.constant 0 : index
      %c0_32 = arith.constant 0 : index
      %65 = vector.load %arg5[%c0_31, %c0_32] : memref<256x256xf32, #tpu.memory_space<vmem>>, vector<256x256xf32>
      tpu.vector_store %arg5[%c0_31, %c0_32], %64 {strides = array<i32>} : memref<256x256xf32, #tpu.memory_space<vmem>>, vector<256x256xf32>,
    }
    %c0_12 = arith.constant 0 : index
    %c0_13 = arith.constant 0 : index
    %27 = vector.load %arg5[%c0_12, %c0_13] : memref<256x256xf32, #tpu.memory_space<vmem>>, vector<256x256xf32>
    %cst_14 = arith.constant dense<0.000000e+00> : vector<8x256xf32>
    %28 = tpu.matmul %24, %27, %cst_14 {dimension_numbers = #tpu.dot_dimension_numbers<[1], [0], [0], [1], [0, 0, 1, 1], [], []>} : vector<8x256xf32>, vector<256x256xf32>, vector<8x256xf32> -> vector<8x256xf32>
    %29 = vector.extract_strided_slice %28 {offsets = [0, 0], sizes = [1, 256], strides = [1, 1]} : vector<8x256xf32> to vector<1x256xf32>
    %cst_15 = arith.constant 1.000000e-30 : f32
    %30 = vector.broadcast %cst_15 : f32 to vector<1x256xf32>
    %31 = arith.maximumf %29, %30 : vector<1x256xf32>
    %32 = vector.broadcast %31 : vector<1x256xf32> to vector<256x256xf32>
    %33 = arith.divf %27, %32 : vector<256x256xf32>
    %cst_16 = arith.constant dense<0.000000e+00> : vector<256x8xf32>
    %34 = tpu.matmul %33, %25, %cst_16 {dimension_numbers = #tpu.dot_dimension_numbers<[1], [0], [0], [1], [0, 0, 1, 1], [], []>} : vector<256x256xf32>, vector<256x8xf32>, vector<256x8xf32> -> vector<256x8xf32>
    %35 = vector.extract_strided_slice %34 {offsets = [0, 0], sizes = [256, 1], strides = [1, 1]} : vector<256x8xf32> to vector<256x1xf32>
    %cst_17 = arith.constant 1.000000e-30 : f32
    %36 = vector.broadcast %cst_17 : f32 to vector<256x1xf32>
    %37 = arith.maximumf %35, %36 : vector<256x1xf32>
    %38 = vector.broadcast %37 : vector<256x1xf32> to vector<256x256xf32>
    %39 = arith.divf %33, %38 : vector<256x256xf32>
    %cst_18 = arith.constant dense<0xFF800000> : vector<256xf32>
    %40 = vector.multi_reduction <maximumf>, %39, %cst_18 [1] : vector<256x256xf32> to vector<256xf32>
    %41 = vector.shape_cast %40 : vector<256xf32> to vector<256x1xf32>
    %42 = vector.broadcast %41 : vector<256x1xf32> to vector<256x256xf32>
    %43 = arith.cmpf oeq, %39, %42 : vector<256x256xf32>
    %cst_19 = arith.constant -1.000000e+30 : f32
    %44 = vector.broadcast %cst_19 : f32 to vector<256x256xf32>
    %45 = arith.select %43, %2, %44 : vector<256x256xi1>, vector<256x256xf32>
    %cst_20 = arith.constant dense<0xFF800000> : vector<256xf32>
    %46 = vector.multi_reduction <maximumf>, %45, %cst_20 [1] : vector<256x256xf32> to vector<256xf32>
    %47 = vector.shape_cast %46 : vector<256xf32> to vector<256x1xf32>
    %c0_21 = arith.constant 0 : index
    %c0_22 = arith.constant 0 : index
    %48 = vector.load %arg3[%c0_21, %c0_22] : memref<256x1xf32, #tpu.memory_space<vmem>>, vector<256x1xf32>
    tpu.vector_store %arg3[%c0_21, %c0_22], %47 {strides = array<i32>} : memref<256x1xf32, #tpu.memory_space<vmem>>, vector<256x1xf32>,
    %c0_23 = arith.constant 0 : index
    %c0_24 = arith.constant 0 : index
    %49 = vector.load %arg4[%c0_23, %c0_24] : memref<256x1xf32, #tpu.memory_space<vmem>>, vector<256x1xf32>
    tpu.vector_store %arg4[%c0_23, %c0_24], %41 {strides = array<i32>} : memref<256x1xf32, #tpu.memory_space<vmem>>, vector<256x1xf32>,
    return
  }
  func.func @transform_0(%arg0: i32) -> (i32, i32) {
    %c0_i32 = arith.constant 0 : i32
    %c0_i32_0 = arith.constant 0 : i32
    %c0_i32_1 = arith.constant 0 : i32
    return %c0_i32, %c0_i32_0 : i32, i32
  }
  func.func @transform_1(%arg0: i32) -> (i32, i32) {
    %c0_i32 = arith.constant 0 : i32
    %c0_i32_0 = arith.constant 0 : i32
    %c0_i32_1 = arith.constant 0 : i32
    return %c0_i32, %c0_i32_0 : i32, i32
  }
  func.func @transform_2(%arg0: i32) -> (i32, i32) {
    %c0_i32 = arith.constant 0 : i32
    %c0_i32_0 = arith.constant 0 : i32
    %c0_i32_1 = arith.constant 0 : i32
    return %c0_i32, %c0_i32_0 : i32, i32
  }
  func.func @transform_3(%arg0: i32) -> (i32, i32) {
    %c0_i32 = arith.constant 0 : i32
    %c0_i32_0 = arith.constant 0 : i32
    %c0_i32_1 = arith.constant 0 : i32
    return %c0_i32, %c0_i32_0 : i32, i32
  }
}

</mosaic_0001>

<llo_original>
// kernel: tpu_custom_call.1
$region0: #{tpu_custom_call.1}
  #allocation0 [shape = 'u32[]', space=smem, size = 0x4, offset = 0x4, fixed_abs, tag = 'smem constant byte address 0x4 - core index']
  #allocation1 [shape = 'u32[144,128]{1,0:T(1,128)}', space=vmem, size = 0x12000, scoped, tag = 'internal scratch']
  #allocation2 [shape = 'f32[256,256]{1,0:T(8,128)}', space=vmem, size = 0x40000, scoped, tag = 'scratch operand']
  %s0 = inlined_call_operand.hbm [shape: bf16[256,128], index: 0, kind: input, shape index: {}]
  %s1 = inlined_call_operand.hbm [shape: bf16[256,128], index: 1, kind: input, shape index: {}]
  %s2 = inlined_call_operand.vmem [shape: f32[256,1], index: 2, kind: output, shape index: {0}]
  %s3 = inlined_call_operand.vmem [shape: f32[256,1], index: 3, kind: output, shape index: {1}]
  %4 = xla_tuple %s2, %s3
  %s5 = sld [smem:[#allocation0]]
  $region41: #{tpu_custom_call.1} parent=0
    _
  %s7 = ssub.s32 1, %s5
  %s8 = scalar_select 0, %s7, %s5
  $region1: #{tpu_custom_call.1} parent=0
    #allocation3 [shape = 'u8[65536]{0}', space=vmem, size = 0x10000, scoped, tag = 'input window, operand 0, single buffered']
    #allocation4 [shape = 's32[1]{0}', space=sflag, size = 0x4, scoped, tag = 'scoped memory for tpu_custom_call.1']
    #allocation5 [shape = 'u8[65536]{0}', space=vmem, size = 0x10000, scoped, tag = 'input window, operand 1, single buffered']
    #allocation6 [shape = 's32[1]{0}', space=sflag, size = 0x4, scoped, tag = 'scoped memory for tpu_custom_call.1']
    %9 = vsyncpa [#allocation4], 0
    %10 = vsyncpa [#allocation6], 0
    // Predicated region
    $region2: #{tpu_custom_call.1} parent=1 // pred_check
      _
    $region3: #{tpu_custom_call.1} parent=1 // pred_check_branch
      %12 = sbr.rel (0) target = $region5
    $region4: #{tpu_custom_call.1} parent=1 // pred_region
      %s14 = ssub.s32 2048, 2048
      %15 = vsyncadd [#allocation4], %s14
      %s16 = sshll.u32 [#allocation3], 4
      %s17 = int_to_ptr.vmem [resolvable:$true] %s16
      %22 = dma.hbm_to_vmem [thread:$0]  %s0, 2048, %s17, [#allocation4], 64, 64, 4
    $region5: #{tpu_custom_call.1} parent=1 // pred_fallthru
      _
    // Predicated region
    $region6: #{tpu_custom_call.1} parent=1 // pred_check
      _
    $region7: #{tpu_custom_call.1} parent=1 // pred_check_branch
      %24 = sbr.rel (0) target = $region9
    $region8: #{tpu_custom_call.1} parent=1 // pred_region
      %s26 = ssub.s32 2048, 2048
      %27 = vsyncadd [#allocation6], %s26
      %s28 = sshll.u32 [#allocation5], 4
      %s29 = int_to_ptr.vmem [resolvable:$true] %s28
      %34 = dma.hbm_to_vmem [thread:$0]  %s1, 2048, %s29, [#allocation6], 64, 64, 4
    $region9: #{tpu_custom_call.1} parent=1 // pred_fallthru
      _
    // Predicated region
    $region10: #{tpu_custom_call.1} parent=1 // pred_check
      _
    $region11: #{tpu_custom_call.1} parent=1 // pred_check_branch
      %36 = sbr.rel (0) target = $region13
    $region12: #{tpu_custom_call.1} parent=1 // pred_region
      %37 = dma.done [#allocation4], 2048
    $region13: #{tpu_custom_call.1} parent=1 // pred_fallthru
      _
    // Predicated region
    $region14: #{tpu_custom_call.1} parent=1 // pred_check
      _
    $region15: #{tpu_custom_call.1} parent=1 // pred_check_branch
      %39 = sbr.rel (0) target = $region17
    $region16: #{tpu_custom_call.1} parent=1 // pred_region
      %40 = dma.done [#allocation6], 2048
    $region17: #{tpu_custom_call.1} parent=1 // pred_fallthru
      _
    %v42 = vld [vmem:[#allocation3] sm:$0xf]
    %v43 = vld [vmem:[#allocation3 + $0x4] sm:$0xf]
    %v44 = vld [vmem:[#allocation3 + $0x8] sm:$0xf]
    %v45 = vld [vmem:[#allocation3 + $0xc] sm:$0xf]
    %v46 = vld [vmem:[#allocation3 + $0x10] sm:$0xf]
    %v47 = vld [vmem:[#allocation3 + $0x14] sm:$0xf]
    %v48 = vld [vmem:[#allocation3 + $0x18] sm:$0xf]
    %v49 = vld [vmem:[#allocation3 + $0x1c] sm:$0xf]
    %v50 = vld [vmem:[#allocation3 + $0x20] sm:$0xf]
    %v51 = vld [vmem:[#allocation3 + $0x24] sm:$0xf]
    %v52 = vld [vmem:[#allocation3 + $0x28] sm:$0xf]
    %v53 = vld [vmem:[#allocation3 + $0x2c] sm:$0xf]
    %v54 = vld [vmem:[#allocation3 + $0x30] sm:$0xf]
    %v55 = vld [vmem:[#allocation3 + $0x34] sm:$0xf]
    %v56 = vld [vmem:[#allocation3 + $0x38] sm:$0xf]
    %v57 = vld [vmem:[#allocation3 + $0x3c] sm:$0xf]
    %v58 = vld [vmem:[#allocation3 + $0x40] sm:$0xf]
    %v59 = vld [vmem:[#allocation3 + $0x44] sm:$0xf]
    %v60 = vld [vmem:[#allocation3 + $0x48] sm:$0xf]
    %v61 = vld [vmem:[#allocation3 + $0x4c] sm:$0xf]
    %v62 = vld [vmem:[#allocation3 + $0x50] sm:$0xf]
    %v63 = vld [vmem:[#allocation3 + $0x54] sm:$0xf]
    %v64 = vld [vmem:[#allocation3 + $0x58] sm:$0xf]
    %v65 = vld [vmem:[#allocation3 + $0x5c] sm:$0xf]
    %v66 = vld [vmem:[#allocation3 + $0x60] sm:$0xf]
    %v67 = vld [vmem:[#allocation3 + $0x64] sm:$0xf]
    %v68 = vld [vmem:[#allocation3 + $0x68] sm:$0xf]
    %v69 = vld [vmem:[#allocation3 + $0x6c] sm:$0xf]
    %v70 = vld [vmem:[#allocation3 + $0x70] sm:$0xf]
    %v71 = vld [vmem:[#allocation3 + $0x74] sm:$0xf]
    %v72 = vld [vmem:[#allocation3 + $0x78] sm:$0xf]
    %v73 = vld [vmem:[#allocation3 + $0x7c] sm:$0xf]
    %v74 = vld [vmem:[#allocation5] sm:$0xf]
    %v75 = vld [vmem:[#allocation5 + $0x4] sm:$0xf]
    %v76 = vld [vmem:[#allocation5 + $0x8] sm:$0xf]
    %v77 = vld [vmem:[#allocation5 + $0xc] sm:$0xf]
    %v78 = vld [vmem:[#allocation5 + $0x10] sm:$0xf]
    %v79 = vld [vmem:[#allocation5 + $0x14] sm:$0xf]
    %v80 = vld [vmem:[#allocation5 + $0x18] sm:$0xf]
    %v81 = vld [vmem:[#allocation5 + $0x1c] sm:$0xf]
    %v82 = vld [vmem:[#allocation5 + $0x20] sm:$0xf]
    %v83 = vld [vmem:[#allocation5 + $0x24] sm:$0xf]
    %v84 = vld [vmem:[#allocation5 + $0x28] sm:$0xf]
    %v85 = vld [vmem:[#allocation5 + $0x2c] sm:$0xf]
    %v86 = vld [vmem:[#allocation5 + $0x30] sm:$0xf]
    %v87 = vld [vmem:[#allocation5 + $0x34] sm:$0xf]
    %v88 = vld [vmem:[#allocation5 + $0x38] sm:$0xf]
    %v89 = vld [vmem:[#allocation5 + $0x3c] sm:$0xf]
    %v90 = vld [vmem:[#allocation5 + $0x40] sm:$0xf]
    %v91 = vld [vmem:[#allocation5 + $0x44] sm:$0xf]
    %v92 = vld [vmem:[#allocation5 + $0x48] sm:$0xf]
    %v93 = vld [vmem:[#allocation5 + $0x4c] sm:$0xf]
    %v94 = vld [vmem:[#allocation5 + $0x50] sm:$0xf]
    %v95 = vld [vmem:[#allocation5 + $0x54] sm:$0xf]
    %v96 = vld [vmem:[#allocation5 + $0x58] sm:$0xf]
    %v97 = vld [vmem:[#allocation5 + $0x5c] sm:$0xf]
    %v98 = vld [vmem:[#allocation5 + $0x60] sm:$0xf]
    %v99 = vld [vmem:[#allocation5 + $0x64] sm:$0xf]
    %v100 = vld [vmem:[#allocation5 + $0x68] sm:$0xf]
    %v101 = vld [vmem:[#allocation5 + $0x6c] sm:$0xf]
    %v102 = vld [vmem:[#allocation5 + $0x70] sm:$0xf]
    %v103 = vld [vmem:[#allocation5 + $0x74] sm:$0xf]
    %v104 = vld [vmem:[#allocation5 + $0x78] sm:$0xf]
    %v105 = vld [vmem:[#allocation5 + $0x7c] sm:$0xf]
    %v138 = vunpack.c.l.b16 %v42
    %v139 = vunpack.c.l.b16 %v43
    %v140 = vunpack.c.l.b16 %v44
    %v141 = vunpack.c.l.b16 %v45
    %v142 = vunpack.c.l.b16 %v46
    %v143 = vunpack.c.l.b16 %v47
    %v144 = vunpack.c.l.b16 %v48
    %v145 = vunpack.c.l.b16 %v49
    %v146 = vunpack.c.l.b16 %v50
    %v147 = vunpack.c.l.b16 %v51
    %v148 = vunpack.c.l.b16 %v52
    %v149 = vunpack.c.l.b16 %v53
    %v150 = vunpack.c.l.b16 %v54
    %v151 = vunpack.c.l.b16 %v55
    %v152 = vunpack.c.l.b16 %v56
    %v153 = vunpack.c.l.b16 %v57
    %v154 = vunpack.c.l.b16 %v58
    %v155 = vunpack.c.l.b16 %v59
    %v156 = vunpack.c.l.b16 %v60
    %v157 = vunpack.c.l.b16 %v61
    %v158 = vunpack.c.l.b16 %v62
    %v159 = vunpack.c.l.b16 %v63
    %v160 = vunpack.c.l.b16 %v64
    %v161 = vunpack.c.l.b16 %v65
    %v162 = vunpack.c.l.b16 %v66
    %v163 = vunpack.c.l.b16 %v67
    %v164 = vunpack.c.l.b16 %v68
    %v165 = vunpack.c.l.b16 %v69
    %v166 = vunpack.c.l.b16 %v70
    %v167 = vunpack.c.l.b16 %v71
    %v168 = vunpack.c.l.b16 %v72
    %v169 = vunpack.c.l.b16 %v73
    %v170 = vpack.c.b16 %v139, %v138
    %v171 = vpack.c.b16 %v141, %v140
    %v172 = vpack.c.b16 %v143, %v142
    %v173 = vpack.c.b16 %v145, %v144
    %v174 = vpack.c.b16 %v147, %v146
    %v175 = vpack.c.b16 %v149, %v148
    %v176 = vpack.c.b16 %v151, %v150
    %v177 = vpack.c.b16 %v153, %v152
    %v178 = vpack.c.b16 %v155, %v154
    %v179 = vpack.c.b16 %v157, %v156
    %v180 = vpack.c.b16 %v159, %v158
    %v181 = vpack.c.b16 %v161, %v160
    %v182 = vpack.c.b16 %v163, %v162
    %v183 = vpack.c.b16 %v165, %v164
    %v184 = vpack.c.b16 %v167, %v166
    %v185 = vpack.c.b16 %v169, %v168
    %v234 = vunpack.c.l.b16 %v74
    %v235 = vunpack.c.l.b16 %v75
    %v236 = vunpack.c.l.b16 %v76
    %v237 = vunpack.c.l.b16 %v77
    %v238 = vunpack.c.l.b16 %v78
    %v239 = vunpack.c.l.b16 %v79
    %v240 = vunpack.c.l.b16 %v80
    %v241 = vunpack.c.l.b16 %v81
    %v242 = vunpack.c.l.b16 %v82
    %v243 = vunpack.c.l.b16 %v83
    %v244 = vunpack.c.l.b16 %v84
    %v245 = vunpack.c.l.b16 %v85
    %v246 = vunpack.c.l.b16 %v86
    %v247 = vunpack.c.l.b16 %v87
    %v248 = vunpack.c.l.b16 %v88
    %v249 = vunpack.c.l.b16 %v89
    %v250 = vunpack.c.l.b16 %v90
    %v251 = vunpack.c.l.b16 %v91
    %v252 = vunpack.c.l.b16 %v92
    %v253 = vunpack.c.l.b16 %v93
    %v254 = vunpack.c.l.b16 %v94
    %v255 = vunpack.c.l.b16 %v95
    %v256 = vunpack.c.l.b16 %v96
    %v257 = vunpack.c.l.b16 %v97
    %v258 = vunpack.c.l.b16 %v98
    %v259 = vunpack.c.l.b16 %v99
    %v260 = vunpack.c.l.b16 %v100
    %v261 = vunpack.c.l.b16 %v101
    %v262 = vunpack.c.l.b16 %v102
    %v263 = vunpack.c.l.b16 %v103
    %v264 = vunpack.c.l.b16 %v104
    %v265 = vunpack.c.l.b16 %v105
    %v266 = vpack.c.b16 %v235, %v234
    %v267 = vpack.c.b16 %v237, %v236
    %v268 = vpack.c.b16 %v239, %v238
    %v269 = vpack.c.b16 %v241, %v240
    %v270 = vpack.c.b16 %v243, %v242
    %v271 = vpack.c.b16 %v245, %v244
    %v272 = vpack.c.b16 %v247, %v246
    %v273 = vpack.c.b16 %v249, %v248
    %v274 = vpack.c.b16 %v251, %v250
    %v275 = vpack.c.b16 %v253, %v252
    %v276 = vpack.c.b16 %v255, %v254
    %v277 = vpack.c.b16 %v257, %v256
    %v278 = vpack.c.b16 %v259, %v258
    %v279 = vpack.c.b16 %v261, %v260
    %v280 = vpack.c.b16 %v263, %v262
    %v281 = vpack.c.b16 %v265, %v264
    %298 = vmatprep.subr.bf16.mxu0 0
    %299 = vmatpush1.bf16.xpose.msra.mxu0 %v266
    %300 = vmatprep.subr.bf16.mxu0 0
    %301 = vmatpush1.bf16.xpose.msra.mxu0 %v267
    %302 = vmatprep.subr.bf16.mxu0 0
    %303 = vmatpush1.bf16.xpose.msra.mxu0 %v268
    %304 = vmatprep.subr.bf16.mxu0 0
    %305 = vmatpush1.bf16.xpose.msra.mxu0 %v269
    %306 = vmatprep.subr.bf16.mxu0 0
    %307 = vmatpush1.bf16.xpose.msra.mxu0 %v270
    %308 = vmatprep.subr.bf16.mxu0 0
    %309 = vmatpush1.bf16.xpose.msra.mxu0 %v271
    %310 = vmatprep.subr.bf16.mxu0 0
    %311 = vmatpush1.bf16.xpose.msra.mxu0 %v272
    %312 = vmatprep.subr.bf16.mxu0 0
    %313 = vmatpush1.bf16.xpose.msra.mxu0 %v273
    %314 = vmatprep.subr.bf16.mxu0 0
    %315 = vmatpush1.bf16.xpose.msra.mxu0 %v274
    %316 = vmatprep.subr.bf16.mxu0 0
    %317 = vmatpush1.bf16.xpose.msra.mxu0 %v275
    %318 = vmatprep.subr.bf16.mxu0 0
    %319 = vmatpush1.bf16.xpose.msra.mxu0 %v276
    %320 = vmatprep.subr.bf16.mxu0 0
    %321 = vmatpush1.bf16.xpose.msra.mxu0 %v277
    %322 = vmatprep.subr.bf16.mxu0 0
    %323 = vmatpush1.bf16.xpose.msra.mxu0 %v278
    %324 = vmatprep.subr.bf16.mxu0 0
    %325 = vmatpush1.bf16.xpose.msra.mxu0 %v279
    %326 = vmatprep.subr.bf16.mxu0 0
    %327 = vmatpush1.bf16.xpose.msra.mxu0 %v280
    %328 = vmatprep.subr.bf16.mxu0 0
    %329 = vmatpush1.bf16.xpose.msra.mxu0 %v281
    %330 = vmatprep.mubr.bf16.mxu0 0
    %331 = vmatmul.mubr.bf16.gmra.mrb[0].mxu0 %v170
    %v332 = vpop.f32.mrb[0].mxu0
    %v333 = vadd.f32 0.0, %v332
    %v334 = vpop.f32.mrb[0].mxu0
    %v335 = vadd.f32 0.0, %v334
    %v336 = vpop.f32.mrb[0].mxu0
    %v337 = vadd.f32 0.0, %v336
    %v338 = vpop.f32.mrb[0].mxu0
    %v339 = vadd.f32 0.0, %v338
    %340 = vmatprep.mubr.bf16.mxu0 0
    %341 = vmatmul.mubr.bf16.gmra.mrb[0].mxu0 %v171
    %v342 = vpop.f32.mrb[0].mxu0
    %v343 = vadd.f32 0.0, %v342
    %v344 = vpop.f32.mrb[0].mxu0
    %v345 = vadd.f32 0.0, %v344
    %v346 = vpop.f32.mrb[0].mxu0
    %v347 = vadd.f32 0.0, %v346
    %v348 = vpop.f32.mrb[0].mxu0
    %v349 = vadd.f32 0.0, %v348
    %350 = vmatprep.mubr.bf16.mxu0 0
    %351 = vmatmul.mubr.bf16.gmra.mrb[0].mxu0 %v172
    %v352 = vpop.f32.mrb[0].mxu0
    %v353 = vadd.f32 0.0, %v352
    %v354 = vpop.f32.mrb[0].mxu0
    %v355 = vadd.f32 0.0, %v354
    %v356 = vpop.f32.mrb[0].mxu0
    %v357 = vadd.f32 0.0, %v356
    %v358 = vpop.f32.mrb[0].mxu0
    %v359 = vadd.f32 0.0, %v358
    %360 = vmatprep.mubr.bf16.mxu0 0
    %361 = vmatmul.mubr.bf16.gmra.mrb[0].mxu0 %v173
    %v362 = vpop.f32.mrb[0].mxu0
    %v363 = vadd.f32 0.0, %v362
    %v364 = vpop.f32.mrb[0].mxu0
    %v365 = vadd.f32 0.0, %v364
    %v366 = vpop.f32.mrb[0].mxu0
    %v367 = vadd.f32 0.0, %v366
    %v368 = vpop.f32.mrb[0].mxu0
    %v369 = vadd.f32 0.0, %v368
    %370 = vmatprep.mubr.bf16.mxu0 0
    %371 = vmatmul.mubr.bf16.gmra.mrb[0].mxu0 %v174
    %v372 = vpop.f32.mrb[0].mxu0
    %v373 = vadd.f32 0.0, %v372
    %v374 = vpop.f32.mrb[0].mxu0
    %v375 = vadd.f32 0.0, %v374
    %v376 = vpop.f32.mrb[0].mxu0
    %v377 = vadd.f32 0.0, %v376
    %v378 = vpop.f32.mrb[0].mxu0
    %v379 = vadd.f32 0.0, %v378
    %380 = vmatprep.mubr.bf16.mxu0 0
    %381 = vmatmul.mubr.bf16.gmra.mrb[0].mxu0 %v175
    %v382 = vpop.f32.mrb[0].mxu0
    %v383 = vadd.f32 0.0, %v382
    %v384 = vpop.f32.mrb[0].mxu0
    %v385 = vadd.f32 0.0, %v384
    %v386 = vpop.f32.mrb[0].mxu0
    %v387 = vadd.f32 0.0, %v386
    %v388 = vpop.f32.mrb[0].mxu0
    %v389 = vadd.f32 0.0, %v388
    %390 = vmatprep.mubr.bf16.mxu0 0
    %391 = vmatmul.mubr.bf16.gmra.mrb[0].mxu0 %v176
    %v392 = vpop.f32.mrb[0].mxu0
    %v393 = vadd.f32 0.0, %v392
    %v394 = vpop.f32.mrb[0].mxu0
    %v395 = vadd.f32 0.0, %v394
    %v396 = vpop.f32.mrb[0].mxu0
    %v397 = vadd.f32 0.0, %v396
    %v398 = vpop.f32.mrb[0].mxu0
    %v399 = vadd.f32 0.0, %v398
    %400 = vmatprep.mubr.bf16.mxu0 0
    %401 = vmatmul.mubr.bf16.gmra.mrb[0].mxu0 %v177
    %v402 = vpop.f32.mrb[0].mxu0
    %v403 = vadd.f32 0.0, %v402
    %v404 = vpop.f32.mrb[0].mxu0
    %v405 = vadd.f32 0.0, %v404
    %v406 = vpop.f32.mrb[0].mxu0
    %v407 = vadd.f32 0.0, %v406
    %v408 = vpop.f32.mrb[0].mxu0
    %v409 = vadd.f32 0.0, %v408
    %410 = vmatprep.mubr.bf16.mxu0 0
    %411 = vmatmul.mubr.bf16.gmra.mrb[0].mxu0 %v178
    %v412 = vpop.f32.mrb[0].mxu0
    %v413 = vadd.f32 0.0, %v412
    %v414 = vpop.f32.mrb[0].mxu0
    %v415 = vadd.f32 0.0, %v414
    %v416 = vpop.f32.mrb[0].mxu0
    %v417 = vadd.f32 0.0, %v416
    %v418 = vpop.f32.mrb[0].mxu0
    %v419 = vadd.f32 0.0, %v418
    %420 = vmatprep.mubr.bf16.mxu0 0
    %421 = vmatmul.mubr.bf16.gmra.mrb[0].mxu0 %v179
    %v422 = vpop.f32.mrb[0].mxu0
    %v423 = vadd.f32 0.0, %v422
    %v424 = vpop.f32.mrb[0].mxu0
    %v425 = vadd.f32 0.0, %v424
    %v426 = vpop.f32.mrb[0].mxu0
    %v427 = vadd.f32 0.0, %v426
    %v428 = vpop.f32.mrb[0].mxu0
    %v429 = vadd.f32 0.0, %v428
    %430 = vmatprep.mubr.bf16.mxu0 0
    %431 = vmatmul.mubr.bf16.gmra.mrb[0].mxu0 %v180
    %v432 = vpop.f32.mrb[0].mxu0
    %v433 = vadd.f32 0.0, %v432
    %v434 = vpop.f32.mrb[0].mxu0
    %v435 = vadd.f32 0.0, %v434
    %v436 = vpop.f32.mrb[0].mxu0
    %v437 = vadd.f32 0.0, %v436
    %v438 = vpop.f32.mrb[0].mxu0
    %v439 = vadd.f32 0.0, %v438
    %440 = vmatprep.mubr.bf16.mxu0 0
    %441 = vmatmul.mubr.bf16.gmra.mrb[0].mxu0 %v181
    %v442 = vpop.f32.mrb[0].mxu0
    %v443 = vadd.f32 0.0, %v442
    %v444 = vpop.f32.mrb[0].mxu0
    %v445 = vadd.f32 0.0, %v444
    %v446 = vpop.f32.mrb[0].mxu0
    %v447 = vadd.f32 0.0, %v446
    %v448 = vpop.f32.mrb[0].mxu0
    %v449 = vadd.f32 0.0, %v448
    %450 = vmatprep.mubr.bf16.mxu0 0
    %451 = vmatmul.mubr.bf16.gmra.mrb[0].mxu0 %v182
    %v452 = vpop.f32.mrb[0].mxu0
    %v453 = vadd.f32 0.0, %v452
    %v454 = vpop.f32.mrb[0].mxu0
    %v455 = vadd.f32 0.0, %v454
    %v456 = vpop.f32.mrb[0].mxu0
    %v457 = vadd.f32 0.0, %v456
    %v458 = vpop.f32.mrb[0].mxu0
    %v459 = vadd.f32 0.0, %v458
    %460 = vmatprep.mubr.bf16.mxu0 0
    %461 = vmatmul.mubr.bf16.gmra.mrb[0].mxu0 %v183
    %v462 = vpop.f32.mrb[0].mxu0
    %v463 = vadd.f32 0.0, %v462
    %v464 = vpop.f32.mrb[0].mxu0
    %v465 = vadd.f32 0.0, %v464
    %v466 = vpop.f32.mrb[0].mxu0
    %v467 = vadd.f32 0.0, %v466
    %v468 = vpop.f32.mrb[0].mxu0
    %v469 = vadd.f32 0.0, %v468
    %470 = vmatprep.mubr.bf16.mxu0 0
    %471 = vmatmul.mubr.bf16.gmra.mrb[0].mxu0 %v184
    %v472 = vpop.f32.mrb[0].mxu0
    %v473 = vadd.f32 0.0, %v472
    %v474 = vpop.f32.mrb[0].mxu0
    %v475 = vadd.f32 0.0, %v474
    %v476 = vpop.f32.mrb[0].mxu0
    %v477 = vadd.f32 0.0, %v476
    %v478 = vpop.f32.mrb[0].mxu0
    %v479 = vadd.f32 0.0, %v478
    %480 = vmatprep.mubr.bf16.mxu0 0
    %481 = vmatmul.mubr.bf16.gmra.mrb[0].mxu0 %v185
    %v482 = vpop.f32.mrb[0].mxu0
    %v483 = vadd.f32 0.0, %v482
    %v484 = vpop.f32.mrb[0].mxu0
    %v485 = vadd.f32 0.0, %v484
    %v486 = vpop.f32.mrb[0].mxu0
    %v487 = vadd.f32 0.0, %v486
    %v488 = vpop.f32.mrb[0].mxu0
    %v489 = vadd.f32 0.0, %v488
    %490 = vdwg.mxu0
    %v491 = vmax.f32 %v333, %v335
    %492 = vmax.xlane.f32.xlu0 %v491
    %v493 = vpop.xlane.xlu0 %492
    %v494 = vmax.f32 %v337, %v339
    %495 = vmax.xlane.f32.xlu0 %v494
    %v496 = vpop.xlane.xlu0 %495
    %v497 = vmax.f32 %v343, %v345
    %498 = vmax.xlane.f32.xlu0 %v497
    %v499 = vpop.xlane.xlu0 %498
    %v500 = vmax.f32 %v347, %v349
    %501 = vmax.xlane.f32.xlu0 %v500
    %v502 = vpop.xlane.xlu0 %501
    %v503 = vmax.f32 %v353, %v355
    %504 = vmax.xlane.f32.xlu0 %v503
    %v505 = vpop.xlane.xlu0 %504
    %v506 = vmax.f32 %v357, %v359
    %507 = vmax.xlane.f32.xlu0 %v506
    %v508 = vpop.xlane.xlu0 %507
    %v509 = vmax.f32 %v363, %v365
    %510 = vmax.xlane.f32.xlu0 %v509
    %v511 = vpop.xlane.xlu0 %510
    %v512 = vmax.f32 %v367, %v369
    %513 = vmax.xlane.f32.xlu0 %v512
    %v514 = vpop.xlane.xlu0 %513
    %v515 = vmax.f32 %v373, %v375
    %516 = vmax.xlane.f32.xlu0 %v515
    %v517 = vpop.xlane.xlu0 %516
    %v518 = vmax.f32 %v377, %v379
    %519 = vmax.xlane.f32.xlu0 %v518
    %v520 = vpop.xlane.xlu0 %519
    %v521 = vmax.f32 %v383, %v385
    %522 = vmax.xlane.f32.xlu0 %v521
    %v523 = vpop.xlane.xlu0 %522
    %v524 = vmax.f32 %v387, %v389
    %525 = vmax.xlane.f32.xlu0 %v524
    %v526 = vpop.xlane.xlu0 %525
    %v527 = vmax.f32 %v393, %v395
    %528 = vmax.xlane.f32.xlu0 %v527
    %v529 = vpop.xlane.xlu0 %528
    %v530 = vmax.f32 %v397, %v399
    %531 = vmax.xlane.f32.xlu0 %v530
    %v532 = vpop.xlane.xlu0 %531
    %v533 = vmax.f32 %v403, %v405
    %534 = vmax.xlane.f32.xlu0 %v533
    %v535 = vpop.xlane.xlu0 %534
    %v536 = vmax.f32 %v407, %v409
    %537 = vmax.xlane.f32.xlu0 %v536
    %v538 = vpop.xlane.xlu0 %537
    %v539 = vmax.f32 %v413, %v415
    %540 = vmax.xlane.f32.xlu0 %v539
    %v541 = vpop.xlane.xlu0 %540
    %v542 = vmax.f32 %v417, %v419
    %543 = vmax.xlane.f32.xlu0 %v542
    %v544 = vpop.xlane.xlu0 %543
    %v545 = vmax.f32 %v423, %v425
    %546 = vmax.xlane.f32.xlu0 %v545
    %v547 = vpop.xlane.xlu0 %546
    %v548 = vmax.f32 %v427, %v429
    %549 = vmax.xlane.f32.xlu0 %v548
    %v550 = vpop.xlane.xlu0 %549
    %v551 = vmax.f32 %v433, %v435
    %552 = vmax.xlane.f32.xlu0 %v551
    %v553 = vpop.xlane.xlu0 %552
    %v554 = vmax.f32 %v437, %v439
    %555 = vmax.xlane.f32.xlu0 %v554
    %v556 = vpop.xlane.xlu0 %555
    %v557 = vmax.f32 %v443, %v445
    %558 = vmax.xlane.f32.xlu0 %v557
    %v559 = vpop.xlane.xlu0 %558
    %v560 = vmax.f32 %v447, %v449
    %561 = vmax.xlane.f32.xlu0 %v560
    %v562 = vpop.xlane.xlu0 %561
    %v563 = vmax.f32 %v453, %v455
    %564 = vmax.xlane.f32.xlu0 %v563
    %v565 = vpop.xlane.xlu0 %564
    %v566 = vmax.f32 %v457, %v459
    %567 = vmax.xlane.f32.xlu0 %v566
    %v568 = vpop.xlane.xlu0 %567
    %v569 = vmax.f32 %v463, %v465
    %570 = vmax.xlane.f32.xlu0 %v569
    %v571 = vpop.xlane.xlu0 %570
    %v572 = vmax.f32 %v467, %v469
    %573 = vmax.xlane.f32.xlu0 %v572
    %v574 = vpop.xlane.xlu0 %573
    %v575 = vmax.f32 %v473, %v475
    %576 = vmax.xlane.f32.xlu0 %v575
    %v577 = vpop.xlane.xlu0 %576
    %v578 = vmax.f32 %v477, %v479
    %579 = vmax.xlane.f32.xlu0 %v578
    %v580 = vpop.xlane.xlu0 %579
    %v581 = vmax.f32 %v483, %v485
    %582 = vmax.xlane.f32.xlu0 %v581
    %v583 = vpop.xlane.xlu0 %582
    %v584 = vmax.f32 %v487, %v489
    %585 = vmax.xlane.f32.xlu0 %v584
    %v586 = vpop.xlane.xlu0 %585
    %v587 = vmax.f32 %v493, %v505
    %v588 = vmax.f32 %v496, %v508
    %v589 = vmax.f32 %v499, %v511
    %v590 = vmax.f32 %v502, %v514
    %v591 = vmax.f32 %v587, %v517
    %v592 = vmax.f32 %v588, %v520
    %v593 = vmax.f32 %v589, %v523
    %v594 = vmax.f32 %v590, %v526
    %v595 = vmax.f32 %v591, %v529
    %v596 = vmax.f32 %v592, %v532
    %v597 = vmax.f32 %v593, %v535
    %v598 = vmax.f32 %v594, %v538
    %v599 = vmax.f32 %v595, %v541
    %v600 = vmax.f32 %v596, %v544
    %v601 = vmax.f32 %v597, %v547
    %v602 = vmax.f32 %v598, %v550
    %v603 = vmax.f32 %v599, %v553
    %v604 = vmax.f32 %v600, %v556
    %v605 = vmax.f32 %v601, %v559
    %v606 = vmax.f32 %v602, %v562
    %v607 = vmax.f32 %v603, %v565
    %v608 = vmax.f32 %v604, %v568
    %v609 = vmax.f32 %v605, %v571
    %v610 = vmax.f32 %v606, %v574
    %v611 = vmax.f32 %v607, %v577
    %v612 = vmax.f32 %v608, %v580
    %v613 = vmax.f32 %v609, %v583
    %v614 = vmax.f32 %v610, %v586
    %v615 = vmax.f32 %v611, %v612
    %v616 = vmax.f32 %v613, %v614
    %v617 = vmax.f32 %v615, %v616
    %v618 = vrot.slane %v617, 4
    %v619 = vmax.f32 %v617, %v618
    %v620 = vrot.slane %v619, 2
    %v621 = vmax.f32 %v619, %v620
    %v622 = vrot.slane %v621, 1
    %v623 = vmax.f32 %v621, %v622
    %v624 = vsub.f32 %v333, %v623
    %v625 = vsub.f32 %v335, %v623
    %v626 = vsub.f32 %v337, %v623
    %v627 = vsub.f32 %v339, %v623
    %v628 = vsub.f32 %v343, %v623
    %v629 = vsub.f32 %v345, %v623
    %v630 = vsub.f32 %v347, %v623
    %v631 = vsub.f32 %v349, %v623
    %v632 = vsub.f32 %v353, %v623
    %v633 = vsub.f32 %v355, %v623
    %v634 = vsub.f32 %v357, %v623
    %v635 = vsub.f32 %v359, %v623
    %v636 = vsub.f32 %v363, %v623
    %v637 = vsub.f32 %v365, %v623
    %v638 = vsub.f32 %v367, %v623
    %v639 = vsub.f32 %v369, %v623
    %v640 = vsub.f32 %v373, %v623
    %v641 = vsub.f32 %v375, %v623
    %v642 = vsub.f32 %v377, %v623
    %v643 = vsub.f32 %v379, %v623
    %v644 = vsub.f32 %v383, %v623
    %v645 = vsub.f32 %v385, %v623
    %v646 = vsub.f32 %v387, %v623
    %v647 = vsub.f32 %v389, %v623
    %v648 = vsub.f32 %v393, %v623
    %v649 = vsub.f32 %v395, %v623
    %v650 = vsub.f32 %v397, %v623
    %v651 = vsub.f32 %v399, %v623
    %v652 = vsub.f32 %v403, %v623
    %v653 = vsub.f32 %v405, %v623
    %v654 = vsub.f32 %v407, %v623
    %v655 = vsub.f32 %v409, %v623
    %v656 = vsub.f32 %v413, %v623
    %v657 = vsub.f32 %v415, %v623
    %v658 = vsub.f32 %v417, %v623
    %v659 = vsub.f32 %v419, %v623
    %v660 = vsub.f32 %v423, %v623
    %v661 = vsub.f32 %v425, %v623
    %v662 = vsub.f32 %v427, %v623
    %v663 = vsub.f32 %v429, %v623
    %v664 = vsub.f32 %v433, %v623
    %v665 = vsub.f32 %v435, %v623
    %v666 = vsub.f32 %v437, %v623
    %v667 = vsub.f32 %v439, %v623
    %v668 = vsub.f32 %v443, %v623
    %v669 = vsub.f32 %v445, %v623
    %v670 = vsub.f32 %v447, %v623
    %v671 = vsub.f32 %v449, %v623
    %v672 = vsub.f32 %v453, %v623
    %v673 = vsub.f32 %v455, %v623
    %v674 = vsub.f32 %v457, %v623
    %v675 = vsub.f32 %v459, %v623
    %v676 = vsub.f32 %v463, %v623
    %v677 = vsub.f32 %v465, %v623
    %v678 = vsub.f32 %v467, %v623
    %v679 = vsub.f32 %v469, %v623
    %v680 = vsub.f32 %v473, %v623
    %v681 = vsub.f32 %v475, %v623
    %v682 = vsub.f32 %v477, %v623
    %v683 = vsub.f32 %v479, %v623
    %v684 = vsub.f32 %v483, %v623
    %v685 = vsub.f32 %v485, %v623
    %v686 = vsub.f32 %v487, %v623
    %v687 = vsub.f32 %v489, %v623
    %v688 = vmul.f32 %v624, 50.0
    %v689 = vmul.f32 %v625, 50.0
    %v690 = vmul.f32 %v626, 50.0
    %v691 = vmul.f32 %v627, 50.0
    %v692 = vmul.f32 %v628, 50.0
    %v693 = vmul.f32 %v629, 50.0
    %v694 = vmul.f32 %v630, 50.0
    %v695 = vmul.f32 %v631, 50.0
    %v696 = vmul.f32 %v632, 50.0
    %v697 = vmul.f32 %v633, 50.0
    %v698 = vmul.f32 %v634, 50.0
    %v699 = vmul.f32 %v635, 50.0
    %v700 = vmul.f32 %v636, 50.0
    %v701 = vmul.f32 %v637, 50.0
    %v702 = vmul.f32 %v638, 50.0
    %v703 = vmul.f32 %v639, 50.0
    %v704 = vmul.f32 %v640, 50.0
    %v705 = vmul.f32 %v641, 50.0
    %v706 = vmul.f32 %v642, 50.0
    %v707 = vmul.f32 %v643, 50.0
    %v708 = vmul.f32 %v644, 50.0
    %v709 = vmul.f32 %v645, 50.0
    %v710 = vmul.f32 %v646, 50.0
    %v711 = vmul.f32 %v647, 50.0
    %v712 = vmul.f32 %v648, 50.0
    %v713 = vmul.f32 %v649, 50.0
    %v714 = vmul.f32 %v650, 50.0
    %v715 = vmul.f32 %v651, 50.0
    %v716 = vmul.f32 %v652, 50.0
    %v717 = vmul.f32 %v653, 50.0
    %v718 = vmul.f32 %v654, 50.0
    %v719 = vmul.f32 %v655, 50.0
    %v720 = vmul.f32 %v656, 50.0
    %v721 = vmul.f32 %v657, 50.0
    %v722 = vmul.f32 %v658, 50.0
    %v723 = vmul.f32 %v659, 50.0
    %v724 = vmul.f32 %v660, 50.0
    %v725 = vmul.f32 %v661, 50.0
    %v726 = vmul.f32 %v662, 50.0
    %v727 = vmul.f32 %v663, 50.0
    %v728 = vmul.f32 %v664, 50.0
    %v729 = vmul.f32 %v665, 50.0
    %v730 = vmul.f32 %v666, 50.0
    %v731 = vmul.f32 %v667, 50.0
    %v732 = vmul.f32 %v668, 50.0
    %v733 = vmul.f32 %v669, 50.0
    %v734 = vmul.f32 %v670, 50.0
    %v735 = vmul.f32 %v671, 50.0
    %v736 = vmul.f32 %v672, 50.0
    %v737 = vmul.f32 %v673, 50.0
    %v738 = vmul.f32 %v674, 50.0
    %v739 = vmul.f32 %v675, 50.0
    %v740 = vmul.f32 %v676, 50.0
    %v741 = vmul.f32 %v677, 50.0
    %v742 = vmul.f32 %v678, 50.0
    %v743 = vmul.f32 %v679, 50.0
    %v744 = vmul.f32 %v680, 50.0
    %v745 = vmul.f32 %v681, 50.0
    %v746 = vmul.f32 %v682, 50.0
    %v747 = vmul.f32 %v683, 50.0
    %v748 = vmul.f32 %v684, 50.0
    %v749 = vmul.f32 %v685, 50.0
    %v750 = vmul.f32 %v686, 50.0
    %v751 = vmul.f32 %v687, 50.0
    %v752 = vmul.f32 %v688, 1.442695
    %v753 = vpow.pop %v752
    %v754 = vmul.f32 %v689, 1.442695
    %v755 = vpow.pop %v754
    %v756 = vmul.f32 %v690, 1.442695
    %v757 = vpow.pop %v756
    %v758 = vmul.f32 %v691, 1.442695
    %v759 = vpow.pop %v758
    %v760 = vmul.f32 %v692, 1.442695
    %v761 = vpow.pop %v760
    %v762 = vmul.f32 %v693, 1.442695
    %v763 = vpow.pop %v762
    %v764 = vmul.f32 %v694, 1.442695
    %v765 = vpow.pop %v764
    %v766 = vmul.f32 %v695, 1.442695
    %v767 = vpow.pop %v766
    %v768 = vmul.f32 %v696, 1.442695
    %v769 = vpow.pop %v768
    %v770 = vmul.f32 %v697, 1.442695
    %v771 = vpow.pop %v770
    %v772 = vmul.f32 %v698, 1.442695
    %v773 = vpow.pop %v772
    %v774 = vmul.f32 %v699, 1.442695
    %v775 = vpow.pop %v774
    %v776 = vmul.f32 %v700, 1.442695
    %v777 = vpow.pop %v776
    %v778 = vmul.f32 %v701, 1.442695
    %v779 = vpow.pop %v778
    %v780 = vmul.f32 %v702, 1.442695
    %v781 = vpow.pop %v780
    %v782 = vmul.f32 %v703, 1.442695
    %v783 = vpow.pop %v782
    %v784 = vmul.f32 %v704, 1.442695
    %v785 = vpow.pop %v784
    %v786 = vmul.f32 %v705, 1.442695
    %v787 = vpow.pop %v786
    %v788 = vmul.f32 %v706, 1.442695
    %v789 = vpow.pop %v788
    %v790 = vmul.f32 %v707, 1.442695
    %v791 = vpow.pop %v790
    %v792 = vmul.f32 %v708, 1.442695
    %v793 = vpow.pop %v792
    %v794 = vmul.f32 %v709, 1.442695
    %v795 = vpow.pop %v794
    %v796 = vmul.f32 %v710, 1.442695
    %v797 = vpow.pop %v796
    %v798 = vmul.f32 %v711, 1.442695
    %v799 = vpow.pop %v798
    %v800 = vmul.f32 %v712, 1.442695
    %v801 = vpow.pop %v800
    %v802 = vmul.f32 %v713, 1.442695
    %v803 = vpow.pop %v802
    %v804 = vmul.f32 %v714, 1.442695
    %v805 = vpow.pop %v804
    %v806 = vmul.f32 %v715, 1.442695
    %v807 = vpow.pop %v806
    %v808 = vmul.f32 %v716, 1.442695
    %v809 = vpow.pop %v808
    %v810 = vmul.f32 %v717, 1.442695
    %v811 = vpow.pop %v810
    %v812 = vmul.f32 %v718, 1.442695
    %v813 = vpow.pop %v812
    %v814 = vmul.f32 %v719, 1.442695
    %v815 = vpow.pop %v814
    %v816 = vmul.f32 %v720, 1.442695
    %v817 = vpow.pop %v816
    %v818 = vmul.f32 %v721, 1.442695
    %v819 = vpow.pop %v818
    %v820 = vmul.f32 %v722, 1.442695
    %v821 = vpow.pop %v820
    %v822 = vmul.f32 %v723, 1.442695
    %v823 = vpow.pop %v822
    %v824 = vmul.f32 %v724, 1.442695
    %v825 = vpow.pop %v824
    %v826 = vmul.f32 %v725, 1.442695
    %v827 = vpow.pop %v826
    %v828 = vmul.f32 %v726, 1.442695
    %v829 = vpow.pop %v828
    %v830 = vmul.f32 %v727, 1.442695
    %v831 = vpow.pop %v830
    %v832 = vmul.f32 %v728, 1.442695
    %v833 = vpow.pop %v832
    %v834 = vmul.f32 %v729, 1.442695
    %v835 = vpow.pop %v834
    %v836 = vmul.f32 %v730, 1.442695
    %v837 = vpow.pop %v836
    %v838 = vmul.f32 %v731, 1.442695
    %v839 = vpow.pop %v838
    %v840 = vmul.f32 %v732, 1.442695
    %v841 = vpow.pop %v840
    %v842 = vmul.f32 %v733, 1.442695
    %v843 = vpow.pop %v842
    %v844 = vmul.f32 %v734, 1.442695
    %v845 = vpow.pop %v844
    %v846 = vmul.f32 %v735, 1.442695
    %v847 = vpow.pop %v846
    %v848 = vmul.f32 %v736, 1.442695
    %v849 = vpow.pop %v848
    %v850 = vmul.f32 %v737, 1.442695
    %v851 = vpow.pop %v850
    %v852 = vmul.f32 %v738, 1.442695
    %v853 = vpow.pop %v852
    %v854 = vmul.f32 %v739, 1.442695
    %v855 = vpow.pop %v854
    %v856 = vmul.f32 %v740, 1.442695
    %v857 = vpow.pop %v856
    %v858 = vmul.f32 %v741, 1.442695
    %v859 = vpow.pop %v858
    %v860 = vmul.f32 %v742, 1.442695
    %v861 = vpow.pop %v860
    %v862 = vmul.f32 %v743, 1.442695
    %v863 = vpow.pop %v862
    %v864 = vmul.f32 %v744, 1.442695
    %v865 = vpow.pop %v864
    %v866 = vmul.f32 %v745, 1.442695
    %v867 = vpow.pop %v866
    %v868 = vmul.f32 %v746, 1.442695
    %v869 = vpow.pop %v868
    %v870 = vmul.f32 %v747, 1.442695
    %v871 = vpow.pop %v870
    %v872 = vmul.f32 %v748, 1.442695
    %v873 = vpow.pop %v872
    %v874 = vmul.f32 %v749, 1.442695
    %v875 = vpow.pop %v874
    %v876 = vmul.f32 %v750, 1.442695
    %v877 = vpow.pop %v876
    %v878 = vmul.f32 %v751, 1.442695
    %v879 = vpow.pop %v878
    %v880 = vlaneseq
    %v881 = vshrl.u32 %v880, 7
    %v882 = vadd.s32 %v881, 8
    %v883 = vadd.s32 %v881, 16
    %v884 = vadd.s32 %v881, 24
    %v885 = vadd.s32 %v881, 32
    %v886 = vadd.s32 %v881, 40
    %v887 = vadd.s32 %v881, 48
    %v888 = vadd.s32 %v881, 56
    %v889 = vadd.s32 %v881, 64
    %v890 = vadd.s32 %v881, 72
    %v891 = vadd.s32 %v881, 80
    %v892 = vadd.s32 %v881, 88
    %v893 = vadd.s32 %v881, 96
    %v894 = vadd.s32 %v881, 104
    %v895 = vadd.s32 %v881, 112
    %v896 = vadd.s32 %v881, 120
    %v897 = vadd.s32 %v881, 128
    %v898 = vadd.s32 %v881, 136
    %v899 = vadd.s32 %v881, 144
    %v900 = vadd.s32 %v881, 152
    %v901 = vadd.s32 %v881, 160
    %v902 = vadd.s32 %v881, 168
    %v903 = vadd.s32 %v881, 176
    %v904 = vadd.s32 %v881, 184
    %v905 = vadd.s32 %v881, 192
    %v906 = vadd.s32 %v881, 200
    %v907 = vadd.s32 %v881, 208
    %v908 = vadd.s32 %v881, 216
    %v909 = vadd.s32 %v881, 224
    %v910 = vadd.s32 %v881, 232
    %v911 = vadd.s32 %v881, 240
    %v912 = vadd.s32 %v881, 248
    %vm913 = vcmp.lt.s32.totalorder %v881, 200
    %vm914 = vcmp.lt.s32.totalorder %v882, 200
    %vm915 = vcmp.lt.s32.totalorder %v883, 200
    %vm916 = vcmp.lt.s32.totalorder %v884, 200
    %vm917 = vcmp.lt.s32.totalorder %v885, 200
    %vm918 = vcmp.lt.s32.totalorder %v886, 200
    %vm919 = vcmp.lt.s32.totalorder %v887, 200
    %vm920 = vcmp.lt.s32.totalorder %v888, 200
    %vm921 = vcmp.lt.s32.totalorder %v889, 200
    %vm922 = vcmp.lt.s32.totalorder %v890, 200
    %vm923 = vcmp.lt.s32.totalorder %v891, 200
    %vm924 = vcmp.lt.s32.totalorder %v892, 200
    %vm925 = vcmp.lt.s32.totalorder %v893, 200
    %vm926 = vcmp.lt.s32.totalorder %v894, 200
    %vm927 = vcmp.lt.s32.totalorder %v895, 200
    %vm928 = vcmp.lt.s32.totalorder %v896, 200
    %vm929 = vcmp.lt.s32.totalorder %v897, 200
    %vm930 = vcmp.lt.s32.totalorder %v898, 200
    %vm931 = vcmp.lt.s32.totalorder %v899, 200
    %vm932 = vcmp.lt.s32.totalorder %v900, 200
    %vm933 = vcmp.lt.s32.totalorder %v901, 200
    %vm934 = vcmp.lt.s32.totalorder %v902, 200
    %vm935 = vcmp.lt.s32.totalorder %v903, 200
    %vm936 = vcmp.lt.s32.totalorder %v904, 200
    %vm937 = vcmp.lt.s32.totalorder %v905, 200
    %vm938 = vcmp.lt.s32.totalorder %v906, 200
    %vm939 = vcmp.lt.s32.totalorder %v907, 200
    %vm940 = vcmp.lt.s32.totalorder %v908, 200
    %vm941 = vcmp.lt.s32.totalorder %v909, 200
    %vm942 = vcmp.lt.s32.totalorder %v910, 200
    %vm943 = vcmp.lt.s32.totalorder %v911, 200
    %vm944 = vcmp.lt.s32.totalorder %v912, 200
    %v945 = vlaneseq
    %v946 = vand.u32 %v945, 127
    %v947 = vadd.s32 %v946, 128
    %vm948 = vcmp.lt.s32.totalorder %v946, 200
    %vm949 = vcmp.lt.s32.totalorder %v947, 200
    %v950 = vsel %vm913, 1, 0
    %v951 = vsel %vm914, 1, 0
    %v952 = vsel %vm915, 1, 0
    %v953 = vsel %vm916, 1, 0
    %v954 = vsel %vm917, 1, 0
    %v955 = vsel %vm918, 1, 0
    %v956 = vsel %vm919, 1, 0
    %v957 = vsel %vm920, 1, 0
    %v958 = vsel %vm921, 1, 0
    %v959 = vsel %vm922, 1, 0
    %v960 = vsel %vm923, 1, 0
    %v961 = vsel %vm924, 1, 0
    %v962 = vsel %vm925, 1, 0
    %v963 = vsel %vm926, 1, 0
    %v964 = vsel %vm927, 1, 0
    %v965 = vsel %vm928, 1, 0
    %v966 = vsel %vm929, 1, 0
    %v967 = vsel %vm930, 1, 0
    %v968 = vsel %vm931, 1, 0
    %v969 = vsel %vm932, 1, 0
    %v970 = vsel %vm933, 1, 0
    %v971 = vsel %vm934, 1, 0
    %v972 = vsel %vm935, 1, 0
    %v973 = vsel %vm936, 1, 0
    %v974 = vsel %vm937, 1, 0
    %v975 = vsel %vm938, 1, 0
    %v976 = vsel %vm939, 1, 0
    %v977 = vsel %vm940, 1, 0
    %v978 = vsel %vm941, 1, 0
    %v979 = vsel %vm942, 1, 0
    %v980 = vsel %vm943, 1, 0
    %v981 = vsel %vm944, 1, 0
    %vm982 = vcmp.eq.s32.totalorder %v950, 1
    %vm983 = vcmp.eq.s32.totalorder %v951, 1
    %vm984 = vcmp.eq.s32.totalorder %v952, 1
    %vm985 = vcmp.eq.s32.totalorder %v953, 1
    %vm986 = vcmp.eq.s32.totalorder %v954, 1
    %vm987 = vcmp.eq.s32.totalorder %v955, 1
    %vm988 = vcmp.eq.s32.totalorder %v956, 1
    %vm989 = vcmp.eq.s32.totalorder %v957, 1
    %vm990 = vcmp.eq.s32.totalorder %v958, 1
    %vm991 = vcmp.eq.s32.totalorder %v959, 1
    %vm992 = vcmp.eq.s32.totalorder %v960, 1
    %vm993 = vcmp.eq.s32.totalorder %v961, 1
    %vm994 = vcmp.eq.s32.totalorder %v962, 1
    %vm995 = vcmp.eq.s32.totalorder %v963, 1
    %vm996 = vcmp.eq.s32.totalorder %v964, 1
    %vm997 = vcmp.eq.s32.totalorder %v965, 1
    %vm998 = vcmp.eq.s32.totalorder %v966, 1
    %vm999 = vcmp.eq.s32.totalorder %v967, 1
    %vm1000 = vcmp.eq.s32.totalorder %v968, 1
    %vm1001 = vcmp.eq.s32.totalorder %v969, 1
    %vm1002 = vcmp.eq.s32.totalorder %v970, 1
    %vm1003 = vcmp.eq.s32.totalorder %v971, 1
    %vm1004 = vcmp.eq.s32.totalorder %v972, 1
    %vm1005 = vcmp.eq.s32.totalorder %v973, 1
    %vm1006 = vcmp.eq.s32.totalorder %v974, 1
    %vm1007 = vcmp.eq.s32.totalorder %v975, 1
    %vm1008 = vcmp.eq.s32.totalorder %v976, 1
    %vm1009 = vcmp.eq.s32.totalorder %v977, 1
    %vm1010 = vcmp.eq.s32.totalorder %v978, 1
    %vm1011 = vcmp.eq.s32.totalorder %v979, 1
    %vm1012 = vcmp.eq.s32.totalorder %v980, 1
    %vm1013 = vcmp.eq.s32.totalorder %v981, 1
    %v1014 = vsel %vm948, 1, 0
    %v1015 = vsel %vm949, 1, 0
    %vm1016 = vcmp.eq.s32.totalorder %v1014, 1
    %vm1017 = vcmp.eq.s32.totalorder %v1015, 1
    %vm1018 = vmand %vm982, %vm1016
    %vm1019 = vmand %vm982, %vm1017
    %vm1020 = vmand %vm983, %vm1016
    %vm1021 = vmand %vm983, %vm1017
    %vm1022 = vmand %vm984, %vm1016
    %vm1023 = vmand %vm984, %vm1017
    %vm1024 = vmand %vm985, %vm1016
    %vm1025 = vmand %vm985, %vm1017
    %vm1026 = vmand %vm986, %vm1016
    %vm1027 = vmand %vm986, %vm1017
    %vm1028 = vmand %vm987, %vm1016
    %vm1029 = vmand %vm987, %vm1017
    %vm1030 = vmand %vm988, %vm1016
    %vm1031 = vmand %vm988, %vm1017
    %vm1032 = vmand %vm989, %vm1016
    %vm1033 = vmand %vm989, %vm1017
    %vm1034 = vmand %vm990, %vm1016
    %vm1035 = vmand %vm990, %vm1017
    %vm1036 = vmand %vm991, %vm1016
    %vm1037 = vmand %vm991, %vm1017
    %vm1038 = vmand %vm992, %vm1016
    %vm1039 = vmand %vm992, %vm1017
    %vm1040 = vmand %vm993, %vm1016
    %vm1041 = vmand %vm993, %vm1017
    %vm1042 = vmand %vm994, %vm1016
    %vm1043 = vmand %vm994, %vm1017
    %vm1044 = vmand %vm995, %vm1016
    %vm1045 = vmand %vm995, %vm1017
    %vm1046 = vmand %vm996, %vm1016
    %vm1047 = vmand %vm996, %vm1017
    %vm1048 = vmand %vm997, %vm1016
    %vm1049 = vmand %vm997, %vm1017
    %vm1050 = vmand %vm998, %vm1016
    %vm1051 = vmand %vm998, %vm1017
    %vm1052 = vmand %vm999, %vm1016
    %vm1053 = vmand %vm999, %vm1017
    %vm1054 = vmand %vm1000, %vm1016
    %vm1055 = vmand %vm1000, %vm1017
    %vm1056 = vmand %vm1001, %vm1016
    %vm1057 = vmand %vm1001, %vm1017
    %vm1058 = vmand %vm1002, %vm1016
    %vm1059 = vmand %vm1002, %vm1017
    %vm1060 = vmand %vm1003, %vm1016
    %vm1061 = vmand %vm1003, %vm1017
    %vm1062 = vmand %vm1004, %vm1016
    %vm1063 = vmand %vm1004, %vm1017
    %vm1064 = vmand %vm1005, %vm1016
    %vm1065 = vmand %vm1005, %vm1017
    %vm1066 = vmand %vm1006, %vm1016
    %vm1067 = vmand %vm1006, %vm1017
    %vm1068 = vmand %vm1007, %vm1016
    %vm1069 = vmand %vm1007, %vm1017
    %vm1070 = vmand %vm1008, %vm1016
    %vm1071 = vmand %vm1008, %vm1017
    %vm1072 = vmand %vm1009, %vm1016
    %vm1073 = vmand %vm1009, %vm1017
    %vm1074 = vmand %vm1010, %vm1016
    %vm1075 = vmand %vm1010, %vm1017
    %vm1076 = vmand %vm1011, %vm1016
    %vm1077 = vmand %vm1011, %vm1017
    %vm1078 = vmand %vm1012, %vm1016
    %vm1079 = vmand %vm1012, %vm1017
    %vm1080 = vmand %vm1013, %vm1016
    %vm1081 = vmand %vm1013, %vm1017
    %v1082 = vsel %vm1018, %v753, 0.0
    %v1083 = vsel %vm1019, %v755, 0.0
    %v1084 = vsel %vm1020, %v757, 0.0
    %v1085 = vsel %vm1021, %v759, 0.0
    %v1086 = vsel %vm1022, %v761, 0.0
    %v1087 = vsel %vm1023, %v763, 0.0
    %v1088 = vsel %vm1024, %v765, 0.0
    %v1089 = vsel %vm1025, %v767, 0.0
    %v1090 = vsel %vm1026, %v769, 0.0
    %v1091 = vsel %vm1027, %v771, 0.0
    %v1092 = vsel %vm1028, %v773, 0.0
    %v1093 = vsel %vm1029, %v775, 0.0
    %v1094 = vsel %vm1030, %v777, 0.0
    %v1095 = vsel %vm1031, %v779, 0.0
    %v1096 = vsel %vm1032, %v781, 0.0
    %v1097 = vsel %vm1033, %v783, 0.0
    %v1098 = vsel %vm1034, %v785, 0.0
    %v1099 = vsel %vm1035, %v787, 0.0
    %v1100 = vsel %vm1036, %v789, 0.0
    %v1101 = vsel %vm1037, %v791, 0.0
    %v1102 = vsel %vm1038, %v793, 0.0
    %v1103 = vsel %vm1039, %v795, 0.0
    %v1104 = vsel %vm1040, %v797, 0.0
    %v1105 = vsel %vm1041, %v799, 0.0
    %v1106 = vsel %vm1042, %v801, 0.0
    %v1107 = vsel %vm1043, %v803, 0.0
    %v1108 = vsel %vm1044, %v805, 0.0
    %v1109 = vsel %vm1045, %v807, 0.0
    %v1110 = vsel %vm1046, %v809, 0.0
    %v1111 = vsel %vm1047, %v811, 0.0
    %v1112 = vsel %vm1048, %v813, 0.0
    %v1113 = vsel %vm1049, %v815, 0.0
    %v1114 = vsel %vm1050, %v817, 0.0
    %v1115 = vsel %vm1051, %v819, 0.0
    %v1116 = vsel %vm1052, %v821, 0.0
    %v1117 = vsel %vm1053, %v823, 0.0
    %v1118 = vsel %vm1054, %v825, 0.0
    %v1119 = vsel %vm1055, %v827, 0.0
    %v1120 = vsel %vm1056, %v829, 0.0
    %v1121 = vsel %vm1057, %v831, 0.0
    %v1122 = vsel %vm1058, %v833, 0.0
    %v1123 = vsel %vm1059, %v835, 0.0
    %v1124 = vsel %vm1060, %v837, 0.0
    %v1125 = vsel %vm1061, %v839, 0.0
    %v1126 = vsel %vm1062, %v841, 0.0
    %v1127 = vsel %vm1063, %v843, 0.0
    %v1128 = vsel %vm1064, %v845, 0.0
    %v1129 = vsel %vm1065, %v847, 0.0
    %v1130 = vsel %vm1066, %v849, 0.0
    %v1131 = vsel %vm1067, %v851, 0.0
    %v1132 = vsel %vm1068, %v853, 0.0
    %v1133 = vsel %vm1069, %v855, 0.0
    %v1134 = vsel %vm1070, %v857, 0.0
    %v1135 = vsel %vm1071, %v859, 0.0
    %v1136 = vsel %vm1072, %v861, 0.0
    %v1137 = vsel %vm1073, %v863, 0.0
    %v1138 = vsel %vm1074, %v865, 0.0
    %v1139 = vsel %vm1075, %v867, 0.0
    %v1140 = vsel %vm1076, %v869, 0.0
    %v1141 = vsel %vm1077, %v871, 0.0
    %v1142 = vsel %vm1078, %v873, 0.0
    %v1143 = vsel %vm1079, %v875, 0.0
    %v1144 = vsel %vm1080, %v877, 0.0
    %v1145 = vsel %vm1081, %v879, 0.0
    %1146 = vst [vmem:[#allocation2] sm:$0xff] %v1082
    %1147 = vst [vmem:[#allocation2 + $0x8] sm:$0xff] %v1083
    %1148 = vst [vmem:[#allocation2 + $0x10] sm:$0xff] %v1084
    %1149 = vst [vmem:[#allocation2 + $0x18] sm:$0xff] %v1085
    %1150 = vst [vmem:[#allocation2 + $0x20] sm:$0xff] %v1086
    %1151 = vst [vmem:[#allocation2 + $0x28] sm:$0xff] %v1087
    %1152 = vst [vmem:[#allocation2 + $0x30] sm:$0xff] %v1088
    %1153 = vst [vmem:[#allocation2 + $0x38] sm:$0xff] %v1089
    %1154 = vst [vmem:[#allocation2 + $0x40] sm:$0xff] %v1090
    %1155 = vst [vmem:[#allocation2 + $0x48] sm:$0xff] %v1091
    %1156 = vst [vmem:[#allocation2 + $0x50] sm:$0xff] %v1092
    %1157 = vst [vmem:[#allocation2 + $0x58] sm:$0xff] %v1093
    %1158 = vst [vmem:[#allocation2 + $0x60] sm:$0xff] %v1094
    %1159 = vst [vmem:[#allocation2 + $0x68] sm:$0xff] %v1095
    %1160 = vst [vmem:[#allocation2 + $0x70] sm:$0xff] %v1096
    %1161 = vst [vmem:[#allocation2 + $0x78] sm:$0xff] %v1097
    %1162 = vst [vmem:[#allocation2 + $0x80] sm:$0xff] %v1098
    %1163 = vst [vmem:[#allocation2 + $0x88] sm:$0xff] %v1099
    %1164 = vst [vmem:[#allocation2 + $0x90] sm:$0xff] %v1100
    %1165 = vst [vmem:[#allocation2 + $0x98] sm:$0xff] %v1101
    %1166 = vst [vmem:[#allocation2 + $0xa0] sm:$0xff] %v1102
    %1167 = vst [vmem:[#allocation2 + $0xa8] sm:$0xff] %v1103
    %1168 = vst [vmem:[#allocation2 + $0xb0] sm:$0xff] %v1104
    %1169 = vst [vmem:[#allocation2 + $0xb8] sm:$0xff] %v1105
    %1170 = vst [vmem:[#allocation2 + $0xc0] sm:$0xff] %v1106
    %1171 = vst [vmem:[#allocation2 + $0xc8] sm:$0xff] %v1107
    %1172 = vst [vmem:[#allocation2 + $0xd0] sm:$0xff] %v1108
    %1173 = vst [vmem:[#allocation2 + $0xd8] sm:$0xff] %v1109
    %1174 = vst [vmem:[#allocation2 + $0xe0] sm:$0xff] %v1110
    %1175 = vst [vmem:[#allocation2 + $0xe8] sm:$0xff] %v1111
    %1176 = vst [vmem:[#allocation2 + $0xf0] sm:$0xff] %v1112
    %1177 = vst [vmem:[#allocation2 + $0xf8] sm:$0xff] %v1113
    %1178 = vst [vmem:[#allocation2 + $0x100] sm:$0xff] %v1114
    %1179 = vst [vmem:[#allocation2 + $0x108] sm:$0xff] %v1115
    %1180 = vst [vmem:[#allocation2 + $0x110] sm:$0xff] %v1116
    %1181 = vst [vmem:[#allocation2 + $0x118] sm:$0xff] %v1117
    %1182 = vst [vmem:[#allocation2 + $0x120] sm:$0xff] %v1118
    %1183 = vst [vmem:[#allocation2 + $0x128] sm:$0xff] %v1119
    %1184 = vst [vmem:[#allocation2 + $0x130] sm:$0xff] %v1120
    %1185 = vst [vmem:[#allocation2 + $0x138] sm:$0xff] %v1121
    %1186 = vst [vmem:[#allocation2 + $0x140] sm:$0xff] %v1122
    %1187 = vst [vmem:[#allocation2 + $0x148] sm:$0xff] %v1123
    %1188 = vst [vmem:[#allocation2 + $0x150] sm:$0xff] %v1124
    %1189 = vst [vmem:[#allocation2 + $0x158] sm:$0xff] %v1125
    %1190 = vst [vmem:[#allocation2 + $0x160] sm:$0xff] %v1126
    %1191 = vst [vmem:[#allocation2 + $0x168] sm:$0xff] %v1127
    %1192 = vst [vmem:[#allocation2 + $0x170] sm:$0xff] %v1128
    %1193 = vst [vmem:[#allocation2 + $0x178] sm:$0xff] %v1129
    %1194 = vst [vmem:[#allocation2 + $0x180] sm:$0xff] %v1130
    %1195 = vst [vmem:[#allocation2 + $0x188] sm:$0xff] %v1131
    %1196 = vst [vmem:[#allocation2 + $0x190] sm:$0xff] %v1132
    %1197 = vst [vmem:[#allocation2 + $0x198] sm:$0xff] %v1133
    %1198 = vst [vmem:[#allocation2 + $0x1a0] sm:$0xff] %v1134
    %1199 = vst [vmem:[#allocation2 + $0x1a8] sm:$0xff] %v1135
    %1200 = vst [vmem:[#allocation2 + $0x1b0] sm:$0xff] %v1136
    %1201 = vst [vmem:[#allocation2 + $0x1b8] sm:$0xff] %v1137
    %1202 = vst [vmem:[#allocation2 + $0x1c0] sm:$0xff] %v1138
    %1203 = vst [vmem:[#allocation2 + $0x1c8] sm:$0xff] %v1139
    %1204 = vst [vmem:[#allocation2 + $0x1d0] sm:$0xff] %v1140
    %1205 = vst [vmem:[#allocation2 + $0x1d8] sm:$0xff] %v1141
    %1206 = vst [vmem:[#allocation2 + $0x1e0] sm:$0xff] %v1142
    %1207 = vst [vmem:[#allocation2 + $0x1e8] sm:$0xff] %v1143
    %1208 = vst [vmem:[#allocation2 + $0x1f0] sm:$0xff] %v1144
    %1209 = vst [vmem:[#allocation2 + $0x1f8] sm:$0xff] %v1145
    loop: start=0, step=1, limit=9
    $region18: #{tpu_custom_call.1} parent=1 // loop_pre_header
      _
    $region19: #{tpu_custom_call.1} parent=1 // loop_header
      %s1211 = sphi 0, %s1215
      %p1212 = scmp.ge.s32.totalorder %s1211, 9
    $region20: #{tpu_custom_call.1} parent=1 // loop_header_branch
      %1214 = sbr.rel (%p1212) target = $region24
    $region21: #{tpu_custom_call.1} parent=1 // loop_body
      %v1216 = vld [vmem:[#allocation2] sm:$0xff]
      %v1217 = vld [vmem:[#allocation2 + $0x8] sm:$0xff]
      %v1218 = vld [vmem:[#allocation2 + $0x10] sm:$0xff]
      %v1219 = vld [vmem:[#allocation2 + $0x18] sm:$0xff]
      %v1220 = vld [vmem:[#allocation2 + $0x20] sm:$0xff]
      %v1221 = vld [vmem:[#allocation2 + $0x28] sm:$0xff]
      %v1222 = vld [vmem:[#allocation2 + $0x30] sm:$0xff]
      %v1223 = vld [vmem:[#allocation2 + $0x38] sm:$0xff]
      %v1224 = vld [vmem:[#allocation2 + $0x40] sm:$0xff]
      %v1225 = vld [vmem:[#allocation2 + $0x48] sm:$0xff]
      %v1226 = vld [vmem:[#allocation2 + $0x50] sm:$0xff]
      %v1227 = vld [vmem:[#allocation2 + $0x58] sm:$0xff]
      %v1228 = vld [vmem:[#allocation2 + $0x60] sm:$0xff]
      %v1229 = vld [vmem:[#allocation2 + $0x68] sm:$0xff]
      %v1230 = vld [vmem:[#allocation2 + $0x70] sm:$0xff]
      %v1231 = vld [vmem:[#allocation2 + $0x78] sm:$0xff]
      %v1232 = vld [vmem:[#allocation2 + $0x80] sm:$0xff]
      %v1233 = vld [vmem:[#allocation2 + $0x88] sm:$0xff]
      %v1234 = vld [vmem:[#allocation2 + $0x90] sm:$0xff]
      %v1235 = vld [vmem:[#allocation2 + $0x98] sm:$0xff]
      %v1236 = vld [vmem:[#allocation2 + $0xa0] sm:$0xff]
      %v1237 = vld [vmem:[#allocation2 + $0xa8] sm:$0xff]
      %v1238 = vld [vmem:[#allocation2 + $0xb0] sm:$0xff]
      %v1239 = vld [vmem:[#allocation2 + $0xb8] sm:$0xff]
      %v1240 = vld [vmem:[#allocation2 + $0xc0] sm:$0xff]
      %v1241 = vld [vmem:[#allocation2 + $0xc8] sm:$0xff]
      %v1242 = vld [vmem:[#allocation2 + $0xd0] sm:$0xff]
      %v1243 = vld [vmem:[#allocation2 + $0xd8] sm:$0xff]
      %v1244 = vld [vmem:[#allocation2 + $0xe0] sm:$0xff]
      %v1245 = vld [vmem:[#allocation2 + $0xe8] sm:$0xff]
      %v1246 = vld [vmem:[#allocation2 + $0xf0] sm:$0xff]
      %v1247 = vld [vmem:[#allocation2 + $0xf8] sm:$0xff]
      %v1248 = vld [vmem:[#allocation2 + $0x100] sm:$0xff]
      %v1249 = vld [vmem:[#allocation2 + $0x108] sm:$0xff]
      %v1250 = vld [vmem:[#allocation2 + $0x110] sm:$0xff]
      %v1251 = vld [vmem:[#allocation2 + $0x118] sm:$0xff]
      %v1252 = vld [vmem:[#allocation2 + $0x120] sm:$0xff]
      %v1253 = vld [vmem:[#allocation2 + $0x128] sm:$0xff]
      %v1254 = vld [vmem:[#allocation2 + $0x130] sm:$0xff]
      %v1255 = vld [vmem:[#allocation2 + $0x138] sm:$0xff]
      %v1256 = vld [vmem:[#allocation2 + $0x140] sm:$0xff]
      %v1257 = vld [vmem:[#allocation2 + $0x148] sm:$0xff]
      %v1258 = vld [vmem:[#allocation2 + $0x150] sm:$0xff]
      %v1259 = vld [vmem:[#allocation2 + $0x158] sm:$0xff]
      %v1260 = vld [vmem:[#allocation2 + $0x160] sm:$0xff]
      %v1261 = vld [vmem:[#allocation2 + $0x168] sm:$0xff]
      %v1262 = vld [vmem:[#allocation2 + $0x170] sm:$0xff]
      %v1263 = vld [vmem:[#allocation2 + $0x178] sm:$0xff]
      %v1264 = vld [vmem:[#allocation2 + $0x180] sm:$0xff]
      %v1265 = vld [vmem:[#allocation2 + $0x188] sm:$0xff]
      %v1266 = vld [vmem:[#allocation2 + $0x190] sm:$0xff]
      %v1267 = vld [vmem:[#allocation2 + $0x198] sm:$0xff]
      %v1268 = vld [vmem:[#allocation2 + $0x1a0] sm:$0xff]
      %v1269 = vld [vmem:[#allocation2 + $0x1a8] sm:$0xff]
      %v1270 = vld [vmem:[#allocation2 + $0x1b0] sm:$0xff]
      %v1271 = vld [vmem:[#allocation2 + $0x1b8] sm:$0xff]
      %v1272 = vld [vmem:[#allocation2 + $0x1c0] sm:$0xff]
      %v1273 = vld [vmem:[#allocation2 + $0x1c8] sm:$0xff]
      %v1274 = vld [vmem:[#allocation2 + $0x1d0] sm:$0xff]
      %v1275 = vld [vmem:[#allocation2 + $0x1d8] sm:$0xff]
      %v1276 = vld [vmem:[#allocation2 + $0x1e0] sm:$0xff]
      %v1277 = vld [vmem:[#allocation2 + $0x1e8] sm:$0xff]
      %v1278 = vld [vmem:[#allocation2 + $0x1f0] sm:$0xff]
      %v1279 = vld [vmem:[#allocation2 + $0x1f8] sm:$0xff]
      %1280 = vmatprep.subr.mxu0 %v1217
      %1281 = vmatpush1.msra.mxu0 %v1216
      %1282 = vmatprep.subr.mxu0 %v1219
      %1283 = vmatpush1.msra.mxu0 %v1218
      %1284 = vmatprep.subr.mxu0 %v1221
      %1285 = vmatpush1.msra.mxu0 %v1220
      %1286 = vmatprep.subr.mxu0 %v1223
      %1287 = vmatpush1.msra.mxu0 %v1222
      %1288 = vmatprep.subr.mxu0 %v1225
      %1289 = vmatpush1.msra.mxu0 %v1224
      %1290 = vmatprep.subr.mxu0 %v1227
      %1291 = vmatpush1.msra.mxu0 %v1226
      %1292 = vmatprep.subr.mxu0 %v1229
      %1293 = vmatpush1.msra.mxu0 %v1228
      %1294 = vmatprep.subr.mxu0 %v1231
      %1295 = vmatpush1.msra.mxu0 %v1230
      %1296 = vmatprep.subr.mxu0 %v1233
      %1297 = vmatpush1.msra.mxu0 %v1232
      %1298 = vmatprep.subr.mxu0 %v1235
      %1299 = vmatpush1.msra.mxu0 %v1234
      %1300 = vmatprep.subr.mxu0 %v1237
      %1301 = vmatpush1.msra.mxu0 %v1236
      %1302 = vmatprep.subr.mxu0 %v1239
      %1303 = vmatpush1.msra.mxu0 %v1238
      %1304 = vmatprep.subr.mxu0 %v1241
      %1305 = vmatpush1.msra.mxu0 %v1240
      %1306 = vmatprep.subr.mxu0 %v1243
      %1307 = vmatpush1.msra.mxu0 %v1242
      %1308 = vmatprep.subr.mxu0 %v1245
      %1309 = vmatpush1.msra.mxu0 %v1244
      %1310 = vmatprep.subr.mxu0 %v1247
      %1311 = vmatpush1.msra.mxu0 %v1246
      %1312 = vmatprep.subr.mxu0 %v1249
      %1313 = vmatpush1.msra.mxu0 %v1248
      %1314 = vmatprep.subr.mxu0 %v1251
      %1315 = vmatpush1.msra.mxu0 %v1250
      %1316 = vmatprep.subr.mxu0 %v1253
      %1317 = vmatpush1.msra.mxu0 %v1252
      %1318 = vmatprep.subr.mxu0 %v1255
      %1319 = vmatpush1.msra.mxu0 %v1254
      %1320 = vmatprep.subr.mxu0 %v1257
      %1321 = vmatpush1.msra.mxu0 %v1256
      %1322 = vmatprep.subr.mxu0 %v1259
      %1323 = vmatpush1.msra.mxu0 %v1258
      %1324 = vmatprep.subr.mxu0 %v1261
      %1325 = vmatpush1.msra.mxu0 %v1260
      %1326 = vmatprep.subr.mxu0 %v1263
      %1327 = vmatpush1.msra.mxu0 %v1262
      %1328 = vmatprep.subr.mxu0 %v1265
      %1329 = vmatpush1.msra.mxu0 %v1264
      %1330 = vmatprep.subr.mxu0 %v1267
      %1331 = vmatpush1.msra.mxu0 %v1266
      %1332 = vmatprep.subr.mxu0 %v1269
      %1333 = vmatpush1.msra.mxu0 %v1268
      %1334 = vmatprep.subr.mxu0 %v1271
      %1335 = vmatpush1.msra.mxu0 %v1270
      %1336 = vmatprep.subr.mxu0 %v1273
      %1337 = vmatpush1.msra.mxu0 %v1272
      %1338 = vmatprep.subr.mxu0 %v1275
      %1339 = vmatpush1.msra.mxu0 %v1274
      %1340 = vmatprep.subr.mxu0 %v1277
      %1341 = vmatpush1.msra.mxu0 %v1276
      %1342 = vmatprep.subr.mxu0 %v1279
      %1343 = vmatpush1.msra.mxu0 %v1278
      %1344 = vmatprep.mubr.f32.mxu0 1.0
      %1345 = vmatmul.mubr.f32.gmra.mrb[0].mxu0 1.0
      %v1346 = vpop.f32.mrb[0].mxu0
      %v1347 = vadd.f32 0.0, %v1346
      %v1348 = vpop.f32.mrb[0].mxu0
      %v1349 = vadd.f32 0.0, %v1348
      %1350 = vdwg.mxu0
      %v1351 = vmax.f32 %v1347, 1e-30
      %v1352 = vmax.f32 %v1349, 1e-30
      %v1353 = vrcp.pop %v1351
      %v1354 = vrcp.pop %v1352
      %v1355 = vlaneseq
      %v1356 = vshrl.u32 %v1355, 7
      %v1357 = vsub.s32 0, %v1356
      %v1358 = vrot.slane %v1353, %v1357
      %v1359 = vlaneseq
      %v1360 = vshrl.u32 %v1359, 7
      %v1361 = vsub.s32 0, %v1360
      %v1362 = vrot.slane %v1354, %v1361
      %v1363 = vmul.f32 %v1216, %v1358
      %v1364 = vmul.f32 %v1217, %v1362
      %v1365 = vmul.f32 %v1218, %v1358
      %v1366 = vmul.f32 %v1219, %v1362
      %v1367 = vmul.f32 %v1220, %v1358
      %v1368 = vmul.f32 %v1221, %v1362
      %v1369 = vmul.f32 %v1222, %v1358
      %v1370 = vmul.f32 %v1223, %v1362
      %v1371 = vmul.f32 %v1224, %v1358
      %v1372 = vmul.f32 %v1225, %v1362
      %v1373 = vmul.f32 %v1226, %v1358
      %v1374 = vmul.f32 %v1227, %v1362
      %v1375 = vmul.f32 %v1228, %v1358
      %v1376 = vmul.f32 %v1229, %v1362
      %v1377 = vmul.f32 %v1230, %v1358
      %v1378 = vmul.f32 %v1231, %v1362
      %v1379 = vmul.f32 %v1232, %v1358
      %v1380 = vmul.f32 %v1233, %v1362
      %v1381 = vmul.f32 %v1234, %v1358
      %v1382 = vmul.f32 %v1235, %v1362
      %v1383 = vmul.f32 %v1236, %v1358
      %v1384 = vmul.f32 %v1237, %v1362
      %v1385 = vmul.f32 %v1238, %v1358
      %v1386 = vmul.f32 %v1239, %v1362
      %v1387 = vmul.f32 %v1240, %v1358
      %v1388 = vmul.f32 %v1241, %v1362
      %v1389 = vmul.f32 %v1242, %v1358
      %v1390 = vmul.f32 %v1243, %v1362
      %v1391 = vmul.f32 %v1244, %v1358
      %v1392 = vmul.f32 %v1245, %v1362
      %v1393 = vmul.f32 %v1246, %v1358
      %v1394 = vmul.f32 %v1247, %v1362
      %v1395 = vmul.f32 %v1248, %v1358
      %v1396 = vmul.f32 %v1249, %v1362
      %v1397 = vmul.f32 %v1250, %v1358
      %v1398 = vmul.f32 %v1251, %v1362
      %v1399 = vmul.f32 %v1252, %v1358
      %v1400 = vmul.f32 %v1253, %v1362
      %v1401 = vmul.f32 %v1254, %v1358
      %v1402 = vmul.f32 %v1255, %v1362
      %v1403 = vmul.f32 %v1256, %v1358
      %v1404 = vmul.f32 %v1257, %v1362
      %v1405 = vmul.f32 %v1258, %v1358
      %v1406 = vmul.f32 %v1259, %v1362
      %v1407 = vmul.f32 %v1260, %v1358
      %v1408 = vmul.f32 %v1261, %v1362
      %v1409 = vmul.f32 %v1262, %v1358
      %v1410 = vmul.f32 %v1263, %v1362
      %v1411 = vmul.f32 %v1264, %v1358
      %v1412 = vmul.f32 %v1265, %v1362
      %v1413 = vmul.f32 %v1266, %v1358
      %v1414 = vmul.f32 %v1267, %v1362
      %v1415 = vmul.f32 %v1268, %v1358
      %v1416 = vmul.f32 %v1269, %v1362
      %v1417 = vmul.f32 %v1270, %v1358
      %v1418 = vmul.f32 %v1271, %v1362
      %v1419 = vmul.f32 %v1272, %v1358
      %v1420 = vmul.f32 %v1273, %v1362
      %v1421 = vmul.f32 %v1274, %v1358
      %v1422 = vmul.f32 %v1275, %v1362
      %v1423 = vmul.f32 %v1276, %v1358
      %v1424 = vmul.f32 %v1277, %v1362
      %v1425 = vmul.f32 %v1278, %v1358
      %v1426 = vmul.f32 %v1279, %v1362
      %1427 = vmatprep.subr.mxu0 0.0
      %1428 = vmatpush1.msra.mxu0 1.0
      %1429 = vmatprep.subr.mxu0 0.0
      %1430 = vmatpush1.msra.mxu0 1.0
      %1431 = vmatprep.subr.mxu0 0.0
      %1432 = vmatpush1.msra.mxu0 1.0
      %1433 = vmatprep.subr.mxu0 0.0
      %1434 = vmatpush1.msra.mxu0 1.0
      %1435 = vmatprep.subr.mxu0 0.0
      %1436 = vmatpush1.msra.mxu0 1.0
      %1437 = vmatprep.subr.mxu0 0.0
      %1438 = vmatpush1.msra.mxu0 1.0
      %1439 = vmatprep.subr.mxu0 0.0
      %1440 = vmatpush1.msra.mxu0 1.0
      %1441 = vmatprep.subr.mxu0 0.0
      %1442 = vmatpush1.msra.mxu0 1.0
      %1443 = vmatprep.subr.mxu0 0.0
      %1444 = vmatpush1.msra.mxu0 1.0
      %1445 = vmatprep.subr.mxu0 0.0
      %1446 = vmatpush1.msra.mxu0 1.0
      %1447 = vmatprep.subr.mxu0 0.0
      %1448 = vmatpush1.msra.mxu0 1.0
      %1449 = vmatprep.subr.mxu0 0.0
      %1450 = vmatpush1.msra.mxu0 1.0
      %1451 = vmatprep.subr.mxu0 0.0
      %1452 = vmatpush1.msra.mxu0 1.0
      %1453 = vmatprep.subr.mxu0 0.0
      %1454 = vmatpush1.msra.mxu0 1.0
      %1455 = vmatprep.subr.mxu0 0.0
      %1456 = vmatpush1.msra.mxu0 1.0
      %1457 = vmatprep.subr.mxu0 0.0
      %1458 = vmatpush1.msra.mxu0 1.0
      %1459 = vmatprep.subr.mxu0 0.0
      %1460 = vmatpush1.msra.mxu0 1.0
      %1461 = vmatprep.subr.mxu0 0.0
      %1462 = vmatpush1.msra.mxu0 1.0
      %1463 = vmatprep.subr.mxu0 0.0
      %1464 = vmatpush1.msra.mxu0 1.0
      %1465 = vmatprep.subr.mxu0 0.0
      %1466 = vmatpush1.msra.mxu0 1.0
      %1467 = vmatprep.subr.mxu0 0.0
      %1468 = vmatpush1.msra.mxu0 1.0
      %1469 = vmatprep.subr.mxu0 0.0
      %1470 = vmatpush1.msra.mxu0 1.0
      %1471 = vmatprep.subr.mxu0 0.0
      %1472 = vmatpush1.msra.mxu0 1.0
      %1473 = vmatprep.subr.mxu0 0.0
      %1474 = vmatpush1.msra.mxu0 1.0
      %1475 = vmatprep.subr.mxu0 0.0
      %1476 = vmatpush1.msra.mxu0 1.0
      %1477 = vmatprep.subr.mxu0 0.0
      %1478 = vmatpush1.msra.mxu0 1.0
      %1479 = vmatprep.subr.mxu0 0.0
      %1480 = vmatpush1.msra.mxu0 1.0
      %1481 = vmatprep.subr.mxu0 0.0
      %1482 = vmatpush1.msra.mxu0 1.0
      %1483 = vmatprep.subr.mxu0 0.0
      %1484 = vmatpush1.msra.mxu0 1.0
      %1485 = vmatprep.subr.mxu0 0.0
      %1486 = vmatpush1.msra.mxu0 1.0
      %1487 = vmatprep.subr.mxu0 0.0
      %1488 = vmatpush1.msra.mxu0 1.0
      %1489 = vmatprep.subr.mxu0 0.0
      %1490 = vmatpush1.msra.mxu0 1.0
      %1491 = vmatprep.mubr.f32.mxu0 %v1364
      %1492 = vmatmul.mubr.f32.gmra.mrb[0].mxu0 %v1363
      %v1493 = vpop.f32.mrb[0].mxu0
      %v1494 = vadd.f32 0.0, %v1493
      %v1495 = vpop.f32.mrb[0].mxu0
      %1496 = vmatprep.mubr.f32.mxu0 %v1366
      %1497 = vmatmul.mubr.f32.gmra.mrb[0].mxu0 %v1365
      %v1498 = vpop.f32.mrb[0].mxu0
      %v1499 = vadd.f32 0.0, %v1498
      %v1500 = vpop.f32.mrb[0].mxu0
      %1501 = vmatprep.mubr.f32.mxu0 %v1368
      %1502 = vmatmul.mubr.f32.gmra.mrb[0].mxu0 %v1367
      %v1503 = vpop.f32.mrb[0].mxu0
      %v1504 = vadd.f32 0.0, %v1503
      %v1505 = vpop.f32.mrb[0].mxu0
      %1506 = vmatprep.mubr.f32.mxu0 %v1370
      %1507 = vmatmul.mubr.f32.gmra.mrb[0].mxu0 %v1369
      %v1508 = vpop.f32.mrb[0].mxu0
      %v1509 = vadd.f32 0.0, %v1508
      %v1510 = vpop.f32.mrb[0].mxu0
      %1511 = vmatprep.mubr.f32.mxu0 %v1372
      %1512 = vmatmul.mubr.f32.gmra.mrb[0].mxu0 %v1371
      %v1513 = vpop.f32.mrb[0].mxu0
      %v1514 = vadd.f32 0.0, %v1513
      %v1515 = vpop.f32.mrb[0].mxu0
      %1516 = vmatprep.mubr.f32.mxu0 %v1374
      %1517 = vmatmul.mubr.f32.gmra.mrb[0].mxu0 %v1373
      %v1518 = vpop.f32.mrb[0].mxu0
      %v1519 = vadd.f32 0.0, %v1518
      %v1520 = vpop.f32.mrb[0].mxu0
      %1521 = vmatprep.mubr.f32.mxu0 %v1376
      %1522 = vmatmul.mubr.f32.gmra.mrb[0].mxu0 %v1375
      %v1523 = vpop.f32.mrb[0].mxu0
      %v1524 = vadd.f32 0.0, %v1523
      %v1525 = vpop.f32.mrb[0].mxu0
      %1526 = vmatprep.mubr.f32.mxu0 %v1378
      %1527 = vmatmul.mubr.f32.gmra.mrb[0].mxu0 %v1377
      %v1528 = vpop.f32.mrb[0].mxu0
      %v1529 = vadd.f32 0.0, %v1528
      %v1530 = vpop.f32.mrb[0].mxu0
      %1531 = vmatprep.mubr.f32.mxu0 %v1380
      %1532 = vmatmul.mubr.f32.gmra.mrb[0].mxu0 %v1379
      %v1533 = vpop.f32.mrb[0].mxu0
      %v1534 = vadd.f32 0.0, %v1533
      %v1535 = vpop.f32.mrb[0].mxu0
      %1536 = vmatprep.mubr.f32.mxu0 %v1382
      %1537 = vmatmul.mubr.f32.gmra.mrb[0].mxu0 %v1381
      %v1538 = vpop.f32.mrb[0].mxu0
      %v1539 = vadd.f32 0.0, %v1538
      %v1540 = vpop.f32.mrb[0].mxu0
      %1541 = vmatprep.mubr.f32.mxu0 %v1384
      %1542 = vmatmul.mubr.f32.gmra.mrb[0].mxu0 %v1383
      %v1543 = vpop.f32.mrb[0].mxu0
      %v1544 = vadd.f32 0.0, %v1543
      %v1545 = vpop.f32.mrb[0].mxu0
      %1546 = vmatprep.mubr.f32.mxu0 %v1386
      %1547 = vmatmul.mubr.f32.gmra.mrb[0].mxu0 %v1385
      %v1548 = vpop.f32.mrb[0].mxu0
      %v1549 = vadd.f32 0.0, %v1548
      %v1550 = vpop.f32.mrb[0].mxu0
      %1551 = vmatprep.mubr.f32.mxu0 %v1388
      %1552 = vmatmul.mubr.f32.gmra.mrb[0].mxu0 %v1387
      %v1553 = vpop.f32.mrb[0].mxu0
      %v1554 = vadd.f32 0.0, %v1553
      %v1555 = vpop.f32.mrb[0].mxu0
      %1556 = vmatprep.mubr.f32.mxu0 %v1390
      %1557 = vmatmul.mubr.f32.gmra.mrb[0].mxu0 %v1389
      %v1558 = vpop.f32.mrb[0].mxu0
      %v1559 = vadd.f32 0.0, %v1558
      %v1560 = vpop.f32.mrb[0].mxu0
      %1561 = vmatprep.mubr.f32.mxu0 %v1392
      %1562 = vmatmul.mubr.f32.gmra.mrb[0].mxu0 %v1391
      %v1563 = vpop.f32.mrb[0].mxu0
      %v1564 = vadd.f32 0.0, %v1563
      %v1565 = vpop.f32.mrb[0].mxu0
      %1566 = vmatprep.mubr.f32.mxu0 %v1394
      %1567 = vmatmul.mubr.f32.gmra.mrb[0].mxu0 %v1393
      %v1568 = vpop.f32.mrb[0].mxu0
      %v1569 = vadd.f32 0.0, %v1568
      %v1570 = vpop.f32.mrb[0].mxu0
      %1571 = vmatprep.mubr.f32.mxu0 %v1396
      %1572 = vmatmul.mubr.f32.gmra.mrb[0].mxu0 %v1395
      %v1573 = vpop.f32.mrb[0].mxu0
      %v1574 = vadd.f32 0.0, %v1573
      %v1575 = vpop.f32.mrb[0].mxu0
      %1576 = vmatprep.mubr.f32.mxu0 %v1398
      %1577 = vmatmul.mubr.f32.gmra.mrb[0].mxu0 %v1397
      %v1578 = vpop.f32.mrb[0].mxu0
      %v1579 = vadd.f32 0.0, %v1578
      %v1580 = vpop.f32.mrb[0].mxu0
      %1581 = vmatprep.mubr.f32.mxu0 %v1400
      %1582 = vmatmul.mubr.f32.gmra.mrb[0].mxu0 %v1399
      %v1583 = vpop.f32.mrb[0].mxu0
      %v1584 = vadd.f32 0.0, %v1583
      %v1585 = vpop.f32.mrb[0].mxu0
      %1586 = vmatprep.mubr.f32.mxu0 %v1402
      %1587 = vmatmul.mubr.f32.gmra.mrb[0].mxu0 %v1401
      %v1588 = vpop.f32.mrb[0].mxu0
      %v1589 = vadd.f32 0.0, %v1588
      %v1590 = vpop.f32.mrb[0].mxu0
      %1591 = vmatprep.mubr.f32.mxu0 %v1404
      %1592 = vmatmul.mubr.f32.gmra.mrb[0].mxu0 %v1403
      %v1593 = vpop.f32.mrb[0].mxu0
      %v1594 = vadd.f32 0.0, %v1593
      %v1595 = vpop.f32.mrb[0].mxu0
      %1596 = vmatprep.mubr.f32.mxu0 %v1406
      %1597 = vmatmul.mubr.f32.gmra.mrb[0].mxu0 %v1405
      %v1598 = vpop.f32.mrb[0].mxu0
      %v1599 = vadd.f32 0.0, %v1598
      %v1600 = vpop.f32.mrb[0].mxu0
      %1601 = vmatprep.mubr.f32.mxu0 %v1408
      %1602 = vmatmul.mubr.f32.gmra.mrb[0].mxu0 %v1407
      %v1603 = vpop.f32.mrb[0].mxu0
      %v1604 = vadd.f32 0.0, %v1603
      %v1605 = vpop.f32.mrb[0].mxu0
      %1606 = vmatprep.mubr.f32.mxu0 %v1410
      %1607 = vmatmul.mubr.f32.gmra.mrb[0].mxu0 %v1409
      %v1608 = vpop.f32.mrb[0].mxu0
      %v1609 = vadd.f32 0.0, %v1608
      %v1610 = vpop.f32.mrb[0].mxu0
      %1611 = vmatprep.mubr.f32.mxu0 %v1412
      %1612 = vmatmul.mubr.f32.gmra.mrb[0].mxu0 %v1411
      %v1613 = vpop.f32.mrb[0].mxu0
      %v1614 = vadd.f32 0.0, %v1613
      %v1615 = vpop.f32.mrb[0].mxu0
      %1616 = vmatprep.mubr.f32.mxu0 %v1414
      %1617 = vmatmul.mubr.f32.gmra.mrb[0].mxu0 %v1413
      %v1618 = vpop.f32.mrb[0].mxu0
      %v1619 = vadd.f32 0.0, %v1618
      %v1620 = vpop.f32.mrb[0].mxu0
      %1621 = vmatprep.mubr.f32.mxu0 %v1416
      %1622 = vmatmul.mubr.f32.gmra.mrb[0].mxu0 %v1415
      %v1623 = vpop.f32.mrb[0].mxu0
      %v1624 = vadd.f32 0.0, %v1623
      %v1625 = vpop.f32.mrb[0].mxu0
      %1626 = vmatprep.mubr.f32.mxu0 %v1418
      %1627 = vmatmul.mubr.f32.gmra.mrb[0].mxu0 %v1417
      %v1628 = vpop.f32.mrb[0].mxu0
      %v1629 = vadd.f32 0.0, %v1628
      %v1630 = vpop.f32.mrb[0].mxu0
      %1631 = vmatprep.mubr.f32.mxu0 %v1420
      %1632 = vmatmul.mubr.f32.gmra.mrb[0].mxu0 %v1419
      %v1633 = vpop.f32.mrb[0].mxu0
      %v1634 = vadd.f32 0.0, %v1633
      %v1635 = vpop.f32.mrb[0].mxu0
      %1636 = vmatprep.mubr.f32.mxu0 %v1422
      %1637 = vmatmul.mubr.f32.gmra.mrb[0].mxu0 %v1421
      %v1638 = vpop.f32.mrb[0].mxu0
      %v1639 = vadd.f32 0.0, %v1638
      %v1640 = vpop.f32.mrb[0].mxu0
      %1641 = vmatprep.mubr.f32.mxu0 %v1424
      %1642 = vmatmul.mubr.f32.gmra.mrb[0].mxu0 %v1423
      %v1643 = vpop.f32.mrb[0].mxu0
      %v1644 = vadd.f32 0.0, %v1643
      %v1645 = vpop.f32.mrb[0].mxu0
      %1646 = vmatprep.mubr.f32.mxu0 %v1426
      %1647 = vmatmul.mubr.f32.gmra.mrb[0].mxu0 %v1425
      %v1648 = vpop.f32.mrb[0].mxu0
      %v1649 = vadd.f32 0.0, %v1648
      %v1650 = vpop.f32.mrb[0].mxu0
      %1651 = vdwg.mxu0
      %v1652 = vmax.f32 %v1494, 1e-30
      %v1653 = vmax.f32 %v1499, 1e-30
      %v1654 = vmax.f32 %v1504, 1e-30
      %v1655 = vmax.f32 %v1509, 1e-30
      %v1656 = vmax.f32 %v1514, 1e-30
      %v1657 = vmax.f32 %v1519, 1e-30
      %v1658 = vmax.f32 %v1524, 1e-30
      %v1659 = vmax.f32 %v1529, 1e-30
      %v1660 = vmax.f32 %v1534, 1e-30
      %v1661 = vmax.f32 %v1539, 1e-30
      %v1662 = vmax.f32 %v1544, 1e-30
      %v1663 = vmax.f32 %v1549, 1e-30
      %v1664 = vmax.f32 %v1554, 1e-30
      %v1665 = vmax.f32 %v1559, 1e-30
      %v1666 = vmax.f32 %v1564, 1e-30
      %v1667 = vmax.f32 %v1569, 1e-30
      %v1668 = vmax.f32 %v1574, 1e-30
      %v1669 = vmax.f32 %v1579, 1e-30
      %v1670 = vmax.f32 %v1584, 1e-30
      %v1671 = vmax.f32 %v1589, 1e-30
      %v1672 = vmax.f32 %v1594, 1e-30
      %v1673 = vmax.f32 %v1599, 1e-30
      %v1674 = vmax.f32 %v1604, 1e-30
      %v1675 = vmax.f32 %v1609, 1e-30
      %v1676 = vmax.f32 %v1614, 1e-30
      %v1677 = vmax.f32 %v1619, 1e-30
      %v1678 = vmax.f32 %v1624, 1e-30
      %v1679 = vmax.f32 %v1629, 1e-30
      %v1680 = vmax.f32 %v1634, 1e-30
      %v1681 = vmax.f32 %v1639, 1e-30
      %v1682 = vmax.f32 %v1644, 1e-30
      %v1683 = vmax.f32 %v1649, 1e-30
      %v1684 = vrcp.pop %v1652
      %v1685 = vrcp.pop %v1653
      %v1686 = vrcp.pop %v1654
      %v1687 = vrcp.pop %v1655
      %v1688 = vrcp.pop %v1656
      %v1689 = vrcp.pop %v1657
      %v1690 = vrcp.pop %v1658
      %v1691 = vrcp.pop %v1659
      %v1692 = vrcp.pop %v1660
      %v1693 = vrcp.pop %v1661
      %v1694 = vrcp.pop %v1662
      %v1695 = vrcp.pop %v1663
      %v1696 = vrcp.pop %v1664
      %v1697 = vrcp.pop %v1665
      %v1698 = vrcp.pop %v1666
      %v1699 = vrcp.pop %v1667
      %v1700 = vrcp.pop %v1668
      %v1701 = vrcp.pop %v1669
      %v1702 = vrcp.pop %v1670
      %v1703 = vrcp.pop %v1671
      %v1704 = vrcp.pop %v1672
      %v1705 = vrcp.pop %v1673
      %v1706 = vrcp.pop %v1674
      %v1707 = vrcp.pop %v1675
      %v1708 = vrcp.pop %v1676
      %v1709 = vrcp.pop %v1677
      %v1710 = vrcp.pop %v1678
      %v1711 = vrcp.pop %v1679
      %v1712 = vrcp.pop %v1680
      %v1713 = vrcp.pop %v1681
      %v1714 = vrcp.pop %v1682
      %v1715 = vrcp.pop %v1683
      %1717 = vset.pattern.permute.xlu0 0
      %1718 = vperm.xlu0 %1717, %v1684
      %v1719 = vpop.permute.xlu0 %1718
      %1722 = vset.pattern.permute.xlu0 0
      %1723 = vperm.xlu0 %1722, %v1685
      %v1724 = vpop.permute.xlu0 %1723
      %1727 = vset.pattern.permute.xlu0 0
      %1728 = vperm.xlu0 %1727, %v1686
      %v1729 = vpop.permute.xlu0 %1728
      %1732 = vset.pattern.permute.xlu0 0
      %1733 = vperm.xlu0 %1732, %v1687
      %v1734 = vpop.permute.xlu0 %1733
      %1737 = vset.pattern.permute.xlu0 0
      %1738 = vperm.xlu0 %1737, %v1688
      %v1739 = vpop.permute.xlu0 %1738
      %1742 = vset.pattern.permute.xlu0 0
      %1743 = vperm.xlu0 %1742, %v1689
      %v1744 = vpop.permute.xlu0 %1743
      %1747 = vset.pattern.permute.xlu0 0
      %1748 = vperm.xlu0 %1747, %v1690
      %v1749 = vpop.permute.xlu0 %1748
      %1752 = vset.pattern.permute.xlu0 0
      %1753 = vperm.xlu0 %1752, %v1691
      %v1754 = vpop.permute.xlu0 %1753
      %1757 = vset.pattern.permute.xlu0 0
      %1758 = vperm.xlu0 %1757, %v1692
      %v1759 = vpop.permute.xlu0 %1758
      %1762 = vset.pattern.permute.xlu0 0
      %1763 = vperm.xlu0 %1762, %v1693
      %v1764 = vpop.permute.xlu0 %1763
      %1767 = vset.pattern.permute.xlu0 0
      %1768 = vperm.xlu0 %1767, %v1694
      %v1769 = vpop.permute.xlu0 %1768
      %1772 = vset.pattern.permute.xlu0 0
      %1773 = vperm.xlu0 %1772, %v1695
      %v1774 = vpop.permute.xlu0 %1773
      %1777 = vset.pattern.permute.xlu0 0
      %1778 = vperm.xlu0 %1777, %v1696
      %v1779 = vpop.permute.xlu0 %1778
      %1782 = vset.pattern.permute.xlu0 0
      %1783 = vperm.xlu0 %1782, %v1697
      %v1784 = vpop.permute.xlu0 %1783
      %1787 = vset.pattern.permute.xlu0 0
      %1788 = vperm.xlu0 %1787, %v1698
      %v1789 = vpop.permute.xlu0 %1788
      %1792 = vset.pattern.permute.xlu0 0
      %1793 = vperm.xlu0 %1792, %v1699
      %v1794 = vpop.permute.xlu0 %1793
      %1797 = vset.pattern.permute.xlu0 0
      %1798 = vperm.xlu0 %1797, %v1700
      %v1799 = vpop.permute.xlu0 %1798
      %1802 = vset.pattern.permute.xlu0 0
      %1803 = vperm.xlu0 %1802, %v1701
      %v1804 = vpop.permute.xlu0 %1803
      %1807 = vset.pattern.permute.xlu0 0
      %1808 = vperm.xlu0 %1807, %v1702
      %v1809 = vpop.permute.xlu0 %1808
      %1812 = vset.pattern.permute.xlu0 0
      %1813 = vperm.xlu0 %1812, %v1703
      %v1814 = vpop.permute.xlu0 %1813
      %1817 = vset.pattern.permute.xlu0 0
      %1818 = vperm.xlu0 %1817, %v1704
      %v1819 = vpop.permute.xlu0 %1818
      %1822 = vset.pattern.permute.xlu0 0
      %1823 = vperm.xlu0 %1822, %v1705
      %v1824 = vpop.permute.xlu0 %1823
      %1827 = vset.pattern.permute.xlu0 0
      %1828 = vperm.xlu0 %1827, %v1706
      %v1829 = vpop.permute.xlu0 %1828
      %1832 = vset.pattern.permute.xlu0 0
      %1833 = vperm.xlu0 %1832, %v1707
      %v1834 = vpop.permute.xlu0 %1833
      %1837 = vset.pattern.permute.xlu0 0
      %1838 = vperm.xlu0 %1837, %v1708
      %v1839 = vpop.permute.xlu0 %1838
      %1842 = vset.pattern.permute.xlu0 0
      %1843 = vperm.xlu0 %1842, %v1709
      %v1844 = vpop.permute.xlu0 %1843
      %1847 = vset.pattern.permute.xlu0 0
      %1848 = vperm.xlu0 %1847, %v1710
      %v1849 = vpop.permute.xlu0 %1848
      %1852 = vset.pattern.permute.xlu0 0
      %1853 = vperm.xlu0 %1852, %v1711
      %v1854 = vpop.permute.xlu0 %1853
      %1857 = vset.pattern.permute.xlu0 0
      %1858 = vperm.xlu0 %1857, %v1712
      %v1859 = vpop.permute.xlu0 %1858
      %1862 = vset.pattern.permute.xlu0 0
      %1863 = vperm.xlu0 %1862, %v1713
      %v1864 = vpop.permute.xlu0 %1863
      %1867 = vset.pattern.permute.xlu0 0
      %1868 = vperm.xlu0 %1867, %v1714
      %v1869 = vpop.permute.xlu0 %1868
      %1872 = vset.pattern.permute.xlu0 0
      %1873 = vperm.xlu0 %1872, %v1715
      %v1874 = vpop.permute.xlu0 %1873
      %v1876 = vmul.f32 %v1363, %v1719
      %v1877 = vmul.f32 %v1364, %v1719
      %v1878 = vmul.f32 %v1365, %v1724
      %v1879 = vmul.f32 %v1366, %v1724
      %v1880 = vmul.f32 %v1367, %v1729
      %v1881 = vmul.f32 %v1368, %v1729
      %v1882 = vmul.f32 %v1369, %v1734
      %v1883 = vmul.f32 %v1370, %v1734
      %v1884 = vmul.f32 %v1371, %v1739
      %v1885 = vmul.f32 %v1372, %v1739
      %v1886 = vmul.f32 %v1373, %v1744
      %v1887 = vmul.f32 %v1374, %v1744
      %v1888 = vmul.f32 %v1375, %v1749
      %v1889 = vmul.f32 %v1376, %v1749
      %v1890 = vmul.f32 %v1377, %v1754
      %v1891 = vmul.f32 %v1378, %v1754
      %v1892 = vmul.f32 %v1379, %v1759
      %v1893 = vmul.f32 %v1380, %v1759
      %v1894 = vmul.f32 %v1381, %v1764
      %v1895 = vmul.f32 %v1382, %v1764
      %v1896 = vmul.f32 %v1383, %v1769
      %v1897 = vmul.f32 %v1384, %v1769
      %v1898 = vmul.f32 %v1385, %v1774
      %v1899 = vmul.f32 %v1386, %v1774
      %v1900 = vmul.f32 %v1387, %v1779
      %v1901 = vmul.f32 %v1388, %v1779
      %v1902 = vmul.f32 %v1389, %v1784
      %v1903 = vmul.f32 %v1390, %v1784
      %v1904 = vmul.f32 %v1391, %v1789
      %v1905 = vmul.f32 %v1392, %v1789
      %v1906 = vmul.f32 %v1393, %v1794
      %v1907 = vmul.f32 %v1394, %v1794
      %v1908 = vmul.f32 %v1395, %v1799
      %v1909 = vmul.f32 %v1396, %v1799
      %v1910 = vmul.f32 %v1397, %v1804
      %v1911 = vmul.f32 %v1398, %v1804
      %v1912 = vmul.f32 %v1399, %v1809
      %v1913 = vmul.f32 %v1400, %v1809
      %v1914 = vmul.f32 %v1401, %v1814
      %v1915 = vmul.f32 %v1402, %v1814
      %v1916 = vmul.f32 %v1403, %v1819
      %v1917 = vmul.f32 %v1404, %v1819
      %v1918 = vmul.f32 %v1405, %v1824
      %v1919 = vmul.f32 %v1406, %v1824
      %v1920 = vmul.f32 %v1407, %v1829
      %v1921 = vmul.f32 %v1408, %v1829
      %v1922 = vmul.f32 %v1409, %v1834
      %v1923 = vmul.f32 %v1410, %v1834
      %v1924 = vmul.f32 %v1411, %v1839
      %v1925 = vmul.f32 %v1412, %v1839
      %v1926 = vmul.f32 %v1413, %v1844
      %v1927 = vmul.f32 %v1414, %v1844
      %v1928 = vmul.f32 %v1415, %v1849
      %v1929 = vmul.f32 %v1416, %v1849
      %v1930 = vmul.f32 %v1417, %v1854
      %v1931 = vmul.f32 %v1418, %v1854
      %v1932 = vmul.f32 %v1419, %v1859
      %v1933 = vmul.f32 %v1420, %v1859
      %v1934 = vmul.f32 %v1421, %v1864
      %v1935 = vmul.f32 %v1422, %v1864
      %v1936 = vmul.f32 %v1423, %v1869
      %v1937 = vmul.f32 %v1424, %v1869
      %v1938 = vmul.f32 %v1425, %v1874
      %v1939 = vmul.f32 %v1426, %v1874
      %1940 = vst [vmem:[#allocation2] sm:$0xff] %v1876
      %1941 = vst [vmem:[#allocation2 + $0x8] sm:$0xff] %v1877
      %1942 = vst [vmem:[#allocation2 + $0x10] sm:$0xff] %v1878
      %1943 = vst [vmem:[#allocation2 + $0x18] sm:$0xff] %v1879
      %1944 = vst [vmem:[#allocation2 + $0x20] sm:$0xff] %v1880
      %1945 = vst [vmem:[#allocation2 + $0x28] sm:$0xff] %v1881
      %1946 = vst [vmem:[#allocation2 + $0x30] sm:$0xff] %v1882
      %1947 = vst [vmem:[#allocation2 + $0x38] sm:$0xff] %v1883
      %1948 = vst [vmem:[#allocation2 + $0x40] sm:$0xff] %v1884
      %1949 = vst [vmem:[#allocation2 + $0x48] sm:$0xff] %v1885
      %1950 = vst [vmem:[#allocation2 + $0x50] sm:$0xff] %v1886
      %1951 = vst [vmem:[#allocation2 + $0x58] sm:$0xff] %v1887
      %1952 = vst [vmem:[#allocation2 + $0x60] sm:$0xff] %v1888
      %1953 = vst [vmem:[#allocation2 + $0x68] sm:$0xff] %v1889
      %1954 = vst [vmem:[#allocation2 + $0x70] sm:$0xff] %v1890
      %1955 = vst [vmem:[#allocation2 + $0x78] sm:$0xff] %v1891
      %1956 = vst [vmem:[#allocation2 + $0x80] sm:$0xff] %v1892
      %1957 = vst [vmem:[#allocation2 + $0x88] sm:$0xff] %v1893
      %1958 = vst [vmem:[#allocation2 + $0x90] sm:$0xff] %v1894
      %1959 = vst [vmem:[#allocation2 + $0x98] sm:$0xff] %v1895
      %1960 = vst [vmem:[#allocation2 + $0xa0] sm:$0xff] %v1896
      %1961 = vst [vmem:[#allocation2 + $0xa8] sm:$0xff] %v1897
      %1962 = vst [vmem:[#allocation2 + $0xb0] sm:$0xff] %v1898
      %1963 = vst [vmem:[#allocation2 + $0xb8] sm:$0xff] %v1899
      %1964 = vst [vmem:[#allocation2 + $0xc0] sm:$0xff] %v1900
      %1965 = vst [vmem:[#allocation2 + $0xc8] sm:$0xff] %v1901
      %1966 = vst [vmem:[#allocation2 + $0xd0] sm:$0xff] %v1902
      %1967 = vst [vmem:[#allocation2 + $0xd8] sm:$0xff] %v1903
      %1968 = vst [vmem:[#allocation2 + $0xe0] sm:$0xff] %v1904
      %1969 = vst [vmem:[#allocation2 + $0xe8] sm:$0xff] %v1905
      %1970 = vst [vmem:[#allocation2 + $0xf0] sm:$0xff] %v1906
      %1971 = vst [vmem:[#allocation2 + $0xf8] sm:$0xff] %v1907
      %1972 = vst [vmem:[#allocation2 + $0x100] sm:$0xff] %v1908
      %1973 = vst [vmem:[#allocation2 + $0x108] sm:$0xff] %v1909
      %1974 = vst [vmem:[#allocation2 + $0x110] sm:$0xff] %v1910
      %1975 = vst [vmem:[#allocation2 + $0x118] sm:$0xff] %v1911
      %1976 = vst [vmem:[#allocation2 + $0x120] sm:$0xff] %v1912
      %1977 = vst [vmem:[#allocation2 + $0x128] sm:$0xff] %v1913
      %1978 = vst [vmem:[#allocation2 + $0x130] sm:$0xff] %v1914
      %1979 = vst [vmem:[#allocation2 + $0x138] sm:$0xff] %v1915
      %1980 = vst [vmem:[#allocation2 + $0x140] sm:$0xff] %v1916
      %1981 = vst [vmem:[#allocation2 + $0x148] sm:$0xff] %v1917
      %1982 = vst [vmem:[#allocation2 + $0x150] sm:$0xff] %v1918
      %1983 = vst [vmem:[#allocation2 + $0x158] sm:$0xff] %v1919
      %1984 = vst [vmem:[#allocation2 + $0x160] sm:$0xff] %v1920
      %1985 = vst [vmem:[#allocation2 + $0x168] sm:$0xff] %v1921
      %1986 = vst [vmem:[#allocation2 + $0x170] sm:$0xff] %v1922
      %1987 = vst [vmem:[#allocation2 + $0x178] sm:$0xff] %v1923
      %1988 = vst [vmem:[#allocation2 + $0x180] sm:$0xff] %v1924
      %1989 = vst [vmem:[#allocation2 + $0x188] sm:$0xff] %v1925
      %1990 = vst [vmem:[#allocation2 + $0x190] sm:$0xff] %v1926
      %1991 = vst [vmem:[#allocation2 + $0x198] sm:$0xff] %v1927
      %1992 = vst [vmem:[#allocation2 + $0x1a0] sm:$0xff] %v1928
      %1993 = vst [vmem:[#allocation2 + $0x1a8] sm:$0xff] %v1929
      %1994 = vst [vmem:[#allocation2 + $0x1b0] sm:$0xff] %v1930
      %1995 = vst [vmem:[#allocation2 + $0x1b8] sm:$0xff] %v1931
      %1996 = vst [vmem:[#allocation2 + $0x1c0] sm:$0xff] %v1932
      %1997 = vst [vmem:[#allocation2 + $0x1c8] sm:$0xff] %v1933
      %1998 = vst [vmem:[#allocation2 + $0x1d0] sm:$0xff] %v1934
      %1999 = vst [vmem:[#allocation2 + $0x1d8] sm:$0xff] %v1935
      %2000 = vst [vmem:[#allocation2 + $0x1e0] sm:$0xff] %v1936
      %2001 = vst [vmem:[#allocation2 + $0x1e8] sm:$0xff] %v1937
      %2002 = vst [vmem:[#allocation2 + $0x1f0] sm:$0xff] %v1938
      %2003 = vst [vmem:[#allocation2 + $0x1f8] sm:$0xff] %v1939
    $region22: #{tpu_custom_call.1} parent=1 // loop_footer
      %s1215 = sadd.s32 1, %s1211
    $region23: #{tpu_custom_call.1} parent=1 // loop_footer_branch
      %1210 = sbr.rel target = $region19
    $region24: #{tpu_custom_call.1} parent=1 // loop_exit
      _
    %v2004 = vld [vmem:[#allocation2] sm:$0xff]
    %v2005 = vld [vmem:[#allocation2 + $0x8] sm:$0xff]
    %v2006 = vld [vmem:[#allocation2 + $0x10] sm:$0xff]
    %v2007 = vld [vmem:[#allocation2 + $0x18] sm:$0xff]
    %v2008 = vld [vmem:[#allocation2 + $0x20] sm:$0xff]
    %v2009 = vld [vmem:[#allocation2 + $0x28] sm:$0xff]
    %v2010 = vld [vmem:[#allocation2 + $0x30] sm:$0xff]
    %v2011 = vld [vmem:[#allocation2 + $0x38] sm:$0xff]
    %v2012 = vld [vmem:[#allocation2 + $0x40] sm:$0xff]
    %v2013 = vld [vmem:[#allocation2 + $0x48] sm:$0xff]
    %v2014 = vld [vmem:[#allocation2 + $0x50] sm:$0xff]
    %v2015 = vld [vmem:[#allocation2 + $0x58] sm:$0xff]
    %v2016 = vld [vmem:[#allocation2 + $0x60] sm:$0xff]
    %v2017 = vld [vmem:[#allocation2 + $0x68] sm:$0xff]
    %v2018 = vld [vmem:[#allocation2 + $0x70] sm:$0xff]
    %v2019 = vld [vmem:[#allocation2 + $0x78] sm:$0xff]
    %v2020 = vld [vmem:[#allocation2 + $0x80] sm:$0xff]
    %v2021 = vld [vmem:[#allocation2 + $0x88] sm:$0xff]
    %v2022 = vld [vmem:[#allocation2 + $0x90] sm:$0xff]
    %v2023 = vld [vmem:[#allocation2 + $0x98] sm:$0xff]
    %v2024 = vld [vmem:[#allocation2 + $0xa0] sm:$0xff]
    %v2025 = vld [vmem:[#allocation2 + $0xa8] sm:$0xff]
    %v2026 = vld [vmem:[#allocation2 + $0xb0] sm:$0xff]
    %v2027 = vld [vmem:[#allocation2 + $0xb8] sm:$0xff]
    %v2028 = vld [vmem:[#allocation2 + $0xc0] sm:$0xff]
    %v2029 = vld [vmem:[#allocation2 + $0xc8] sm:$0xff]
    %v2030 = vld [vmem:[#allocation2 + $0xd0] sm:$0xff]
    %v2031 = vld [vmem:[#allocation2 + $0xd8] sm:$0xff]
    %v2032 = vld [vmem:[#allocation2 + $0xe0] sm:$0xff]
    %v2033 = vld [vmem:[#allocation2 + $0xe8] sm:$0xff]
    %v2034 = vld [vmem:[#allocation2 + $0xf0] sm:$0xff]
    %v2035 = vld [vmem:[#allocation2 + $0xf8] sm:$0xff]
    %v2036 = vld [vmem:[#allocation2 + $0x100] sm:$0xff]
    %v2037 = vld [vmem:[#allocation2 + $0x108] sm:$0xff]
    %v2038 = vld [vmem:[#allocation2 + $0x110] sm:$0xff]
    %v2039 = vld [vmem:[#allocation2 + $0x118] sm:$0xff]
    %v2040 = vld [vmem:[#allocation2 + $0x120] sm:$0xff]
    %v2041 = vld [vmem:[#allocation2 + $0x128] sm:$0xff]
    %v2042 = vld [vmem:[#allocation2 + $0x130] sm:$0xff]
    %v2043 = vld [vmem:[#allocation2 + $0x138] sm:$0xff]
    %v2044 = vld [vmem:[#allocation2 + $0x140] sm:$0xff]
    %v2045 = vld [vmem:[#allocation2 + $0x148] sm:$0xff]
    %v2046 = vld [vmem:[#allocation2 + $0x150] sm:$0xff]
    %v2047 = vld [vmem:[#allocation2 + $0x158] sm:$0xff]
    %v2048 = vld [vmem:[#allocation2 + $0x160] sm:$0xff]
    %v2049 = vld [vmem:[#allocation2 + $0x168] sm:$0xff]
    %v2050 = vld [vmem:[#allocation2 + $0x170] sm:$0xff]
    %v2051 = vld [vmem:[#allocation2 + $0x178] sm:$0xff]
    %v2052 = vld [vmem:[#allocation2 + $0x180] sm:$0xff]
    %v2053 = vld [vmem:[#allocation2 + $0x188] sm:$0xff]
    %v2054 = vld [vmem:[#allocation2 + $0x190] sm:$0xff]
    %v2055 = vld [vmem:[#allocation2 + $0x198] sm:$0xff]
    %v2056 = vld [vmem:[#allocation2 + $0x1a0] sm:$0xff]
    %v2057 = vld [vmem:[#allocation2 + $0x1a8] sm:$0xff]
    %v2058 = vld [vmem:[#allocation2 + $0x1b0] sm:$0xff]
    %v2059 = vld [vmem:[#allocation2 + $0x1b8] sm:$0xff]
    %v2060 = vld [vmem:[#allocation2 + $0x1c0] sm:$0xff]
    %v2061 = vld [vmem:[#allocation2 + $0x1c8] sm:$0xff]
    %v2062 = vld [vmem:[#allocation2 + $0x1d0] sm:$0xff]
    %v2063 = vld [vmem:[#allocation2 + $0x1d8] sm:$0xff]
    %v2064 = vld [vmem:[#allocation2 + $0x1e0] sm:$0xff]
    %v2065 = vld [vmem:[#allocation2 + $0x1e8] sm:$0xff]
    %v2066 = vld [vmem:[#allocation2 + $0x1f0] sm:$0xff]
    %v2067 = vld [vmem:[#allocation2 + $0x1f8] sm:$0xff]
    %2068 = vmatprep.subr.mxu0 %v2005
    %2069 = vmatpush1.msra.mxu0 %v2004
    %2070 = vmatprep.subr.mxu0 %v2007
    %2071 = vmatpush1.msra.mxu0 %v2006
    %2072 = vmatprep.subr.mxu0 %v2009
    %2073 = vmatpush1.msra.mxu0 %v2008
    %2074 = vmatprep.subr.mxu0 %v2011
    %2075 = vmatpush1.msra.mxu0 %v2010
    %2076 = vmatprep.subr.mxu0 %v2013
    %2077 = vmatpush1.msra.mxu0 %v2012
    %2078 = vmatprep.subr.mxu0 %v2015
    %2079 = vmatpush1.msra.mxu0 %v2014
    %2080 = vmatprep.subr.mxu0 %v2017
    %2081 = vmatpush1.msra.mxu0 %v2016
    %2082 = vmatprep.subr.mxu0 %v2019
    %2083 = vmatpush1.msra.mxu0 %v2018
    %2084 = vmatprep.subr.mxu0 %v2021
    %2085 = vmatpush1.msra.mxu0 %v2020
    %2086 = vmatprep.subr.mxu0 %v2023
    %2087 = vmatpush1.msra.mxu0 %v2022
    %2088 = vmatprep.subr.mxu0 %v2025
    %2089 = vmatpush1.msra.mxu0 %v2024
    %2090 = vmatprep.subr.mxu0 %v2027
    %2091 = vmatpush1.msra.mxu0 %v2026
    %2092 = vmatprep.subr.mxu0 %v2029
    %2093 = vmatpush1.msra.mxu0 %v2028
    %2094 = vmatprep.subr.mxu0 %v2031
    %2095 = vmatpush1.msra.mxu0 %v2030
    %2096 = vmatprep.subr.mxu0 %v2033
    %2097 = vmatpush1.msra.mxu0 %v2032
    %2098 = vmatprep.subr.mxu0 %v2035
    %2099 = vmatpush1.msra.mxu0 %v2034
    %2100 = vmatprep.subr.mxu0 %v2037
    %2101 = vmatpush1.msra.mxu0 %v2036
    %2102 = vmatprep.subr.mxu0 %v2039
    %2103 = vmatpush1.msra.mxu0 %v2038
    %2104 = vmatprep.subr.mxu0 %v2041
    %2105 = vmatpush1.msra.mxu0 %v2040
    %2106 = vmatprep.subr.mxu0 %v2043
    %2107 = vmatpush1.msra.mxu0 %v2042
    %2108 = vmatprep.subr.mxu0 %v2045
    %2109 = vmatpush1.msra.mxu0 %v2044
    %2110 = vmatprep.subr.mxu0 %v2047
    %2111 = vmatpush1.msra.mxu0 %v2046
    %2112 = vmatprep.subr.mxu0 %v2049
    %2113 = vmatpush1.msra.mxu0 %v2048
    %2114 = vmatprep.subr.mxu0 %v2051
    %2115 = vmatpush1.msra.mxu0 %v2050
    %2116 = vmatprep.subr.mxu0 %v2053
    %2117 = vmatpush1.msra.mxu0 %v2052
    %2118 = vmatprep.subr.mxu0 %v2055
    %2119 = vmatpush1.msra.mxu0 %v2054
    %2120 = vmatprep.subr.mxu0 %v2057
    %2121 = vmatpush1.msra.mxu0 %v2056
    %2122 = vmatprep.subr.mxu0 %v2059
    %2123 = vmatpush1.msra.mxu0 %v2058
    %2124 = vmatprep.subr.mxu0 %v2061
    %2125 = vmatpush1.msra.mxu0 %v2060
    %2126 = vmatprep.subr.mxu0 %v2063
    %2127 = vmatpush1.msra.mxu0 %v2062
    %2128 = vmatprep.subr.mxu0 %v2065
    %2129 = vmatpush1.msra.mxu0 %v2064
    %2130 = vmatprep.subr.mxu0 %v2067
    %2131 = vmatpush1.msra.mxu0 %v2066
    %2132 = vmatprep.mubr.f32.mxu0 1.0
    %2133 = vmatmul.mubr.f32.gmra.mrb[0].mxu0 1.0
    %v2134 = vpop.f32.mrb[0].mxu0
    %v2135 = vadd.f32 0.0, %v2134
    %v2136 = vpop.f32.mrb[0].mxu0
    %v2137 = vadd.f32 0.0, %v2136
    %2138 = vdwg.mxu0
    %v2139 = vmax.f32 %v2135, 1e-30
    %v2140 = vmax.f32 %v2137, 1e-30
    %v2141 = vlaneseq
    %v2142 = vshrl.u32 %v2141, 7
    %v2143 = vsub.s32 0, %v2142
    %v2144 = vrot.slane %v2139, %v2143
    %v2145 = vlaneseq
    %v2146 = vshrl.u32 %v2145, 7
    %v2147 = vsub.s32 0, %v2146
    %v2148 = vrot.slane %v2140, %v2147
    %v2149 = vrcp.pop %v2144
    %v2150 = vmul.f32 %v2004, %v2149
    %v2151 = vrcp.pop %v2148
    %v2152 = vmul.f32 %v2005, %v2151
    %v2153 = vmul.f32 %v2006, %v2149
    %v2154 = vmul.f32 %v2007, %v2151
    %v2155 = vmul.f32 %v2008, %v2149
    %v2156 = vmul.f32 %v2009, %v2151
    %v2157 = vmul.f32 %v2010, %v2149
    %v2158 = vmul.f32 %v2011, %v2151
    %v2159 = vmul.f32 %v2012, %v2149
    %v2160 = vmul.f32 %v2013, %v2151
    %v2161 = vmul.f32 %v2014, %v2149
    %v2162 = vmul.f32 %v2015, %v2151
    %v2163 = vmul.f32 %v2016, %v2149
    %v2164 = vmul.f32 %v2017, %v2151
    %v2165 = vmul.f32 %v2018, %v2149
    %v2166 = vmul.f32 %v2019, %v2151
    %v2167 = vmul.f32 %v2020, %v2149
    %v2168 = vmul.f32 %v2021, %v2151
    %v2169 = vmul.f32 %v2022, %v2149
    %v2170 = vmul.f32 %v2023, %v2151
    %v2171 = vmul.f32 %v2024, %v2149
    %v2172 = vmul.f32 %v2025, %v2151
    %v2173 = vmul.f32 %v2026, %v2149
    %v2174 = vmul.f32 %v2027, %v2151
    %v2175 = vmul.f32 %v2028, %v2149
    %v2176 = vmul.f32 %v2029, %v2151
    %v2177 = vmul.f32 %v2030, %v2149
    %v2178 = vmul.f32 %v2031, %v2151
    %v2179 = vmul.f32 %v2032, %v2149
    %v2180 = vmul.f32 %v2033, %v2151
    %v2181 = vmul.f32 %v2034, %v2149
    %v2182 = vmul.f32 %v2035, %v2151
    %v2183 = vmul.f32 %v2036, %v2149
    %v2184 = vmul.f32 %v2037, %v2151
    %v2185 = vmul.f32 %v2038, %v2149
    %v2186 = vmul.f32 %v2039, %v2151
    %v2187 = vmul.f32 %v2040, %v2149
    %v2188 = vmul.f32 %v2041, %v2151
    %v2189 = vmul.f32 %v2042, %v2149
    %v2190 = vmul.f32 %v2043, %v2151
    %v2191 = vmul.f32 %v2044, %v2149
    %v2192 = vmul.f32 %v2045, %v2151
    %v2193 = vmul.f32 %v2046, %v2149
    %v2194 = vmul.f32 %v2047, %v2151
    %v2195 = vmul.f32 %v2048, %v2149
    %v2196 = vmul.f32 %v2049, %v2151
    %v2197 = vmul.f32 %v2050, %v2149
    %v2198 = vmul.f32 %v2051, %v2151
    %v2199 = vmul.f32 %v2052, %v2149
    %v2200 = vmul.f32 %v2053, %v2151
    %v2201 = vmul.f32 %v2054, %v2149
    %v2202 = vmul.f32 %v2055, %v2151
    %v2203 = vmul.f32 %v2056, %v2149
    %v2204 = vmul.f32 %v2057, %v2151
    %v2205 = vmul.f32 %v2058, %v2149
    %v2206 = vmul.f32 %v2059, %v2151
    %v2207 = vmul.f32 %v2060, %v2149
    %v2208 = vmul.f32 %v2061, %v2151
    %v2209 = vmul.f32 %v2062, %v2149
    %v2210 = vmul.f32 %v2063, %v2151
    %v2211 = vmul.f32 %v2064, %v2149
    %v2212 = vmul.f32 %v2065, %v2151
    %v2213 = vmul.f32 %v2066, %v2149
    %v2214 = vmul.f32 %v2067, %v2151
    %2215 = vmatprep.subr.mxu0 0.0
    %2216 = vmatpush1.msra.mxu0 1.0
    %2217 = vmatprep.subr.mxu0 0.0
    %2218 = vmatpush1.msra.mxu0 1.0
    %2219 = vmatprep.subr.mxu0 0.0
    %2220 = vmatpush1.msra.mxu0 1.0
    %2221 = vmatprep.subr.mxu0 0.0
    %2222 = vmatpush1.msra.mxu0 1.0
    %2223 = vmatprep.subr.mxu0 0.0
    %2224 = vmatpush1.msra.mxu0 1.0
    %2225 = vmatprep.subr.mxu0 0.0
    %2226 = vmatpush1.msra.mxu0 1.0
    %2227 = vmatprep.subr.mxu0 0.0
    %2228 = vmatpush1.msra.mxu0 1.0
    %2229 = vmatprep.subr.mxu0 0.0
    %2230 = vmatpush1.msra.mxu0 1.0
    %2231 = vmatprep.subr.mxu0 0.0
    %2232 = vmatpush1.msra.mxu0 1.0
    %2233 = vmatprep.subr.mxu0 0.0
    %2234 = vmatpush1.msra.mxu0 1.0
    %2235 = vmatprep.subr.mxu0 0.0
    %2236 = vmatpush1.msra.mxu0 1.0
    %2237 = vmatprep.subr.mxu0 0.0
    %2238 = vmatpush1.msra.mxu0 1.0
    %2239 = vmatprep.subr.mxu0 0.0
    %2240 = vmatpush1.msra.mxu0 1.0
    %2241 = vmatprep.subr.mxu0 0.0
    %2242 = vmatpush1.msra.mxu0 1.0
    %2243 = vmatprep.subr.mxu0 0.0
    %2244 = vmatpush1.msra.mxu0 1.0
    %2245 = vmatprep.subr.mxu0 0.0
    %2246 = vmatpush1.msra.mxu0 1.0
    %2247 = vmatprep.subr.mxu0 0.0
    %2248 = vmatpush1.msra.mxu0 1.0
    %2249 = vmatprep.subr.mxu0 0.0
    %2250 = vmatpush1.msra.mxu0 1.0
    %2251 = vmatprep.subr.mxu0 0.0
    %2252 = vmatpush1.msra.mxu0 1.0
    %2253 = vmatprep.subr.mxu0 0.0
    %2254 = vmatpush1.msra.mxu0 1.0
    %2255 = vmatprep.subr.mxu0 0.0
    %2256 = vmatpush1.msra.mxu0 1.0
    %2257 = vmatprep.subr.mxu0 0.0
    %2258 = vmatpush1.msra.mxu0 1.0
    %2259 = vmatprep.subr.mxu0 0.0
    %2260 = vmatpush1.msra.mxu0 1.0
    %2261 = vmatprep.subr.mxu0 0.0
    %2262 = vmatpush1.msra.mxu0 1.0
    %2263 = vmatprep.subr.mxu0 0.0
    %2264 = vmatpush1.msra.mxu0 1.0
    %2265 = vmatprep.subr.mxu0 0.0
    %2266 = vmatpush1.msra.mxu0 1.0
    %2267 = vmatprep.subr.mxu0 0.0
    %2268 = vmatpush1.msra.mxu0 1.0
    %2269 = vmatprep.subr.mxu0 0.0
    %2270 = vmatpush1.msra.mxu0 1.0
    %2271 = vmatprep.subr.mxu0 0.0
    %2272 = vmatpush1.msra.mxu0 1.0
    %2273 = vmatprep.subr.mxu0 0.0
    %2274 = vmatpush1.msra.mxu0 1.0
    %2275 = vmatprep.subr.mxu0 0.0
    %2276 = vmatpush1.msra.mxu0 1.0
    %2277 = vmatprep.subr.mxu0 0.0
    %2278 = vmatpush1.msra.mxu0 1.0
    %2279 = vmatprep.mubr.f32.mxu0 %v2152
    %2280 = vmatmul.mubr.f32.gmra.mrb[0].mxu0 %v2150
    %v2281 = vpop.f32.mrb[0].mxu0
    %v2282 = vadd.f32 0.0, %v2281
    %v2283 = vpop.f32.mrb[0].mxu0
    %2284 = vmatprep.mubr.f32.mxu0 %v2154
    %2285 = vmatmul.mubr.f32.gmra.mrb[0].mxu0 %v2153
    %v2286 = vpop.f32.mrb[0].mxu0
    %v2287 = vadd.f32 0.0, %v2286
    %v2288 = vpop.f32.mrb[0].mxu0
    %2289 = vmatprep.mubr.f32.mxu0 %v2156
    %2290 = vmatmul.mubr.f32.gmra.mrb[0].mxu0 %v2155
    %v2291 = vpop.f32.mrb[0].mxu0
    %v2292 = vadd.f32 0.0, %v2291
    %v2293 = vpop.f32.mrb[0].mxu0
    %2294 = vmatprep.mubr.f32.mxu0 %v2158
    %2295 = vmatmul.mubr.f32.gmra.mrb[0].mxu0 %v2157
    %v2296 = vpop.f32.mrb[0].mxu0
    %v2297 = vadd.f32 0.0, %v2296
    %v2298 = vpop.f32.mrb[0].mxu0
    %2299 = vmatprep.mubr.f32.mxu0 %v2160
    %2300 = vmatmul.mubr.f32.gmra.mrb[0].mxu0 %v2159
    %v2301 = vpop.f32.mrb[0].mxu0
    %v2302 = vadd.f32 0.0, %v2301
    %v2303 = vpop.f32.mrb[0].mxu0
    %2304 = vmatprep.mubr.f32.mxu0 %v2162
    %2305 = vmatmul.mubr.f32.gmra.mrb[0].mxu0 %v2161
    %v2306 = vpop.f32.mrb[0].mxu0
    %v2307 = vadd.f32 0.0, %v2306
    %v2308 = vpop.f32.mrb[0].mxu0
    %2309 = vmatprep.mubr.f32.mxu0 %v2164
    %2310 = vmatmul.mubr.f32.gmra.mrb[0].mxu0 %v2163
    %v2311 = vpop.f32.mrb[0].mxu0
    %v2312 = vadd.f32 0.0, %v2311
    %v2313 = vpop.f32.mrb[0].mxu0
    %2314 = vmatprep.mubr.f32.mxu0 %v2166
    %2315 = vmatmul.mubr.f32.gmra.mrb[0].mxu0 %v2165
    %v2316 = vpop.f32.mrb[0].mxu0
    %v2317 = vadd.f32 0.0, %v2316
    %v2318 = vpop.f32.mrb[0].mxu0
    %2319 = vmatprep.mubr.f32.mxu0 %v2168
    %2320 = vmatmul.mubr.f32.gmra.mrb[0].mxu0 %v2167
    %v2321 = vpop.f32.mrb[0].mxu0
    %v2322 = vadd.f32 0.0, %v2321
    %v2323 = vpop.f32.mrb[0].mxu0
    %2324 = vmatprep.mubr.f32.mxu0 %v2170
    %2325 = vmatmul.mubr.f32.gmra.mrb[0].mxu0 %v2169
    %v2326 = vpop.f32.mrb[0].mxu0
    %v2327 = vadd.f32 0.0, %v2326
    %v2328 = vpop.f32.mrb[0].mxu0
    %2329 = vmatprep.mubr.f32.mxu0 %v2172
    %2330 = vmatmul.mubr.f32.gmra.mrb[0].mxu0 %v2171
    %v2331 = vpop.f32.mrb[0].mxu0
    %v2332 = vadd.f32 0.0, %v2331
    %v2333 = vpop.f32.mrb[0].mxu0
    %2334 = vmatprep.mubr.f32.mxu0 %v2174
    %2335 = vmatmul.mubr.f32.gmra.mrb[0].mxu0 %v2173
    %v2336 = vpop.f32.mrb[0].mxu0
    %v2337 = vadd.f32 0.0, %v2336
    %v2338 = vpop.f32.mrb[0].mxu0
    %2339 = vmatprep.mubr.f32.mxu0 %v2176
    %2340 = vmatmul.mubr.f32.gmra.mrb[0].mxu0 %v2175
    %v2341 = vpop.f32.mrb[0].mxu0
    %v2342 = vadd.f32 0.0, %v2341
    %v2343 = vpop.f32.mrb[0].mxu0
    %2344 = vmatprep.mubr.f32.mxu0 %v2178
    %2345 = vmatmul.mubr.f32.gmra.mrb[0].mxu0 %v2177
    %v2346 = vpop.f32.mrb[0].mxu0
    %v2347 = vadd.f32 0.0, %v2346
    %v2348 = vpop.f32.mrb[0].mxu0
    %2349 = vmatprep.mubr.f32.mxu0 %v2180
    %2350 = vmatmul.mubr.f32.gmra.mrb[0].mxu0 %v2179
    %v2351 = vpop.f32.mrb[0].mxu0
    %v2352 = vadd.f32 0.0, %v2351
    %v2353 = vpop.f32.mrb[0].mxu0
    %2354 = vmatprep.mubr.f32.mxu0 %v2182
    %2355 = vmatmul.mubr.f32.gmra.mrb[0].mxu0 %v2181
    %v2356 = vpop.f32.mrb[0].mxu0
    %v2357 = vadd.f32 0.0, %v2356
    %v2358 = vpop.f32.mrb[0].mxu0
    %2359 = vmatprep.mubr.f32.mxu0 %v2184
    %2360 = vmatmul.mubr.f32.gmra.mrb[0].mxu0 %v2183
    %v2361 = vpop.f32.mrb[0].mxu0
    %v2362 = vadd.f32 0.0, %v2361
    %v2363 = vpop.f32.mrb[0].mxu0
    %2364 = vmatprep.mubr.f32.mxu0 %v2186
    %2365 = vmatmul.mubr.f32.gmra.mrb[0].mxu0 %v2185
    %v2366 = vpop.f32.mrb[0].mxu0
    %v2367 = vadd.f32 0.0, %v2366
    %v2368 = vpop.f32.mrb[0].mxu0
    %2369 = vmatprep.mubr.f32.mxu0 %v2188
    %2370 = vmatmul.mubr.f32.gmra.mrb[0].mxu0 %v2187
    %v2371 = vpop.f32.mrb[0].mxu0
    %v2372 = vadd.f32 0.0, %v2371
    %v2373 = vpop.f32.mrb[0].mxu0
    %2374 = vmatprep.mubr.f32.mxu0 %v2190
    %2375 = vmatmul.mubr.f32.gmra.mrb[0].mxu0 %v2189
    %v2376 = vpop.f32.mrb[0].mxu0
    %v2377 = vadd.f32 0.0, %v2376
    %v2378 = vpop.f32.mrb[0].mxu0
    %2379 = vmatprep.mubr.f32.mxu0 %v2192
    %2380 = vmatmul.mubr.f32.gmra.mrb[0].mxu0 %v2191
    %v2381 = vpop.f32.mrb[0].mxu0
    %v2382 = vadd.f32 0.0, %v2381
    %v2383 = vpop.f32.mrb[0].mxu0
    %2384 = vmatprep.mubr.f32.mxu0 %v2194
    %2385 = vmatmul.mubr.f32.gmra.mrb[0].mxu0 %v2193
    %v2386 = vpop.f32.mrb[0].mxu0
    %v2387 = vadd.f32 0.0, %v2386
    %v2388 = vpop.f32.mrb[0].mxu0
    %2389 = vmatprep.mubr.f32.mxu0 %v2196
    %2390 = vmatmul.mubr.f32.gmra.mrb[0].mxu0 %v2195
    %v2391 = vpop.f32.mrb[0].mxu0
    %v2392 = vadd.f32 0.0, %v2391
    %v2393 = vpop.f32.mrb[0].mxu0
    %2394 = vmatprep.mubr.f32.mxu0 %v2198
    %2395 = vmatmul.mubr.f32.gmra.mrb[0].mxu0 %v2197
    %v2396 = vpop.f32.mrb[0].mxu0
    %v2397 = vadd.f32 0.0, %v2396
    %v2398 = vpop.f32.mrb[0].mxu0
    %2399 = vmatprep.mubr.f32.mxu0 %v2200
    %2400 = vmatmul.mubr.f32.gmra.mrb[0].mxu0 %v2199
    %v2401 = vpop.f32.mrb[0].mxu0
    %v2402 = vadd.f32 0.0, %v2401
    %v2403 = vpop.f32.mrb[0].mxu0
    %2404 = vmatprep.mubr.f32.mxu0 %v2202
    %2405 = vmatmul.mubr.f32.gmra.mrb[0].mxu0 %v2201
    %v2406 = vpop.f32.mrb[0].mxu0
    %v2407 = vadd.f32 0.0, %v2406
    %v2408 = vpop.f32.mrb[0].mxu0
    %2409 = vmatprep.mubr.f32.mxu0 %v2204
    %2410 = vmatmul.mubr.f32.gmra.mrb[0].mxu0 %v2203
    %v2411 = vpop.f32.mrb[0].mxu0
    %v2412 = vadd.f32 0.0, %v2411
    %v2413 = vpop.f32.mrb[0].mxu0
    %2414 = vmatprep.mubr.f32.mxu0 %v2206
    %2415 = vmatmul.mubr.f32.gmra.mrb[0].mxu0 %v2205
    %v2416 = vpop.f32.mrb[0].mxu0
    %v2417 = vadd.f32 0.0, %v2416
    %v2418 = vpop.f32.mrb[0].mxu0
    %2419 = vmatprep.mubr.f32.mxu0 %v2208
    %2420 = vmatmul.mubr.f32.gmra.mrb[0].mxu0 %v2207
    %v2421 = vpop.f32.mrb[0].mxu0
    %v2422 = vadd.f32 0.0, %v2421
    %v2423 = vpop.f32.mrb[0].mxu0
    %2424 = vmatprep.mubr.f32.mxu0 %v2210
    %2425 = vmatmul.mubr.f32.gmra.mrb[0].mxu0 %v2209
    %v2426 = vpop.f32.mrb[0].mxu0
    %v2427 = vadd.f32 0.0, %v2426
    %v2428 = vpop.f32.mrb[0].mxu0
    %2429 = vmatprep.mubr.f32.mxu0 %v2212
    %2430 = vmatmul.mubr.f32.gmra.mrb[0].mxu0 %v2211
    %v2431 = vpop.f32.mrb[0].mxu0
    %v2432 = vadd.f32 0.0, %v2431
    %v2433 = vpop.f32.mrb[0].mxu0
    %2434 = vmatprep.mubr.f32.mxu0 %v2214
    %2435 = vmatmul.mubr.f32.gmra.mrb[0].mxu0 %v2213
    %v2436 = vpop.f32.mrb[0].mxu0
    %v2437 = vadd.f32 0.0, %v2436
    %v2438 = vpop.f32.mrb[0].mxu0
    %2439 = vdwg.mxu0
    %v2440 = vmax.f32 %v2282, 1e-30
    %v2441 = vmax.f32 %v2287, 1e-30
    %v2442 = vmax.f32 %v2292, 1e-30
    %v2443 = vmax.f32 %v2297, 1e-30
    %v2444 = vmax.f32 %v2302, 1e-30
    %v2445 = vmax.f32 %v2307, 1e-30
    %v2446 = vmax.f32 %v2312, 1e-30
    %v2447 = vmax.f32 %v2317, 1e-30
    %v2448 = vmax.f32 %v2322, 1e-30
    %v2449 = vmax.f32 %v2327, 1e-30
    %v2450 = vmax.f32 %v2332, 1e-30
    %v2451 = vmax.f32 %v2337, 1e-30
    %v2452 = vmax.f32 %v2342, 1e-30
    %v2453 = vmax.f32 %v2347, 1e-30
    %v2454 = vmax.f32 %v2352, 1e-30
    %v2455 = vmax.f32 %v2357, 1e-30
    %v2456 = vmax.f32 %v2362, 1e-30
    %v2457 = vmax.f32 %v2367, 1e-30
    %v2458 = vmax.f32 %v2372, 1e-30
    %v2459 = vmax.f32 %v2377, 1e-30
    %v2460 = vmax.f32 %v2382, 1e-30
    %v2461 = vmax.f32 %v2387, 1e-30
    %v2462 = vmax.f32 %v2392, 1e-30
    %v2463 = vmax.f32 %v2397, 1e-30
    %v2464 = vmax.f32 %v2402, 1e-30
    %v2465 = vmax.f32 %v2407, 1e-30
    %v2466 = vmax.f32 %v2412, 1e-30
    %v2467 = vmax.f32 %v2417, 1e-30
    %v2468 = vmax.f32 %v2422, 1e-30
    %v2469 = vmax.f32 %v2427, 1e-30
    %v2470 = vmax.f32 %v2432, 1e-30
    %v2471 = vmax.f32 %v2437, 1e-30
    %2473 = vset.pattern.permute.xlu0 0
    %2474 = vperm.xlu0 %2473, %v2440
    %v2475 = vpop.permute.xlu0 %2474
    %2478 = vset.pattern.permute.xlu0 0
    %2479 = vperm.xlu0 %2478, %v2441
    %v2480 = vpop.permute.xlu0 %2479
    %2483 = vset.pattern.permute.xlu0 0
    %2484 = vperm.xlu0 %2483, %v2442
    %v2485 = vpop.permute.xlu0 %2484
    %2488 = vset.pattern.permute.xlu0 0
    %2489 = vperm.xlu0 %2488, %v2443
    %v2490 = vpop.permute.xlu0 %2489
    %2493 = vset.pattern.permute.xlu0 0
    %2494 = vperm.xlu0 %2493, %v2444
    %v2495 = vpop.permute.xlu0 %2494
    %2498 = vset.pattern.permute.xlu0 0
    %2499 = vperm.xlu0 %2498, %v2445
    %v2500 = vpop.permute.xlu0 %2499
    %2503 = vset.pattern.permute.xlu0 0
    %2504 = vperm.xlu0 %2503, %v2446
    %v2505 = vpop.permute.xlu0 %2504
    %2508 = vset.pattern.permute.xlu0 0
    %2509 = vperm.xlu0 %2508, %v2447
    %v2510 = vpop.permute.xlu0 %2509
    %2513 = vset.pattern.permute.xlu0 0
    %2514 = vperm.xlu0 %2513, %v2448
    %v2515 = vpop.permute.xlu0 %2514
    %2518 = vset.pattern.permute.xlu0 0
    %2519 = vperm.xlu0 %2518, %v2449
    %v2520 = vpop.permute.xlu0 %2519
    %2523 = vset.pattern.permute.xlu0 0
    %2524 = vperm.xlu0 %2523, %v2450
    %v2525 = vpop.permute.xlu0 %2524
    %2528 = vset.pattern.permute.xlu0 0
    %2529 = vperm.xlu0 %2528, %v2451
    %v2530 = vpop.permute.xlu0 %2529
    %2533 = vset.pattern.permute.xlu0 0
    %2534 = vperm.xlu0 %2533, %v2452
    %v2535 = vpop.permute.xlu0 %2534
    %2538 = vset.pattern.permute.xlu0 0
    %2539 = vperm.xlu0 %2538, %v2453
    %v2540 = vpop.permute.xlu0 %2539
    %2543 = vset.pattern.permute.xlu0 0
    %2544 = vperm.xlu0 %2543, %v2454
    %v2545 = vpop.permute.xlu0 %2544
    %2548 = vset.pattern.permute.xlu0 0
    %2549 = vperm.xlu0 %2548, %v2455
    %v2550 = vpop.permute.xlu0 %2549
    %2553 = vset.pattern.permute.xlu0 0
    %2554 = vperm.xlu0 %2553, %v2456
    %v2555 = vpop.permute.xlu0 %2554
    %2558 = vset.pattern.permute.xlu0 0
    %2559 = vperm.xlu0 %2558, %v2457
    %v2560 = vpop.permute.xlu0 %2559
    %2563 = vset.pattern.permute.xlu0 0
    %2564 = vperm.xlu0 %2563, %v2458
    %v2565 = vpop.permute.xlu0 %2564
    %2568 = vset.pattern.permute.xlu0 0
    %2569 = vperm.xlu0 %2568, %v2459
    %v2570 = vpop.permute.xlu0 %2569
    %2573 = vset.pattern.permute.xlu0 0
    %2574 = vperm.xlu0 %2573, %v2460
    %v2575 = vpop.permute.xlu0 %2574
    %2578 = vset.pattern.permute.xlu0 0
    %2579 = vperm.xlu0 %2578, %v2461
    %v2580 = vpop.permute.xlu0 %2579
    %2583 = vset.pattern.permute.xlu0 0
    %2584 = vperm.xlu0 %2583, %v2462
    %v2585 = vpop.permute.xlu0 %2584
    %2588 = vset.pattern.permute.xlu0 0
    %2589 = vperm.xlu0 %2588, %v2463
    %v2590 = vpop.permute.xlu0 %2589
    %2593 = vset.pattern.permute.xlu0 0
    %2594 = vperm.xlu0 %2593, %v2464
    %v2595 = vpop.permute.xlu0 %2594
    %2598 = vset.pattern.permute.xlu0 0
    %2599 = vperm.xlu0 %2598, %v2465
    %v2600 = vpop.permute.xlu0 %2599
    %2603 = vset.pattern.permute.xlu0 0
    %2604 = vperm.xlu0 %2603, %v2466
    %v2605 = vpop.permute.xlu0 %2604
    %2608 = vset.pattern.permute.xlu0 0
    %2609 = vperm.xlu0 %2608, %v2467
    %v2610 = vpop.permute.xlu0 %2609
    %2613 = vset.pattern.permute.xlu0 0
    %2614 = vperm.xlu0 %2613, %v2468
    %v2615 = vpop.permute.xlu0 %2614
    %2618 = vset.pattern.permute.xlu0 0
    %2619 = vperm.xlu0 %2618, %v2469
    %v2620 = vpop.permute.xlu0 %2619
    %2623 = vset.pattern.permute.xlu0 0
    %2624 = vperm.xlu0 %2623, %v2470
    %v2625 = vpop.permute.xlu0 %2624
    %2628 = vset.pattern.permute.xlu0 0
    %2629 = vperm.xlu0 %2628, %v2471
    %v2630 = vpop.permute.xlu0 %2629
    %v2632 = vrcp.pop %v2475
    %v2633 = vmul.f32 %v2150, %v2632
    %v2634 = vmul.f32 %v2152, %v2632
    %v2635 = vrcp.pop %v2480
    %v2636 = vmul.f32 %v2153, %v2635
    %v2637 = vmul.f32 %v2154, %v2635
    %v2638 = vrcp.pop %v2485
    %v2639 = vmul.f32 %v2155, %v2638
    %v2640 = vmul.f32 %v2156, %v2638
    %v2641 = vrcp.pop %v2490
    %v2642 = vmul.f32 %v2157, %v2641
    %v2643 = vmul.f32 %v2158, %v2641
    %v2644 = vrcp.pop %v2495
    %v2645 = vmul.f32 %v2159, %v2644
    %v2646 = vmul.f32 %v2160, %v2644
    %v2647 = vrcp.pop %v2500
    %v2648 = vmul.f32 %v2161, %v2647
    %v2649 = vmul.f32 %v2162, %v2647
    %v2650 = vrcp.pop %v2505
    %v2651 = vmul.f32 %v2163, %v2650
    %v2652 = vmul.f32 %v2164, %v2650
    %v2653 = vrcp.pop %v2510
    %v2654 = vmul.f32 %v2165, %v2653
    %v2655 = vmul.f32 %v2166, %v2653
    %v2656 = vrcp.pop %v2515
    %v2657 = vmul.f32 %v2167, %v2656
    %v2658 = vmul.f32 %v2168, %v2656
    %v2659 = vrcp.pop %v2520
    %v2660 = vmul.f32 %v2169, %v2659
    %v2661 = vmul.f32 %v2170, %v2659
    %v2662 = vrcp.pop %v2525
    %v2663 = vmul.f32 %v2171, %v2662
    %v2664 = vmul.f32 %v2172, %v2662
    %v2665 = vrcp.pop %v2530
    %v2666 = vmul.f32 %v2173, %v2665
    %v2667 = vmul.f32 %v2174, %v2665
    %v2668 = vrcp.pop %v2535
    %v2669 = vmul.f32 %v2175, %v2668
    %v2670 = vmul.f32 %v2176, %v2668
    %v2671 = vrcp.pop %v2540
    %v2672 = vmul.f32 %v2177, %v2671
    %v2673 = vmul.f32 %v2178, %v2671
    %v2674 = vrcp.pop %v2545
    %v2675 = vmul.f32 %v2179, %v2674
    %v2676 = vmul.f32 %v2180, %v2674
    %v2677 = vrcp.pop %v2550
    %v2678 = vmul.f32 %v2181, %v2677
    %v2679 = vmul.f32 %v2182, %v2677
    %v2680 = vrcp.pop %v2555
    %v2681 = vmul.f32 %v2183, %v2680
    %v2682 = vmul.f32 %v2184, %v2680
    %v2683 = vrcp.pop %v2560
    %v2684 = vmul.f32 %v2185, %v2683
    %v2685 = vmul.f32 %v2186, %v2683
    %v2686 = vrcp.pop %v2565
    %v2687 = vmul.f32 %v2187, %v2686
    %v2688 = vmul.f32 %v2188, %v2686
    %v2689 = vrcp.pop %v2570
    %v2690 = vmul.f32 %v2189, %v2689
    %v2691 = vmul.f32 %v2190, %v2689
    %v2692 = vrcp.pop %v2575
    %v2693 = vmul.f32 %v2191, %v2692
    %v2694 = vmul.f32 %v2192, %v2692
    %v2695 = vrcp.pop %v2580
    %v2696 = vmul.f32 %v2193, %v2695
    %v2697 = vmul.f32 %v2194, %v2695
    %v2698 = vrcp.pop %v2585
    %v2699 = vmul.f32 %v2195, %v2698
    %v2700 = vmul.f32 %v2196, %v2698
    %v2701 = vrcp.pop %v2590
    %v2702 = vmul.f32 %v2197, %v2701
    %v2703 = vmul.f32 %v2198, %v2701
    %v2704 = vrcp.pop %v2595
    %v2705 = vmul.f32 %v2199, %v2704
    %v2706 = vmul.f32 %v2200, %v2704
    %v2707 = vrcp.pop %v2600
    %v2708 = vmul.f32 %v2201, %v2707
    %v2709 = vmul.f32 %v2202, %v2707
    %v2710 = vrcp.pop %v2605
    %v2711 = vmul.f32 %v2203, %v2710
    %v2712 = vmul.f32 %v2204, %v2710
    %v2713 = vrcp.pop %v2610
    %v2714 = vmul.f32 %v2205, %v2713
    %v2715 = vmul.f32 %v2206, %v2713
    %v2716 = vrcp.pop %v2615
    %v2717 = vmul.f32 %v2207, %v2716
    %v2718 = vmul.f32 %v2208, %v2716
    %v2719 = vrcp.pop %v2620
    %v2720 = vmul.f32 %v2209, %v2719
    %v2721 = vmul.f32 %v2210, %v2719
    %v2722 = vrcp.pop %v2625
    %v2723 = vmul.f32 %v2211, %v2722
    %v2724 = vmul.f32 %v2212, %v2722
    %v2725 = vrcp.pop %v2630
    %v2726 = vmul.f32 %v2213, %v2725
    %v2727 = vmul.f32 %v2214, %v2725
    %v2728 = vmax.f32 %v2633, %v2634
    %2729 = vmax.xlane.f32.xlu0 %v2728
    %v2730 = vpop.xlane.xlu0 %2729
    %v2731 = vmax.f32 %v2636, %v2637
    %2732 = vmax.xlane.f32.xlu0 %v2731
    %v2733 = vpop.xlane.xlu0 %2732
    %v2734 = vmax.f32 %v2639, %v2640
    %2735 = vmax.xlane.f32.xlu0 %v2734
    %v2736 = vpop.xlane.xlu0 %2735
    %v2737 = vmax.f32 %v2642, %v2643
    %2738 = vmax.xlane.f32.xlu0 %v2737
    %v2739 = vpop.xlane.xlu0 %2738
    %v2740 = vmax.f32 %v2645, %v2646
    %2741 = vmax.xlane.f32.xlu0 %v2740
    %v2742 = vpop.xlane.xlu0 %2741
    %v2743 = vmax.f32 %v2648, %v2649
    %2744 = vmax.xlane.f32.xlu0 %v2743
    %v2745 = vpop.xlane.xlu0 %2744
    %v2746 = vmax.f32 %v2651, %v2652
    %2747 = vmax.xlane.f32.xlu0 %v2746
    %v2748 = vpop.xlane.xlu0 %2747
    %v2749 = vmax.f32 %v2654, %v2655
    %2750 = vmax.xlane.f32.xlu0 %v2749
    %v2751 = vpop.xlane.xlu0 %2750
    %v2752 = vmax.f32 %v2657, %v2658
    %2753 = vmax.xlane.f32.xlu0 %v2752
    %v2754 = vpop.xlane.xlu0 %2753
    %v2755 = vmax.f32 %v2660, %v2661
    %2756 = vmax.xlane.f32.xlu0 %v2755
    %v2757 = vpop.xlane.xlu0 %2756
    %v2758 = vmax.f32 %v2663, %v2664
    %2759 = vmax.xlane.f32.xlu0 %v2758
    %v2760 = vpop.xlane.xlu0 %2759
    %v2761 = vmax.f32 %v2666, %v2667
    %2762 = vmax.xlane.f32.xlu0 %v2761
    %v2763 = vpop.xlane.xlu0 %2762
    %v2764 = vmax.f32 %v2669, %v2670
    %2765 = vmax.xlane.f32.xlu0 %v2764
    %v2766 = vpop.xlane.xlu0 %2765
    %v2767 = vmax.f32 %v2672, %v2673
    %2768 = vmax.xlane.f32.xlu0 %v2767
    %v2769 = vpop.xlane.xlu0 %2768
    %v2770 = vmax.f32 %v2675, %v2676
    %2771 = vmax.xlane.f32.xlu0 %v2770
    %v2772 = vpop.xlane.xlu0 %2771
    %v2773 = vmax.f32 %v2678, %v2679
    %2774 = vmax.xlane.f32.xlu0 %v2773
    %v2775 = vpop.xlane.xlu0 %2774
    %v2776 = vmax.f32 %v2681, %v2682
    %2777 = vmax.xlane.f32.xlu0 %v2776
    %v2778 = vpop.xlane.xlu0 %2777
    %v2779 = vmax.f32 %v2684, %v2685
    %2780 = vmax.xlane.f32.xlu0 %v2779
    %v2781 = vpop.xlane.xlu0 %2780
    %v2782 = vmax.f32 %v2687, %v2688
    %2783 = vmax.xlane.f32.xlu0 %v2782
    %v2784 = vpop.xlane.xlu0 %2783
    %v2785 = vmax.f32 %v2690, %v2691
    %2786 = vmax.xlane.f32.xlu0 %v2785
    %v2787 = vpop.xlane.xlu0 %2786
    %v2788 = vmax.f32 %v2693, %v2694
    %2789 = vmax.xlane.f32.xlu0 %v2788
    %v2790 = vpop.xlane.xlu0 %2789
    %v2791 = vmax.f32 %v2696, %v2697
    %2792 = vmax.xlane.f32.xlu0 %v2791
    %v2793 = vpop.xlane.xlu0 %2792
    %v2794 = vmax.f32 %v2699, %v2700
    %2795 = vmax.xlane.f32.xlu0 %v2794
    %v2796 = vpop.xlane.xlu0 %2795
    %v2797 = vmax.f32 %v2702, %v2703
    %2798 = vmax.xlane.f32.xlu0 %v2797
    %v2799 = vpop.xlane.xlu0 %2798
    %v2800 = vmax.f32 %v2705, %v2706
    %2801 = vmax.xlane.f32.xlu0 %v2800
    %v2802 = vpop.xlane.xlu0 %2801
    %v2803 = vmax.f32 %v2708, %v2709
    %2804 = vmax.xlane.f32.xlu0 %v2803
    %v2805 = vpop.xlane.xlu0 %2804
    %v2806 = vmax.f32 %v2711, %v2712
    %2807 = vmax.xlane.f32.xlu0 %v2806
    %v2808 = vpop.xlane.xlu0 %2807
    %v2809 = vmax.f32 %v2714, %v2715
    %2810 = vmax.xlane.f32.xlu0 %v2809
    %v2811 = vpop.xlane.xlu0 %2810
    %v2812 = vmax.f32 %v2717, %v2718
    %2813 = vmax.xlane.f32.xlu0 %v2812
    %v2814 = vpop.xlane.xlu0 %2813
    %v2815 = vmax.f32 %v2720, %v2721
    %2816 = vmax.xlane.f32.xlu0 %v2815
    %v2817 = vpop.xlane.xlu0 %2816
    %v2818 = vmax.f32 %v2723, %v2724
    %2819 = vmax.xlane.f32.xlu0 %v2818
    %v2820 = vpop.xlane.xlu0 %2819
    %v2821 = vmax.f32 %v2726, %v2727
    %2822 = vmax.xlane.f32.xlu0 %v2821
    %v2823 = vpop.xlane.xlu0 %2822
    %vm2824 = vcmp.eq.f32.partialorder %v2633, %v2730
    %vm2825 = vcmp.eq.f32.partialorder %v2634, %v2730
    %vm2826 = vcmp.eq.f32.partialorder %v2636, %v2733
    %vm2827 = vcmp.eq.f32.partialorder %v2637, %v2733
    %vm2828 = vcmp.eq.f32.partialorder %v2639, %v2736
    %vm2829 = vcmp.eq.f32.partialorder %v2640, %v2736
    %vm2830 = vcmp.eq.f32.partialorder %v2642, %v2739
    %vm2831 = vcmp.eq.f32.partialorder %v2643, %v2739
    %vm2832 = vcmp.eq.f32.partialorder %v2645, %v2742
    %vm2833 = vcmp.eq.f32.partialorder %v2646, %v2742
    %vm2834 = vcmp.eq.f32.partialorder %v2648, %v2745
    %vm2835 = vcmp.eq.f32.partialorder %v2649, %v2745
    %vm2836 = vcmp.eq.f32.partialorder %v2651, %v2748
    %vm2837 = vcmp.eq.f32.partialorder %v2652, %v2748
    %vm2838 = vcmp.eq.f32.partialorder %v2654, %v2751
    %vm2839 = vcmp.eq.f32.partialorder %v2655, %v2751
    %vm2840 = vcmp.eq.f32.partialorder %v2657, %v2754
    %vm2841 = vcmp.eq.f32.partialorder %v2658, %v2754
    %vm2842 = vcmp.eq.f32.partialorder %v2660, %v2757
    %vm2843 = vcmp.eq.f32.partialorder %v2661, %v2757
    %vm2844 = vcmp.eq.f32.partialorder %v2663, %v2760
    %vm2845 = vcmp.eq.f32.partialorder %v2664, %v2760
    %vm2846 = vcmp.eq.f32.partialorder %v2666, %v2763
    %vm2847 = vcmp.eq.f32.partialorder %v2667, %v2763
    %vm2848 = vcmp.eq.f32.partialorder %v2669, %v2766
    %vm2849 = vcmp.eq.f32.partialorder %v2670, %v2766
    %vm2850 = vcmp.eq.f32.partialorder %v2672, %v2769
    %vm2851 = vcmp.eq.f32.partialorder %v2673, %v2769
    %vm2852 = vcmp.eq.f32.partialorder %v2675, %v2772
    %vm2853 = vcmp.eq.f32.partialorder %v2676, %v2772
    %vm2854 = vcmp.eq.f32.partialorder %v2678, %v2775
    %vm2855 = vcmp.eq.f32.partialorder %v2679, %v2775
    %vm2856 = vcmp.eq.f32.partialorder %v2681, %v2778
    %vm2857 = vcmp.eq.f32.partialorder %v2682, %v2778
    %vm2858 = vcmp.eq.f32.partialorder %v2684, %v2781
    %vm2859 = vcmp.eq.f32.partialorder %v2685, %v2781
    %vm2860 = vcmp.eq.f32.partialorder %v2687, %v2784
    %vm2861 = vcmp.eq.f32.partialorder %v2688, %v2784
    %vm2862 = vcmp.eq.f32.partialorder %v2690, %v2787
    %vm2863 = vcmp.eq.f32.partialorder %v2691, %v2787
    %vm2864 = vcmp.eq.f32.partialorder %v2693, %v2790
    %vm2865 = vcmp.eq.f32.partialorder %v2694, %v2790
    %vm2866 = vcmp.eq.f32.partialorder %v2696, %v2793
    %vm2867 = vcmp.eq.f32.partialorder %v2697, %v2793
    %vm2868 = vcmp.eq.f32.partialorder %v2699, %v2796
    %vm2869 = vcmp.eq.f32.partialorder %v2700, %v2796
    %vm2870 = vcmp.eq.f32.partialorder %v2702, %v2799
    %vm2871 = vcmp.eq.f32.partialorder %v2703, %v2799
    %vm2872 = vcmp.eq.f32.partialorder %v2705, %v2802
    %vm2873 = vcmp.eq.f32.partialorder %v2706, %v2802
    %vm2874 = vcmp.eq.f32.partialorder %v2708, %v2805
    %vm2875 = vcmp.eq.f32.partialorder %v2709, %v2805
    %vm2876 = vcmp.eq.f32.partialorder %v2711, %v2808
    %vm2877 = vcmp.eq.f32.partialorder %v2712, %v2808
    %vm2878 = vcmp.eq.f32.partialorder %v2714, %v2811
    %vm2879 = vcmp.eq.f32.partialorder %v2715, %v2811
    %vm2880 = vcmp.eq.f32.partialorder %v2717, %v2814
    %vm2881 = vcmp.eq.f32.partialorder %v2718, %v2814
    %vm2882 = vcmp.eq.f32.partialorder %v2720, %v2817
    %vm2883 = vcmp.eq.f32.partialorder %v2721, %v2817
    %vm2884 = vcmp.eq.f32.partialorder %v2723, %v2820
    %vm2885 = vcmp.eq.f32.partialorder %v2724, %v2820
    %vm2886 = vcmp.eq.f32.partialorder %v2726, %v2823
    %vm2887 = vcmp.eq.f32.partialorder %v2727, %v2823
    %v2888 = vsel %vm2824, %v333, -1e+30
    %v2889 = vsel %vm2825, %v335, -1e+30
    %v2890 = vsel %vm2826, %v337, -1e+30
    %v2891 = vsel %vm2827, %v339, -1e+30
    %v2892 = vsel %vm2828, %v343, -1e+30
    %v2893 = vsel %vm2829, %v345, -1e+30
    %v2894 = vsel %vm2830, %v347, -1e+30
    %v2895 = vsel %vm2831, %v349, -1e+30
    %v2896 = vsel %vm2832, %v353, -1e+30
    %v2897 = vsel %vm2833, %v355, -1e+30
    %v2898 = vsel %vm2834, %v357, -1e+30
    %v2899 = vsel %vm2835, %v359, -1e+30
    %v2900 = vsel %vm2836, %v363, -1e+30
    %v2901 = vsel %vm2837, %v365, -1e+30
    %v2902 = vsel %vm2838, %v367, -1e+30
    %v2903 = vsel %vm2839, %v369, -1e+30
    %v2904 = vsel %vm2840, %v373, -1e+30
    %v2905 = vsel %vm2841, %v375, -1e+30
    %v2906 = vsel %vm2842, %v377, -1e+30
    %v2907 = vsel %vm2843, %v379, -1e+30
    %v2908 = vsel %vm2844, %v383, -1e+30
    %v2909 = vsel %vm2845, %v385, -1e+30
    %v2910 = vsel %vm2846, %v387, -1e+30
    %v2911 = vsel %vm2847, %v389, -1e+30
    %v2912 = vsel %vm2848, %v393, -1e+30
    %v2913 = vsel %vm2849, %v395, -1e+30
    %v2914 = vsel %vm2850, %v397, -1e+30
    %v2915 = vsel %vm2851, %v399, -1e+30
    %v2916 = vsel %vm2852, %v403, -1e+30
    %v2917 = vsel %vm2853, %v405, -1e+30
    %v2918 = vsel %vm2854, %v407, -1e+30
    %v2919 = vsel %vm2855, %v409, -1e+30
    %v2920 = vsel %vm2856, %v413, -1e+30
    %v2921 = vsel %vm2857, %v415, -1e+30
    %v2922 = vsel %vm2858, %v417, -1e+30
    %v2923 = vsel %vm2859, %v419, -1e+30
    %v2924 = vsel %vm2860, %v423, -1e+30
    %v2925 = vsel %vm2861, %v425, -1e+30
    %v2926 = vsel %vm2862, %v427, -1e+30
    %v2927 = vsel %vm2863, %v429, -1e+30
    %v2928 = vsel %vm2864, %v433, -1e+30
    %v2929 = vsel %vm2865, %v435, -1e+30
    %v2930 = vsel %vm2866, %v437, -1e+30
    %v2931 = vsel %vm2867, %v439, -1e+30
    %v2932 = vsel %vm2868, %v443, -1e+30
    %v2933 = vsel %vm2869, %v445, -1e+30
    %v2934 = vsel %vm2870, %v447, -1e+30
    %v2935 = vsel %vm2871, %v449, -1e+30
    %v2936 = vsel %vm2872, %v453, -1e+30
    %v2937 = vsel %vm2873, %v455, -1e+30
    %v2938 = vsel %vm2874, %v457, -1e+30
    %v2939 = vsel %vm2875, %v459, -1e+30
    %v2940 = vsel %vm2876, %v463, -1e+30
    %v2941 = vsel %vm2877, %v465, -1e+30
    %v2942 = vsel %vm2878, %v467, -1e+30
    %v2943 = vsel %vm2879, %v469, -1e+30
    %v2944 = vsel %vm2880, %v473, -1e+30
    %v2945 = vsel %vm2881, %v475, -1e+30
    %v2946 = vsel %vm2882, %v477, -1e+30
    %v2947 = vsel %vm2883, %v479, -1e+30
    %v2948 = vsel %vm2884, %v483, -1e+30
    %v2949 = vsel %vm2885, %v485, -1e+30
    %v2950 = vsel %vm2886, %v487, -1e+30
    %v2951 = vsel %vm2887, %v489, -1e+30
    %v2952 = vmax.f32 %v2888, %v2889
    %2953 = vmax.xlane.f32.xlu0 %v2952
    %v2954 = vpop.xlane.xlu0 %2953
    %v2955 = vmax.f32 %v2890, %v2891
    %2956 = vmax.xlane.f32.xlu0 %v2955
    %v2957 = vpop.xlane.xlu0 %2956
    %v2958 = vmax.f32 %v2892, %v2893
    %2959 = vmax.xlane.f32.xlu0 %v2958
    %v2960 = vpop.xlane.xlu0 %2959
    %v2961 = vmax.f32 %v2894, %v2895
    %2962 = vmax.xlane.f32.xlu0 %v2961
    %v2963 = vpop.xlane.xlu0 %2962
    %v2964 = vmax.f32 %v2896, %v2897
    %2965 = vmax.xlane.f32.xlu0 %v2964
    %v2966 = vpop.xlane.xlu0 %2965
    %v2967 = vmax.f32 %v2898, %v2899
    %2968 = vmax.xlane.f32.xlu0 %v2967
    %v2969 = vpop.xlane.xlu0 %2968
    %v2970 = vmax.f32 %v2900, %v2901
    %2971 = vmax.xlane.f32.xlu0 %v2970
    %v2972 = vpop.xlane.xlu0 %2971
    %v2973 = vmax.f32 %v2902, %v2903
    %2974 = vmax.xlane.f32.xlu0 %v2973
    %v2975 = vpop.xlane.xlu0 %2974
    %v2976 = vmax.f32 %v2904, %v2905
    %2977 = vmax.xlane.f32.xlu0 %v2976
    %v2978 = vpop.xlane.xlu0 %2977
    %v2979 = vmax.f32 %v2906, %v2907
    %2980 = vmax.xlane.f32.xlu0 %v2979
    %v2981 = vpop.xlane.xlu0 %2980
    %v2982 = vmax.f32 %v2908, %v2909
    %2983 = vmax.xlane.f32.xlu0 %v2982
    %v2984 = vpop.xlane.xlu0 %2983
    %v2985 = vmax.f32 %v2910, %v2911
    %2986 = vmax.xlane.f32.xlu0 %v2985
    %v2987 = vpop.xlane.xlu0 %2986
    %v2988 = vmax.f32 %v2912, %v2913
    %2989 = vmax.xlane.f32.xlu0 %v2988
    %v2990 = vpop.xlane.xlu0 %2989
    %v2991 = vmax.f32 %v2914, %v2915
    %2992 = vmax.xlane.f32.xlu0 %v2991
    %v2993 = vpop.xlane.xlu0 %2992
    %v2994 = vmax.f32 %v2916, %v2917
    %2995 = vmax.xlane.f32.xlu0 %v2994
    %v2996 = vpop.xlane.xlu0 %2995
    %v2997 = vmax.f32 %v2918, %v2919
    %2998 = vmax.xlane.f32.xlu0 %v2997
    %v2999 = vpop.xlane.xlu0 %2998
    %v3000 = vmax.f32 %v2920, %v2921
    %3001 = vmax.xlane.f32.xlu0 %v3000
    %v3002 = vpop.xlane.xlu0 %3001
    %v3003 = vmax.f32 %v2922, %v2923
    %3004 = vmax.xlane.f32.xlu0 %v3003
    %v3005 = vpop.xlane.xlu0 %3004
    %v3006 = vmax.f32 %v2924, %v2925
    %3007 = vmax.xlane.f32.xlu0 %v3006
    %v3008 = vpop.xlane.xlu0 %3007
    %v3009 = vmax.f32 %v2926, %v2927
    %3010 = vmax.xlane.f32.xlu0 %v3009
    %v3011 = vpop.xlane.xlu0 %3010
    %v3012 = vmax.f32 %v2928, %v2929
    %3013 = vmax.xlane.f32.xlu0 %v3012
    %v3014 = vpop.xlane.xlu0 %3013
    %v3015 = vmax.f32 %v2930, %v2931
    %3016 = vmax.xlane.f32.xlu0 %v3015
    %v3017 = vpop.xlane.xlu0 %3016
    %v3018 = vmax.f32 %v2932, %v2933
    %3019 = vmax.xlane.f32.xlu0 %v3018
    %v3020 = vpop.xlane.xlu0 %3019
    %v3021 = vmax.f32 %v2934, %v2935
    %3022 = vmax.xlane.f32.xlu0 %v3021
    %v3023 = vpop.xlane.xlu0 %3022
    %v3024 = vmax.f32 %v2936, %v2937
    %3025 = vmax.xlane.f32.xlu0 %v3024
    %v3026 = vpop.xlane.xlu0 %3025
    %v3027 = vmax.f32 %v2938, %v2939
    %3028 = vmax.xlane.f32.xlu0 %v3027
    %v3029 = vpop.xlane.xlu0 %3028
    %v3030 = vmax.f32 %v2940, %v2941
    %3031 = vmax.xlane.f32.xlu0 %v3030
    %v3032 = vpop.xlane.xlu0 %3031
    %v3033 = vmax.f32 %v2942, %v2943
    %3034 = vmax.xlane.f32.xlu0 %v3033
    %v3035 = vpop.xlane.xlu0 %3034
    %v3036 = vmax.f32 %v2944, %v2945
    %3037 = vmax.xlane.f32.xlu0 %v3036
    %v3038 = vpop.xlane.xlu0 %3037
    %v3039 = vmax.f32 %v2946, %v2947
    %3040 = vmax.xlane.f32.xlu0 %v3039
    %v3041 = vpop.xlane.xlu0 %3040
    %v3042 = vmax.f32 %v2948, %v2949
    %3043 = vmax.xlane.f32.xlu0 %v3042
    %v3044 = vpop.xlane.xlu0 %3043
    %v3045 = vmax.f32 %v2950, %v2951
    %3046 = vmax.xlane.f32.xlu0 %v3045
    %v3047 = vpop.xlane.xlu0 %3046
    %vm3048 = vcmask 7168
    %3049 = vst.msk [vmem:[%s2] sm:$0xff] %vm3048, %v2954
    %3050 = vst.msk [vmem:[%s2 + $0x8] sm:$0xff] %vm3048, %v2957
    %3051 = vst.msk [vmem:[%s2 + $0x10] sm:$0xff] %vm3048, %v2960
    %3052 = vst.msk [vmem:[%s2 + $0x18] sm:$0xff] %vm3048, %v2963
    %3053 = vst.msk [vmem:[%s2 + $0x20] sm:$0xff] %vm3048, %v2966
    %3054 = vst.msk [vmem:[%s2 + $0x28] sm:$0xff] %vm3048, %v2969
    %3055 = vst.msk [vmem:[%s2 + $0x30] sm:$0xff] %vm3048, %v2972
    %3056 = vst.msk [vmem:[%s2 + $0x38] sm:$0xff] %vm3048, %v2975
    %3057 = vst.msk [vmem:[%s2 + $0x40] sm:$0xff] %vm3048, %v2978
    %3058 = vst.msk [vmem:[%s2 + $0x48] sm:$0xff] %vm3048, %v2981
    %3059 = vst.msk [vmem:[%s2 + $0x50] sm:$0xff] %vm3048, %v2984
    %3060 = vst.msk [vmem:[%s2 + $0x58] sm:$0xff] %vm3048, %v2987
    %3061 = vst.msk [vmem:[%s2 + $0x60] sm:$0xff] %vm3048, %v2990
    %3062 = vst.msk [vmem:[%s2 + $0x68] sm:$0xff] %vm3048, %v2993
    %3063 = vst.msk [vmem:[%s2 + $0x70] sm:$0xff] %vm3048, %v2996
    %3064 = vst.msk [vmem:[%s2 + $0x78] sm:$0xff] %vm3048, %v2999
    %3065 = vst.msk [vmem:[%s2 + $0x80] sm:$0xff] %vm3048, %v3002
    %3066 = vst.msk [vmem:[%s2 + $0x88] sm:$0xff] %vm3048, %v3005
    %3067 = vst.msk [vmem:[%s2 + $0x90] sm:$0xff] %vm3048, %v3008
    %3068 = vst.msk [vmem:[%s2 + $0x98] sm:$0xff] %vm3048, %v3011
    %3069 = vst.msk [vmem:[%s2 + $0xa0] sm:$0xff] %vm3048, %v3014
    %3070 = vst.msk [vmem:[%s2 + $0xa8] sm:$0xff] %vm3048, %v3017
    %3071 = vst.msk [vmem:[%s2 + $0xb0] sm:$0xff] %vm3048, %v3020
    %3072 = vst.msk [vmem:[%s2 + $0xb8] sm:$0xff] %vm3048, %v3023
    %3073 = vst.msk [vmem:[%s2 + $0xc0] sm:$0xff] %vm3048, %v3026
    %3074 = vst.msk [vmem:[%s2 + $0xc8] sm:$0xff] %vm3048, %v3029
    %3075 = vst.msk [vmem:[%s2 + $0xd0] sm:$0xff] %vm3048, %v3032
    %3076 = vst.msk [vmem:[%s2 + $0xd8] sm:$0xff] %vm3048, %v3035
    %3077 = vst.msk [vmem:[%s2 + $0xe0] sm:$0xff] %vm3048, %v3038
    %3078 = vst.msk [vmem:[%s2 + $0xe8] sm:$0xff] %vm3048, %v3041
    %3079 = vst.msk [vmem:[%s2 + $0xf0] sm:$0xff] %vm3048, %v3044
    %3080 = vst.msk [vmem:[%s2 + $0xf8] sm:$0xff] %vm3048, %v3047
    %3081 = vst.msk [vmem:[%s3] sm:$0xff] %vm3048, %v2730
    %3082 = vst.msk [vmem:[%s3 + $0x8] sm:$0xff] %vm3048, %v2733
    %3083 = vst.msk [vmem:[%s3 + $0x10] sm:$0xff] %vm3048, %v2736
    %3084 = vst.msk [vmem:[%s3 + $0x18] sm:$0xff] %vm3048, %v2739
    %3085 = vst.msk [vmem:[%s3 + $0x20] sm:$0xff] %vm3048, %v2742
    %3086 = vst.msk [vmem:[%s3 + $0x28] sm:$0xff] %vm3048, %v2745
    %3087 = vst.msk [vmem:[%s3 + $0x30] sm:$0xff] %vm3048, %v2748
    %3088 = vst.msk [vmem:[%s3 + $0x38] sm:$0xff] %vm3048, %v2751
    %3089 = vst.msk [vmem:[%s3 + $0x40] sm:$0xff] %vm3048, %v2754
    %3090 = vst.msk [vmem:[%s3 + $0x48] sm:$0xff] %vm3048, %v2757
    %3091 = vst.msk [vmem:[%s3 + $0x50] sm:$0xff] %vm3048, %v2760
    %3092 = vst.msk [vmem:[%s3 + $0x58] sm:$0xff] %vm3048, %v2763
    %3093 = vst.msk [vmem:[%s3 + $0x60] sm:$0xff] %vm3048, %v2766
    %3094 = vst.msk [vmem:[%s3 + $0x68] sm:$0xff] %vm3048, %v2769
    %3095 = vst.msk [vmem:[%s3 + $0x70] sm:$0xff] %vm3048, %v2772
    %3096 = vst.msk [vmem:[%s3 + $0x78] sm:$0xff] %vm3048, %v2775
    %3097 = vst.msk [vmem:[%s3 + $0x80] sm:$0xff] %vm3048, %v2778
    %3098 = vst.msk [vmem:[%s3 + $0x88] sm:$0xff] %vm3048, %v2781
    %3099 = vst.msk [vmem:[%s3 + $0x90] sm:$0xff] %vm3048, %v2784
    %3100 = vst.msk [vmem:[%s3 + $0x98] sm:$0xff] %vm3048, %v2787
    %3101 = vst.msk [vmem:[%s3 + $0xa0] sm:$0xff] %vm3048, %v2790
    %3102 = vst.msk [vmem:[%s3 + $0xa8] sm:$0xff] %vm3048, %v2793
    %3103 = vst.msk [vmem:[%s3 + $0xb0] sm:$0xff] %vm3048, %v2796
    %3104 = vst.msk [vmem:[%s3 + $0xb8] sm:$0xff] %vm3048, %v2799
    %3105 = vst.msk [vmem:[%s3 + $0xc0] sm:$0xff] %vm3048, %v2802
    %3106 = vst.msk [vmem:[%s3 + $0xc8] sm:$0xff] %vm3048, %v2805
    %3107 = vst.msk [vmem:[%s3 + $0xd0] sm:$0xff] %vm3048, %v2808
    %3108 = vst.msk [vmem:[%s3 + $0xd8] sm:$0xff] %vm3048, %v2811
    %3109 = vst.msk [vmem:[%s3 + $0xe0] sm:$0xff] %vm3048, %v2814
    %3110 = vst.msk [vmem:[%s3 + $0xe8] sm:$0xff] %vm3048, %v2817
    %3111 = vst.msk [vmem:[%s3 + $0xf0] sm:$0xff] %vm3048, %v2820
    %3112 = vst.msk [vmem:[%s3 + $0xf8] sm:$0xff] %vm3048, %v2823
    // Predicated region
    $region25: #{tpu_custom_call.1} parent=1 // pred_check
      _
    $region26: #{tpu_custom_call.1} parent=1 // pred_check_branch
      %3114 = sbr.rel (0) target = $region28
    $region27: #{tpu_custom_call.1} parent=1 // pred_region
      _
    $region28: #{tpu_custom_call.1} parent=1 // pred_fallthru
      _
    // Predicated region
    $region29: #{tpu_custom_call.1} parent=1 // pred_check
      _
    $region30: #{tpu_custom_call.1} parent=1 // pred_check_branch
      %3116 = sbr.rel (0) target = $region32
    $region31: #{tpu_custom_call.1} parent=1 // pred_region
      _
    $region32: #{tpu_custom_call.1} parent=1 // pred_fallthru
      _
    // Predicated region
    $region33: #{tpu_custom_call.1} parent=1 // pred_check
      _
    $region34: #{tpu_custom_call.1} parent=1 // pred_check_branch
      %3118 = sbr.rel (0) target = $region36
    $region35: #{tpu_custom_call.1} parent=1 // pred_region
      _
    $region36: #{tpu_custom_call.1} parent=1 // pred_fallthru
      _
    // Predicated region
    $region37: #{tpu_custom_call.1} parent=1 // pred_check
      _
    $region38: #{tpu_custom_call.1} parent=1 // pred_check_branch
      %3120 = sbr.rel (0) target = $region40
    $region39: #{tpu_custom_call.1} parent=1 // pred_region
      _
    $region40: #{tpu_custom_call.1} parent=1 // pred_fallthru
      _
    %3121 = vsyncpa [#allocation4], 1
    %3122 = vsyncpa [#allocation6], 1

</llo_original>
